<compile_context>
chip_gen: v7x
topology: tpu7x:2x2x1
jax: 0.10.0
libtpu: 0.0.40
codegen_flags: <defaults>
</compile_context>

<pallas_src>
import jax
import jax.numpy as jnp
from jax.experimental import pallas as pl
from jax.experimental.pallas import tpu as pltpu


def _round_up(v, m):
    return (v + m - 1) // m * m


def _pick_row_tile(H, W, max_lanes=512):
    """Largest divisor of H whose flattened row-tile width is a multiple of 128 and
    fits the lane budget; falls back to the smallest legal tile."""
    for th in range(H, 0, -1):
        if H % th == 0 and (th * W) % 128 == 0 and th * W <= max_lanes:
            return th
    for th in range(1, H + 1):
        if H % th == 0 and (th * W) % 128 == 0:
            return th
    return H


def _make_carafe_kernel(*, C, c_in, W, TH, kup, kenc, r, pack_sub):
    K2 = kup * kup
    K2P = _round_up(K2, 8)        # 25 -> 32 sublane-aligned logit groups
    R2 = r * r
    ru = kup // 2                 # 2 (5x5 reassembly halo)
    r_enc = (kenc - 1) // 2       # 1 (3x3 encoder halo)
    THW = TH * W
    n_tap = kenc * kenc
    rsm_off = c_in if pack_sub else 0   # start row of the replicated-x block

    def kernel(x_ref, w_ref, mask_ref, o_ref):
        # x_ref:    (1, 1, Cx, (TH + 2*(ru+1)) * W)  halo'd, row-flattened x tile
        #           rows [0:C]=x, [C]=ones (BN shift carrier), zero pad; when
        #           pack_sub, rows [c_in : c_in + R2*C] are R2 replicated copies of x.
        # w_ref:    (R2*K2P, n_tap*c_in) bf16 folded (1x1 conv + BN + 3x3) weights.
        # mask_ref: (K2P, THW) column-validity mask (row k2 -> horizontal offset).
        # o_ref:    (1, R2*C, THW) sub-pixel-major output rows [s*C + c].

        # ---- context encoder: ONE fused MXU matmul over an in-VMEM im2col slab
        pieces = []
        for tap in range(n_tap):
            ky, kx = divmod(tap, kenc)
            start = (ky + ru - r_enc + 1) * W + (kx - r_enc)
            sl = x_ref[0, 0, 0:c_in, start:start + THW]               # (c_in, THW)
            cm = mask_ref[kx - r_enc + ru:kx - r_enc + ru + 1, :]     # (1, THW)
            pieces.append(sl * cm)
        slab = jnp.concatenate(pieces, axis=0).astype(jnp.bfloat16)   # (n_tap*c_in, THW)
        logits = jnp.dot(w_ref[...], slab,
                         preferred_element_type=jnp.float32)          # (R2*K2P, THW)

        # ---- per-subpixel softmax on full 32-row aligned groups.  Pad rows carry
        #      a -1e9 logit bias from the folded weight, so exp() -> 0 and they do
        #      not perturb max / sum.  The column mask is folded into the softmax'd
        #      weights once per group; the denominator stays unmasked (reference
        #      semantics apply zero-padding to x, not to the kernel weights).
        exps_m, inv_den = [], []
        for s in range(R2):
            g = logits[s * K2P:(s + 1) * K2P, :]                      # (K2P, THW)
            m = jnp.max(g, axis=0, keepdims=True)
            e = jnp.exp(g - m)
            den = jnp.sum(e, axis=0, keepdims=True)
            inv_den.append(pl.reciprocal(den, approx=True))           # EUP, hoisted
            exps_m.append(e * mask_ref[...])

        # ---- CARAFE reassembly: neighbourhoods built in-VMEM from the halo tile
        #      (the (B, C, 25, Ho, Wo) x_mat tensor never touches HBM).
        if pack_sub:
            # Sublane-packed: one (R2*C, THW) accumulator -> full-vreg FMAs per tap.
            acc = jnp.zeros((R2 * C, THW), dtype=jnp.float32)
            for k2 in range(K2):
                ky, kx = divmod(k2, kup)
                start = (ky + 1) * W + (kx - ru)
                xk = x_ref[0, 0, rsm_off:rsm_off + R2 * C, start:start + THW]
                ek = jnp.concatenate(
                    [jnp.broadcast_to(exps_m[s][k2:k2 + 1, :], (C, THW))
                     for s in range(R2)], axis=0)                     # (R2*C, THW)
                acc = acc + xk * ek
            inv = jnp.concatenate(
                [jnp.broadcast_to(inv_den[s], (C, THW)) for s in range(R2)], axis=0)
            o_ref[0, :, :] = acc * inv
        else:
            for s in range(R2):
                acc = jnp.zeros((C, THW), dtype=jnp.float32)
                for k2 in range(K2):
                    ky, kx = divmod(k2, kup)
                    start = (ky + 1) * W + (kx - ru)
                    xk = x_ref[0, 0, 0:C, start:start + THW]
                    acc = acc + xk * exps_m[s][k2:k2 + 1, :]
                o_ref[0, s * C:(s + 1) * C, :] = acc * inv_den[s]

    return kernel


def fold_carafe_weights(w1, gamma, beta, running_mean, running_var, eps, w2,
                        *, kernel_up=5, kernel_encoder=3, enlarge_rate=2):
    """Fold Conv1x1 + eval-mode BatchNorm + Conv3x3 into one (R2*K2P, n_tap*c_in)
    bf16 weight.  Output rows are permuted to (sub-pixel, k2) groups (pixel_shuffle
    folded in), each group zero-padded 25->32, and the pad rows get a -1e9 logit
    bias via the ones channel of the centre tap (whose column mask is identically 1)
    so the in-kernel softmax runs on full 32-row aligned groups.  The contraction
    axis is [tap, (x channels, ones/BN-shift, zero pad)] on the lane dimension."""
    # TODO(synk): eval-mode (running-stats) BatchNorm semantics; a module left in
    # train() mode would use batch statistics and not match this folding.
    Cm, C = w1.shape[0], w1.shape[1]
    kup, kenc, r = kernel_up, kernel_encoder, enlarge_rate
    K2, K2P, R2 = kup * kup, _round_up(kup * kup, 8), r * r
    n_tap = kenc * kenc
    c_in = _round_up(C + 1, 8)
    Co = w2.shape[0]
    assert Co == R2 * K2

    scale = gamma / jnp.sqrt(running_var + eps)
    shift = beta - running_mean * scale
    # y = A @ [x; 1] reproduces Conv1x1 + BN (zero-padded positions stay zero because
    # the ones channel is zeroed there by the wrapper's row padding / column masks).
    A = jnp.concatenate([scale[:, None] * w1[:, :, 0, 0], shift[:, None]], axis=1)
    w_fold = jnp.einsum('omyx,mc->oyxc', w2, A)             # (Co, kenc, kenc, C+1)
    w_fold = w_fold.reshape(Co, n_tap, C + 1)

    o_old = jnp.arange(Co)                                   # o_old = k2*R2 + sub
    new_rows = (o_old % R2) * K2P + o_old // R2              # -> sub*K2P + k2
    w_big = jnp.zeros((R2 * K2P, n_tap, c_in), jnp.float32)
    w_big = w_big.at[new_rows, :, :C + 1].set(w_fold.astype(jnp.float32))

    # -1e9 logit bias for the softmax pad rows (k2 in [K2, K2P)).
    pad_rows = (jnp.arange(R2)[:, None] * K2P +
                jnp.arange(K2, K2P)[None, :]).reshape(-1)
    centre_tap = (kenc // 2) * kenc + (kenc // 2)
    w_big = w_big.at[pad_rows, centre_tap, C].set(-1e9)
    return w_big.reshape(R2 * K2P, n_tap * c_in).astype(jnp.bfloat16)


def carafe_forward(x, w_enc, *, kernel_up=5, kernel_encoder=3, enlarge_rate=2,
                   row_tile=None):
    B, C, H, W = x.shape
    kup, kenc, r = kernel_up, kernel_encoder, enlarge_rate
    K2, K2P, R2 = kup * kup, _round_up(kup * kup, 8), r * r
    ru = kup // 2
    n_tap = kenc * kenc
    c_in = _round_up(C + 1, 8)
    pack_sub = C < 8                    # pack sub-pixel accumulators when C underfills sublanes
    n_rep = R2 if pack_sub else 0
    Cx = _round_up(c_in + n_rep * C, 8)
    assert w_enc.shape == (R2 * K2P, n_tap * c_in), w_enc.shape

    TH = row_tile or _pick_row_tile(H, W)
    assert H % TH == 0 and (TH * W) % 128 == 0
    T = H // TH
    THW = TH * W
    halo_rows = TH + 2 * (ru + 1)

    # ---- cheap JAX-side packing of the small low-res input ----
    # Channels: [x, ones (BN shift carrier), pad] + (when pack_sub) R2 replicated
    # copies of x so in-kernel reassembly reads are full-sublane.  With the enlarged
    # row tile there is typically a single tile per image, so halo duplication is
    # just the zero padding rows.  x stays f32 (v5e VPU has no bf16 path); only the
    # MXU operands are bf16.
    xf = x.astype(jnp.float32)
    parts = [xf, jnp.ones((B, 1, H, W), jnp.float32)]
    if c_in - C - 1 > 0:
        parts.append(jnp.zeros((B, c_in - C - 1, H, W), jnp.float32))
    parts += [xf] * n_rep
    if Cx - c_in - n_rep * C > 0:
        parts.append(jnp.zeros((B, Cx - c_in - n_rep * C, H, W), jnp.float32))
    x_aug = jnp.concatenate(parts, axis=1)
    x_aug = jnp.pad(x_aug, ((0, 0), (0, 0), (ru + 1, ru + 1), (0, 0)))
    xin = jnp.stack([x_aug[:, :, t * TH:t * TH + halo_rows, :] for t in range(T)],
                    axis=1).reshape(B, T, Cx, halo_rows * W)

    # Column-validity mask for the row-flattened layout, one row per reassembly tap
    # (rows 1..2*r_enc+1 double as the 3x3 encoder column masks; pad rows are zero).
    col = jnp.arange(THW, dtype=jnp.int32) % W
    off = (jnp.arange(K2P, dtype=jnp.int32) % kup) - ru
    valid = (col[None, :] + off[:, None] >= 0) & (col[None, :] + off[:, None] < W)
    valid = valid & (jnp.arange(K2P) < K2)[:, None]
    mask = valid.astype(jnp.float32)

    kernel = _make_carafe_kernel(C=C, c_in=c_in, W=W, TH=TH, kup=kup, kenc=kenc,
                                 r=r, pack_sub=pack_sub)
    out_planes = pl.pallas_call(
        kernel,
        out_shape=jax.ShapeDtypeStruct((B, R2 * C, H * W), jnp.float32),
        grid=(B, T),
        in_specs=[
            pl.BlockSpec((1, 1, Cx, halo_rows * W), lambda b, t: (b, t, 0, 0)),
            pl.BlockSpec((R2 * K2P, n_tap * c_in), lambda b, t: (0, 0)),
            pl.BlockSpec((K2P, THW), lambda b, t: (0, 0)),
        ],
        out_specs=pl.BlockSpec((1, R2 * C, THW), lambda b, t: (b, 0, t)),
        compiler_params=pltpu.CompilerParams(
            dimension_semantics=("parallel", "parallel")),
    )(xin, w_enc, mask)

    # TODO(synk): the final sub-pixel interleave (pixel_shuffle) is still one XLA
    # pass over the high-res output; fully fusing it into the store path needs
    # lane-interleaved / strided stores and is left out here for lowering robustness.
    out = out_planes.reshape(B, r, r, C, H, W)
    return out.transpose(0, 3, 4, 1, 5, 2).reshape(B, C, H * r, W * r)


def carafe_reference(x, w1, gamma, beta, running_mean, running_var, eps, w2,
                     kernel_up=5, kernel_encoder=3, enlarge_rate=2):
    """Plain-JAX reference mirroring the PyTorch module (eval-mode BN)."""
    B, C, H, W = x.shape
    kup, kenc, r = kernel_up, kernel_encoder, enlarge_rate
    K2 = kup * kup
    scale = gamma / jnp.sqrt(running_var + eps)
    shift = beta - running_mean * scale
    y = jnp.einsum('mc,bchw->bmhw', w1[:, :, 0, 0], x)
    y = y * scale[None, :, None, None] + shift[None, :, None, None]
    re = (kenc - 1) // 2
    yp = jnp.pad(y, ((0, 0), (0, 0), (re, re), (re, re)))
    enc = sum(jnp.einsum('om,bmhw->bohw', w2[:, :, ky, kx], yp[:, :, ky:ky + H, kx:kx + W])
              for ky in range(kenc) for kx in range(kenc))
    enc = enc.reshape(B, K2, r, r, H, W).transpose(0, 1, 4, 2, 5, 3)
    kp = jax.nn.softmax(enc.reshape(B, K2, H * r, W * r), axis=1)
    ru = kup // 2
    xp = jnp.pad(x, ((0, 0), (0, 0), (ru, ru), (ru, ru)))
    xmat = jnp.stack([xp[:, :, ky:ky + H, kx:kx + W]
                      for ky in range(kup) for kx in range(kup)], axis=2)
    xmat = jnp.repeat(jnp.repeat(xmat, r, axis=3), r, axis=4)
    return jnp.sum(xmat * kp[:, None], axis=2)


if __name__ == "__main__":
    input_channel, channel_cm = 4, 64
    kernel_up, kernel_encoder, enlarge_rate = 5, 3, 2
    B, H, W = 2, 16, 16
    K2 = kernel_up * kernel_up
    c_out_enc = enlarge_rate ** 2 * K2  # 100

    key = jax.random.PRNGKey(0)
    k_x, k_w1, k_w2, k_g, k_b, k_m, k_v = jax.random.split(key, 7)

    x = jax.random.normal(k_x, (B, input_channel, H, W), dtype=jnp.float32)
    # channel_compressor: Conv2d(C, Cm, 1, bias=False), BatchNorm2d(Cm) (eval mode)
    w1 = 0.1 * jax.random.normal(k_w1, (channel_cm, input_channel, 1, 1), dtype=jnp.float32)
    gamma = 1.0 + 0.1 * jax.random.normal(k_g, (channel_cm,), dtype=jnp.float32)
    beta = 0.05 * jax.random.normal(k_b, (channel_cm,), dtype=jnp.float32)
    running_mean = 0.1 * jax.random.normal(k_m, (channel_cm,), dtype=jnp.float32)
    running_var = jax.random.uniform(k_v, (channel_cm,), minval=0.5, maxval=1.5,
                                     dtype=jnp.float32)
    eps = 1e-5
    # context_encoder: Conv2d(Cm, 100, 3, pad=1, bias=False)
    w2 = 0.05 * jax.random.normal(
        k_w2, (c_out_enc, channel_cm, kernel_encoder, kernel_encoder), dtype=jnp.float32)

    w_enc = fold_carafe_weights(w1, gamma, beta, running_mean, running_var, eps, w2,
                                kernel_up=kernel_up, kernel_encoder=kernel_encoder,
                                enlarge_rate=enlarge_rate)

    fwd = jax.jit(lambda xx, ww: carafe_forward(xx, ww, kernel_up=kernel_up,
                                                kernel_encoder=kernel_encoder,
                                                enlarge_rate=enlarge_rate))
    out = jax.block_until_ready(fwd(x, w_enc))

    assert out.shape == (B, input_channel, H * enlarge_rate, W * enlarge_rate), out.shape
    assert bool(jnp.all(jnp.isfinite(out)))

    ref = carafe_reference(x, w1, gamma, beta, running_mean, running_var, eps, w2,
                           kernel_up=kernel_up, kernel_encoder=kernel_encoder,
                           enlarge_rate=enlarge_rate)
    assert bool(jnp.allclose(out, ref, rtol=2e-2, atol=2e-2)), \
        float(jnp.max(jnp.abs(out - ref)))
    print("KERNEL_OK")
</pallas_src>

<mosaic_0001>
module attributes {stable_mosaic.version = 11 : i64} {
  func.func @kernel(%arg0: i32, %arg1: i32, %arg2: memref<1x1x24x352xf32, #tpu.memory_space<vmem>>, %arg3: memref<128x72xbf16, #tpu.memory_space<vmem>>, %arg4: memref<32x256xf32, #tpu.memory_space<vmem>>, %arg5: memref<1x16x256xf32, #tpu.memory_space<vmem>>) attributes {dimension_semantics = [#tpu.dimension_semantics<parallel>, #tpu.dimension_semantics<parallel>], iteration_bounds = array<i64: 2, 1>, scalar_prefetch = 0 : i64, scratch_operands = 0 : i64, tpu.core_type = #tpu.core_type<tc>, window_params = [{transform_indices = @transform_0, window_bounds = array<i64: 1, 1, 24, 352>}, {pipeline_mode = #tpu.pipeline_mode<synchronous>, transform_indices = @transform_1, window_bounds = array<i64: 128, 72>}, {pipeline_mode = #tpu.pipeline_mode<synchronous>, transform_indices = @transform_2, window_bounds = array<i64: 32, 256>}, {transform_indices = @transform_3, window_bounds = array<i64: 1, 16, 256>}]} {
    %c0 = arith.constant 0 : index
    %c0_0 = arith.constant 0 : index
    %c0_1 = arith.constant 0 : index
    %c31 = arith.constant 31 : index
    %0 = vector.load %arg2[%c0, %c0_0, %c0_1, %c31] : memref<1x1x24x352xf32, #tpu.memory_space<vmem>>, vector<1x1x8x256xf32>
    %1 = vector.shape_cast %0 : vector<1x1x8x256xf32> to vector<8x256xf32>
    %c1 = arith.constant 1 : index
    %c0_2 = arith.constant 0 : index
    %2 = vector.load %arg4[%c1, %c0_2] : memref<32x256xf32, #tpu.memory_space<vmem>>, vector<1x256xf32>
    %3 = vector.broadcast %2 : vector<1x256xf32> to vector<8x256xf32>
    %4 = arith.mulf %1, %3 : vector<8x256xf32>
    %c0_3 = arith.constant 0 : index
    %c0_4 = arith.constant 0 : index
    %c0_5 = arith.constant 0 : index
    %c32 = arith.constant 32 : index
    %5 = vector.load %arg2[%c0_3, %c0_4, %c0_5, %c32] : memref<1x1x24x352xf32, #tpu.memory_space<vmem>>, vector<1x1x8x256xf32>
    %6 = vector.shape_cast %5 : vector<1x1x8x256xf32> to vector<8x256xf32>
    %c2 = arith.constant 2 : index
    %c0_6 = arith.constant 0 : index
    %7 = vector.load %arg4[%c2, %c0_6] : memref<32x256xf32, #tpu.memory_space<vmem>>, vector<1x256xf32>
    %8 = vector.broadcast %7 : vector<1x256xf32> to vector<8x256xf32>
    %9 = arith.mulf %6, %8 : vector<8x256xf32>
    %c0_7 = arith.constant 0 : index
    %c0_8 = arith.constant 0 : index
    %c0_9 = arith.constant 0 : index
    %c33 = arith.constant 33 : index
    %10 = vector.load %arg2[%c0_7, %c0_8, %c0_9, %c33] : memref<1x1x24x352xf32, #tpu.memory_space<vmem>>, vector<1x1x8x256xf32>
    %11 = vector.shape_cast %10 : vector<1x1x8x256xf32> to vector<8x256xf32>
    %c3 = arith.constant 3 : index
    %c0_10 = arith.constant 0 : index
    %12 = vector.load %arg4[%c3, %c0_10] : memref<32x256xf32, #tpu.memory_space<vmem>>, vector<1x256xf32>
    %13 = vector.broadcast %12 : vector<1x256xf32> to vector<8x256xf32>
    %14 = arith.mulf %11, %13 : vector<8x256xf32>
    %c0_11 = arith.constant 0 : index
    %c0_12 = arith.constant 0 : index
    %c0_13 = arith.constant 0 : index
    %c47 = arith.constant 47 : index
    %15 = vector.load %arg2[%c0_11, %c0_12, %c0_13, %c47] : memref<1x1x24x352xf32, #tpu.memory_space<vmem>>, vector<1x1x8x256xf32>
    %16 = vector.shape_cast %15 : vector<1x1x8x256xf32> to vector<8x256xf32>
    %c1_14 = arith.constant 1 : index
    %c0_15 = arith.constant 0 : index
    %17 = vector.load %arg4[%c1_14, %c0_15] : memref<32x256xf32, #tpu.memory_space<vmem>>, vector<1x256xf32>
    %18 = vector.broadcast %17 : vector<1x256xf32> to vector<8x256xf32>
    %19 = arith.mulf %16, %18 : vector<8x256xf32>
    %c0_16 = arith.constant 0 : index
    %c0_17 = arith.constant 0 : index
    %c0_18 = arith.constant 0 : index
    %c48 = arith.constant 48 : index
    %20 = vector.load %arg2[%c0_16, %c0_17, %c0_18, %c48] : memref<1x1x24x352xf32, #tpu.memory_space<vmem>>, vector<1x1x8x256xf32>
    %21 = vector.shape_cast %20 : vector<1x1x8x256xf32> to vector<8x256xf32>
    %c2_19 = arith.constant 2 : index
    %c0_20 = arith.constant 0 : index
    %22 = vector.load %arg4[%c2_19, %c0_20] : memref<32x256xf32, #tpu.memory_space<vmem>>, vector<1x256xf32>
    %23 = vector.broadcast %22 : vector<1x256xf32> to vector<8x256xf32>
    %24 = arith.mulf %21, %23 : vector<8x256xf32>
    %c0_21 = arith.constant 0 : index
    %c0_22 = arith.constant 0 : index
    %c0_23 = arith.constant 0 : index
    %c49 = arith.constant 49 : index
    %25 = vector.load %arg2[%c0_21, %c0_22, %c0_23, %c49] : memref<1x1x24x352xf32, #tpu.memory_space<vmem>>, vector<1x1x8x256xf32>
    %26 = vector.shape_cast %25 : vector<1x1x8x256xf32> to vector<8x256xf32>
    %c3_24 = arith.constant 3 : index
    %c0_25 = arith.constant 0 : index
    %27 = vector.load %arg4[%c3_24, %c0_25] : memref<32x256xf32, #tpu.memory_space<vmem>>, vector<1x256xf32>
    %28 = vector.broadcast %27 : vector<1x256xf32> to vector<8x256xf32>
    %29 = arith.mulf %26, %28 : vector<8x256xf32>
    %c0_26 = arith.constant 0 : index
    %c0_27 = arith.constant 0 : index
    %c0_28 = arith.constant 0 : index
    %c63 = arith.constant 63 : index
    %30 = vector.load %arg2[%c0_26, %c0_27, %c0_28, %c63] : memref<1x1x24x352xf32, #tpu.memory_space<vmem>>, vector<1x1x8x256xf32>
    %31 = vector.shape_cast %30 : vector<1x1x8x256xf32> to vector<8x256xf32>
    %c1_29 = arith.constant 1 : index
    %c0_30 = arith.constant 0 : index
    %32 = vector.load %arg4[%c1_29, %c0_30] : memref<32x256xf32, #tpu.memory_space<vmem>>, vector<1x256xf32>
    %33 = vector.broadcast %32 : vector<1x256xf32> to vector<8x256xf32>
    %34 = arith.mulf %31, %33 : vector<8x256xf32>
    %c0_31 = arith.constant 0 : index
    %c0_32 = arith.constant 0 : index
    %c0_33 = arith.constant 0 : index
    %c64 = arith.constant 64 : index
    %35 = vector.load %arg2[%c0_31, %c0_32, %c0_33, %c64] : memref<1x1x24x352xf32, #tpu.memory_space<vmem>>, vector<1x1x8x256xf32>
    %36 = vector.shape_cast %35 : vector<1x1x8x256xf32> to vector<8x256xf32>
    %c2_34 = arith.constant 2 : index
    %c0_35 = arith.constant 0 : index
    %37 = vector.load %arg4[%c2_34, %c0_35] : memref<32x256xf32, #tpu.memory_space<vmem>>, vector<1x256xf32>
    %38 = vector.broadcast %37 : vector<1x256xf32> to vector<8x256xf32>
    %39 = arith.mulf %36, %38 : vector<8x256xf32>
    %c0_36 = arith.constant 0 : index
    %c0_37 = arith.constant 0 : index
    %c0_38 = arith.constant 0 : index
    %c65 = arith.constant 65 : index
    %40 = vector.load %arg2[%c0_36, %c0_37, %c0_38, %c65] : memref<1x1x24x352xf32, #tpu.memory_space<vmem>>, vector<1x1x8x256xf32>
    %41 = vector.shape_cast %40 : vector<1x1x8x256xf32> to vector<8x256xf32>
    %c3_39 = arith.constant 3 : index
    %c0_40 = arith.constant 0 : index
    %42 = vector.load %arg4[%c3_39, %c0_40] : memref<32x256xf32, #tpu.memory_space<vmem>>, vector<1x256xf32>
    %43 = vector.broadcast %42 : vector<1x256xf32> to vector<8x256xf32>
    %44 = arith.mulf %41, %43 : vector<8x256xf32>
    %45 = tpu.concatenate %4, %9, %14, %19, %24, %29, %34, %39, %44 in 0 : vector<8x256xf32>, vector<8x256xf32>, vector<8x256xf32>, vector<8x256xf32>, vector<8x256xf32>, vector<8x256xf32>, vector<8x256xf32>, vector<8x256xf32>, vector<8x256xf32> -> vector<72x256xf32>
    %46 = arith.truncf %45 : vector<72x256xf32> to vector<72x256xbf16>
    %c0_41 = arith.constant 0 : index
    %c0_42 = arith.constant 0 : index
    %47 = vector.load %arg3[%c0_41, %c0_42] : memref<128x72xbf16, #tpu.memory_space<vmem>>, vector<128x72xbf16>
    %cst = arith.constant dense<0.000000e+00> : vector<128x256xf32>
    %48 = tpu.matmul %47, %46, %cst {dimension_numbers = #tpu.dot_dimension_numbers<[1], [0], [0], [1], [0, 0, 1, 1], [], []>} : vector<128x72xbf16>, vector<72x256xbf16>, vector<128x256xf32> -> vector<128x256xf32>
    %49 = vector.extract_strided_slice %48 {offsets = [0, 0], sizes = [32, 256], strides = [1, 1]} : vector<128x256xf32> to vector<32x256xf32>
    %cst_43 = arith.constant dense<0xFF800000> : vector<256xf32>
    %50 = vector.multi_reduction <maximumf>, %49, %cst_43 [0] : vector<32x256xf32> to vector<256xf32>
    %51 = vector.shape_cast %50 : vector<256xf32> to vector<1x256xf32>
    %52 = vector.broadcast %51 : vector<1x256xf32> to vector<32x256xf32>
    %53 = arith.subf %49, %52 : vector<32x256xf32>
    %54 = math.exp %53 : vector<32x256xf32>
    %cst_44 = arith.constant dense<0.000000e+00> : vector<256xf32>
    %55 = vector.multi_reduction <add>, %54, %cst_44 [0] : vector<32x256xf32> to vector<256xf32>
    %56 = vector.shape_cast %55 : vector<256xf32> to vector<1x256xf32>
    %57 = tpu.reciprocal %56 {approx = true} : vector<1x256xf32> -> vector<1x256xf32>
    %c0_45 = arith.constant 0 : index
    %c0_46 = arith.constant 0 : index
    %58 = vector.load %arg4[%c0_45, %c0_46] : memref<32x256xf32, #tpu.memory_space<vmem>>, vector<32x256xf32>
    %59 = arith.mulf %54, %58 : vector<32x256xf32>
    %60 = vector.extract_strided_slice %48 {offsets = [32, 0], sizes = [32, 256], strides = [1, 1]} : vector<128x256xf32> to vector<32x256xf32>
    %cst_47 = arith.constant dense<0xFF800000> : vector<256xf32>
    %61 = vector.multi_reduction <maximumf>, %60, %cst_47 [0] : vector<32x256xf32> to vector<256xf32>
    %62 = vector.shape_cast %61 : vector<256xf32> to vector<1x256xf32>
    %63 = vector.broadcast %62 : vector<1x256xf32> to vector<32x256xf32>
    %64 = arith.subf %60, %63 : vector<32x256xf32>
    %65 = math.exp %64 : vector<32x256xf32>
    %cst_48 = arith.constant dense<0.000000e+00> : vector<256xf32>
    %66 = vector.multi_reduction <add>, %65, %cst_48 [0] : vector<32x256xf32> to vector<256xf32>
    %67 = vector.shape_cast %66 : vector<256xf32> to vector<1x256xf32>
    %68 = tpu.reciprocal %67 {approx = true} : vector<1x256xf32> -> vector<1x256xf32>
    %c0_49 = arith.constant 0 : index
    %c0_50 = arith.constant 0 : index
    %69 = vector.load %arg4[%c0_49, %c0_50] : memref<32x256xf32, #tpu.memory_space<vmem>>, vector<32x256xf32>
    %70 = arith.mulf %65, %69 : vector<32x256xf32>
    %71 = vector.extract_strided_slice %48 {offsets = [64, 0], sizes = [32, 256], strides = [1, 1]} : vector<128x256xf32> to vector<32x256xf32>
    %cst_51 = arith.constant dense<0xFF800000> : vector<256xf32>
    %72 = vector.multi_reduction <maximumf>, %71, %cst_51 [0] : vector<32x256xf32> to vector<256xf32>
    %73 = vector.shape_cast %72 : vector<256xf32> to vector<1x256xf32>
    %74 = vector.broadcast %73 : vector<1x256xf32> to vector<32x256xf32>
    %75 = arith.subf %71, %74 : vector<32x256xf32>
    %76 = math.exp %75 : vector<32x256xf32>
    %cst_52 = arith.constant dense<0.000000e+00> : vector<256xf32>
    %77 = vector.multi_reduction <add>, %76, %cst_52 [0] : vector<32x256xf32> to vector<256xf32>
    %78 = vector.shape_cast %77 : vector<256xf32> to vector<1x256xf32>
    %79 = tpu.reciprocal %78 {approx = true} : vector<1x256xf32> -> vector<1x256xf32>
    %c0_53 = arith.constant 0 : index
    %c0_54 = arith.constant 0 : index
    %80 = vector.load %arg4[%c0_53, %c0_54] : memref<32x256xf32, #tpu.memory_space<vmem>>, vector<32x256xf32>
    %81 = arith.mulf %76, %80 : vector<32x256xf32>
    %82 = vector.extract_strided_slice %48 {offsets = [96, 0], sizes = [32, 256], strides = [1, 1]} : vector<128x256xf32> to vector<32x256xf32>
    %cst_55 = arith.constant dense<0xFF800000> : vector<256xf32>
    %83 = vector.multi_reduction <maximumf>, %82, %cst_55 [0] : vector<32x256xf32> to vector<256xf32>
    %84 = vector.shape_cast %83 : vector<256xf32> to vector<1x256xf32>
    %85 = vector.broadcast %84 : vector<1x256xf32> to vector<32x256xf32>
    %86 = arith.subf %82, %85 : vector<32x256xf32>
    %87 = math.exp %86 : vector<32x256xf32>
    %cst_56 = arith.constant dense<0.000000e+00> : vector<256xf32>
    %88 = vector.multi_reduction <add>, %87, %cst_56 [0] : vector<32x256xf32> to vector<256xf32>
    %89 = vector.shape_cast %88 : vector<256xf32> to vector<1x256xf32>
    %90 = tpu.reciprocal %89 {approx = true} : vector<1x256xf32> -> vector<1x256xf32>
    %c0_57 = arith.constant 0 : index
    %c0_58 = arith.constant 0 : index
    %91 = vector.load %arg4[%c0_57, %c0_58] : memref<32x256xf32, #tpu.memory_space<vmem>>, vector<32x256xf32>
    %92 = arith.mulf %87, %91 : vector<32x256xf32>
    %cst_59 = arith.constant 0.000000e+00 : f32
    %93 = vector.broadcast %cst_59 : f32 to vector<16x256xf32>
    %c0_60 = arith.constant 0 : index
    %c0_61 = arith.constant 0 : index
    %c8 = arith.constant 8 : index
    %c14 = arith.constant 14 : index
    %94 = vector.load %arg2[%c0_60, %c0_61, %c8, %c14] : memref<1x1x24x352xf32, #tpu.memory_space<vmem>>, vector<1x1x16x256xf32>
    %95 = vector.shape_cast %94 : vector<1x1x16x256xf32> to vector<16x256xf32>
    %96 = vector.extract_strided_slice %59 {offsets = [0, 0], sizes = [1, 256], strides = [1, 1]} : vector<32x256xf32> to vector<1x256xf32>
    %97 = vector.shape_cast %96 : vector<1x256xf32> to vector<1x256xf32>
    %98 = vector.broadcast %97 : vector<1x256xf32> to vector<4x256xf32>
    %99 = vector.extract_strided_slice %70 {offsets = [0, 0], sizes = [1, 256], strides = [1, 1]} : vector<32x256xf32> to vector<1x256xf32>
    %100 = vector.shape_cast %99 : vector<1x256xf32> to vector<1x256xf32>
    %101 = vector.broadcast %100 : vector<1x256xf32> to vector<4x256xf32>
    %102 = vector.extract_strided_slice %81 {offsets = [0, 0], sizes = [1, 256], strides = [1, 1]} : vector<32x256xf32> to vector<1x256xf32>
    %103 = vector.shape_cast %102 : vector<1x256xf32> to vector<1x256xf32>
    %104 = vector.broadcast %103 : vector<1x256xf32> to vector<4x256xf32>
    %105 = vector.extract_strided_slice %92 {offsets = [0, 0], sizes = [1, 256], strides = [1, 1]} : vector<32x256xf32> to vector<1x256xf32>
    %106 = vector.shape_cast %105 : vector<1x256xf32> to vector<1x256xf32>
    %107 = vector.broadcast %106 : vector<1x256xf32> to vector<4x256xf32>
    %108 = tpu.concatenate %98, %101, %104, %107 in 0 : vector<4x256xf32>, vector<4x256xf32>, vector<4x256xf32>, vector<4x256xf32> -> vector<16x256xf32>
    %109 = arith.mulf %95, %108 : vector<16x256xf32>
    %110 = arith.addf %93, %109 : vector<16x256xf32>
    %c0_62 = arith.constant 0 : index
    %c0_63 = arith.constant 0 : index
    %c8_64 = arith.constant 8 : index
    %c15 = arith.constant 15 : index
    %111 = vector.load %arg2[%c0_62, %c0_63, %c8_64, %c15] : memref<1x1x24x352xf32, #tpu.memory_space<vmem>>, vector<1x1x16x256xf32>
    %112 = vector.shape_cast %111 : vector<1x1x16x256xf32> to vector<16x256xf32>
    %113 = vector.extract_strided_slice %59 {offsets = [1, 0], sizes = [1, 256], strides = [1, 1]} : vector<32x256xf32> to vector<1x256xf32>
    %114 = vector.shape_cast %113 : vector<1x256xf32> to vector<1x256xf32>
    %115 = vector.broadcast %114 : vector<1x256xf32> to vector<4x256xf32>
    %116 = vector.extract_strided_slice %70 {offsets = [1, 0], sizes = [1, 256], strides = [1, 1]} : vector<32x256xf32> to vector<1x256xf32>
    %117 = vector.shape_cast %116 : vector<1x256xf32> to vector<1x256xf32>
    %118 = vector.broadcast %117 : vector<1x256xf32> to vector<4x256xf32>
    %119 = vector.extract_strided_slice %81 {offsets = [1, 0], sizes = [1, 256], strides = [1, 1]} : vector<32x256xf32> to vector<1x256xf32>
    %120 = vector.shape_cast %119 : vector<1x256xf32> to vector<1x256xf32>
    %121 = vector.broadcast %120 : vector<1x256xf32> to vector<4x256xf32>
    %122 = vector.extract_strided_slice %92 {offsets = [1, 0], sizes = [1, 256], strides = [1, 1]} : vector<32x256xf32> to vector<1x256xf32>
    %123 = vector.shape_cast %122 : vector<1x256xf32> to vector<1x256xf32>
    %124 = vector.broadcast %123 : vector<1x256xf32> to vector<4x256xf32>
    %125 = tpu.concatenate %115, %118, %121, %124 in 0 : vector<4x256xf32>, vector<4x256xf32>, vector<4x256xf32>, vector<4x256xf32> -> vector<16x256xf32>
    %126 = arith.mulf %112, %125 : vector<16x256xf32>
    %127 = arith.addf %110, %126 : vector<16x256xf32>
    %c0_65 = arith.constant 0 : index
    %c0_66 = arith.constant 0 : index
    %c8_67 = arith.constant 8 : index
    %c16 = arith.constant 16 : index
    %128 = vector.load %arg2[%c0_65, %c0_66, %c8_67, %c16] : memref<1x1x24x352xf32, #tpu.memory_space<vmem>>, vector<1x1x16x256xf32>
    %129 = vector.shape_cast %128 : vector<1x1x16x256xf32> to vector<16x256xf32>
    %130 = vector.extract_strided_slice %59 {offsets = [2, 0], sizes = [1, 256], strides = [1, 1]} : vector<32x256xf32> to vector<1x256xf32>
    %131 = vector.shape_cast %130 : vector<1x256xf32> to vector<1x256xf32>
    %132 = vector.broadcast %131 : vector<1x256xf32> to vector<4x256xf32>
    %133 = vector.extract_strided_slice %70 {offsets = [2, 0], sizes = [1, 256], strides = [1, 1]} : vector<32x256xf32> to vector<1x256xf32>
    %134 = vector.shape_cast %133 : vector<1x256xf32> to vector<1x256xf32>
    %135 = vector.broadcast %134 : vector<1x256xf32> to vector<4x256xf32>
    %136 = vector.extract_strided_slice %81 {offsets = [2, 0], sizes = [1, 256], strides = [1, 1]} : vector<32x256xf32> to vector<1x256xf32>
    %137 = vector.shape_cast %136 : vector<1x256xf32> to vector<1x256xf32>
    %138 = vector.broadcast %137 : vector<1x256xf32> to vector<4x256xf32>
    %139 = vector.extract_strided_slice %92 {offsets = [2, 0], sizes = [1, 256], strides = [1, 1]} : vector<32x256xf32> to vector<1x256xf32>
    %140 = vector.shape_cast %139 : vector<1x256xf32> to vector<1x256xf32>
    %141 = vector.broadcast %140 : vector<1x256xf32> to vector<4x256xf32>
    %142 = tpu.concatenate %132, %135, %138, %141 in 0 : vector<4x256xf32>, vector<4x256xf32>, vector<4x256xf32>, vector<4x256xf32> -> vector<16x256xf32>
    %143 = arith.mulf %129, %142 : vector<16x256xf32>
    %144 = arith.addf %127, %143 : vector<16x256xf32>
    %c0_68 = arith.constant 0 : index
    %c0_69 = arith.constant 0 : index
    %c8_70 = arith.constant 8 : index
    %c17 = arith.constant 17 : index
    %145 = vector.load %arg2[%c0_68, %c0_69, %c8_70, %c17] : memref<1x1x24x352xf32, #tpu.memory_space<vmem>>, vector<1x1x16x256xf32>
    %146 = vector.shape_cast %145 : vector<1x1x16x256xf32> to vector<16x256xf32>
    %147 = vector.extract_strided_slice %59 {offsets = [3, 0], sizes = [1, 256], strides = [1, 1]} : vector<32x256xf32> to vector<1x256xf32>
    %148 = vector.shape_cast %147 : vector<1x256xf32> to vector<1x256xf32>
    %149 = vector.broadcast %148 : vector<1x256xf32> to vector<4x256xf32>
    %150 = vector.extract_strided_slice %70 {offsets = [3, 0], sizes = [1, 256], strides = [1, 1]} : vector<32x256xf32> to vector<1x256xf32>
    %151 = vector.shape_cast %150 : vector<1x256xf32> to vector<1x256xf32>
    %152 = vector.broadcast %151 : vector<1x256xf32> to vector<4x256xf32>
    %153 = vector.extract_strided_slice %81 {offsets = [3, 0], sizes = [1, 256], strides = [1, 1]} : vector<32x256xf32> to vector<1x256xf32>
    %154 = vector.shape_cast %153 : vector<1x256xf32> to vector<1x256xf32>
    %155 = vector.broadcast %154 : vector<1x256xf32> to vector<4x256xf32>
    %156 = vector.extract_strided_slice %92 {offsets = [3, 0], sizes = [1, 256], strides = [1, 1]} : vector<32x256xf32> to vector<1x256xf32>
    %157 = vector.shape_cast %156 : vector<1x256xf32> to vector<1x256xf32>
    %158 = vector.broadcast %157 : vector<1x256xf32> to vector<4x256xf32>
    %159 = tpu.concatenate %149, %152, %155, %158 in 0 : vector<4x256xf32>, vector<4x256xf32>, vector<4x256xf32>, vector<4x256xf32> -> vector<16x256xf32>
    %160 = arith.mulf %146, %159 : vector<16x256xf32>
    %161 = arith.addf %144, %160 : vector<16x256xf32>
    %c0_71 = arith.constant 0 : index
    %c0_72 = arith.constant 0 : index
    %c8_73 = arith.constant 8 : index
    %c18 = arith.constant 18 : index
    %162 = vector.load %arg2[%c0_71, %c0_72, %c8_73, %c18] : memref<1x1x24x352xf32, #tpu.memory_space<vmem>>, vector<1x1x16x256xf32>
    %163 = vector.shape_cast %162 : vector<1x1x16x256xf32> to vector<16x256xf32>
    %164 = vector.extract_strided_slice %59 {offsets = [4, 0], sizes = [1, 256], strides = [1, 1]} : vector<32x256xf32> to vector<1x256xf32>
    %165 = vector.shape_cast %164 : vector<1x256xf32> to vector<1x256xf32>
    %166 = vector.broadcast %165 : vector<1x256xf32> to vector<4x256xf32>
    %167 = vector.extract_strided_slice %70 {offsets = [4, 0], sizes = [1, 256], strides = [1, 1]} : vector<32x256xf32> to vector<1x256xf32>
    %168 = vector.shape_cast %167 : vector<1x256xf32> to vector<1x256xf32>
    %169 = vector.broadcast %168 : vector<1x256xf32> to vector<4x256xf32>
    %170 = vector.extract_strided_slice %81 {offsets = [4, 0], sizes = [1, 256], strides = [1, 1]} : vector<32x256xf32> to vector<1x256xf32>
    %171 = vector.shape_cast %170 : vector<1x256xf32> to vector<1x256xf32>
    %172 = vector.broadcast %171 : vector<1x256xf32> to vector<4x256xf32>
    %173 = vector.extract_strided_slice %92 {offsets = [4, 0], sizes = [1, 256], strides = [1, 1]} : vector<32x256xf32> to vector<1x256xf32>
    %174 = vector.shape_cast %173 : vector<1x256xf32> to vector<1x256xf32>
    %175 = vector.broadcast %174 : vector<1x256xf32> to vector<4x256xf32>
    %176 = tpu.concatenate %166, %169, %172, %175 in 0 : vector<4x256xf32>, vector<4x256xf32>, vector<4x256xf32>, vector<4x256xf32> -> vector<16x256xf32>
    %177 = arith.mulf %163, %176 : vector<16x256xf32>
    %178 = arith.addf %161, %177 : vector<16x256xf32>
    %c0_74 = arith.constant 0 : index
    %c0_75 = arith.constant 0 : index
    %c8_76 = arith.constant 8 : index
    %c30 = arith.constant 30 : index
    %179 = vector.load %arg2[%c0_74, %c0_75, %c8_76, %c30] : memref<1x1x24x352xf32, #tpu.memory_space<vmem>>, vector<1x1x16x256xf32>
    %180 = vector.shape_cast %179 : vector<1x1x16x256xf32> to vector<16x256xf32>
    %181 = vector.extract_strided_slice %59 {offsets = [5, 0], sizes = [1, 256], strides = [1, 1]} : vector<32x256xf32> to vector<1x256xf32>
    %182 = vector.shape_cast %181 : vector<1x256xf32> to vector<1x256xf32>
    %183 = vector.broadcast %182 : vector<1x256xf32> to vector<4x256xf32>
    %184 = vector.extract_strided_slice %70 {offsets = [5, 0], sizes = [1, 256], strides = [1, 1]} : vector<32x256xf32> to vector<1x256xf32>
    %185 = vector.shape_cast %184 : vector<1x256xf32> to vector<1x256xf32>
    %186 = vector.broadcast %185 : vector<1x256xf32> to vector<4x256xf32>
    %187 = vector.extract_strided_slice %81 {offsets = [5, 0], sizes = [1, 256], strides = [1, 1]} : vector<32x256xf32> to vector<1x256xf32>
    %188 = vector.shape_cast %187 : vector<1x256xf32> to vector<1x256xf32>
    %189 = vector.broadcast %188 : vector<1x256xf32> to vector<4x256xf32>
    %190 = vector.extract_strided_slice %92 {offsets = [5, 0], sizes = [1, 256], strides = [1, 1]} : vector<32x256xf32> to vector<1x256xf32>
    %191 = vector.shape_cast %190 : vector<1x256xf32> to vector<1x256xf32>
    %192 = vector.broadcast %191 : vector<1x256xf32> to vector<4x256xf32>
    %193 = tpu.concatenate %183, %186, %189, %192 in 0 : vector<4x256xf32>, vector<4x256xf32>, vector<4x256xf32>, vector<4x256xf32> -> vector<16x256xf32>
    %194 = arith.mulf %180, %193 : vector<16x256xf32>
    %195 = arith.addf %178, %194 : vector<16x256xf32>
    %c0_77 = arith.constant 0 : index
    %c0_78 = arith.constant 0 : index
    %c8_79 = arith.constant 8 : index
    %c31_80 = arith.constant 31 : index
    %196 = vector.load %arg2[%c0_77, %c0_78, %c8_79, %c31_80] : memref<1x1x24x352xf32, #tpu.memory_space<vmem>>, vector<1x1x16x256xf32>
    %197 = vector.shape_cast %196 : vector<1x1x16x256xf32> to vector<16x256xf32>
    %198 = vector.extract_strided_slice %59 {offsets = [6, 0], sizes = [1, 256], strides = [1, 1]} : vector<32x256xf32> to vector<1x256xf32>
    %199 = vector.shape_cast %198 : vector<1x256xf32> to vector<1x256xf32>
    %200 = vector.broadcast %199 : vector<1x256xf32> to vector<4x256xf32>
    %201 = vector.extract_strided_slice %70 {offsets = [6, 0], sizes = [1, 256], strides = [1, 1]} : vector<32x256xf32> to vector<1x256xf32>
    %202 = vector.shape_cast %201 : vector<1x256xf32> to vector<1x256xf32>
    %203 = vector.broadcast %202 : vector<1x256xf32> to vector<4x256xf32>
    %204 = vector.extract_strided_slice %81 {offsets = [6, 0], sizes = [1, 256], strides = [1, 1]} : vector<32x256xf32> to vector<1x256xf32>
    %205 = vector.shape_cast %204 : vector<1x256xf32> to vector<1x256xf32>
    %206 = vector.broadcast %205 : vector<1x256xf32> to vector<4x256xf32>
    %207 = vector.extract_strided_slice %92 {offsets = [6, 0], sizes = [1, 256], strides = [1, 1]} : vector<32x256xf32> to vector<1x256xf32>
    %208 = vector.shape_cast %207 : vector<1x256xf32> to vector<1x256xf32>
    %209 = vector.broadcast %208 : vector<1x256xf32> to vector<4x256xf32>
    %210 = tpu.concatenate %200, %203, %206, %209 in 0 : vector<4x256xf32>, vector<4x256xf32>, vector<4x256xf32>, vector<4x256xf32> -> vector<16x256xf32>
    %211 = arith.mulf %197, %210 : vector<16x256xf32>
    %212 = arith.addf %195, %211 : vector<16x256xf32>
    %c0_81 = arith.constant 0 : index
    %c0_82 = arith.constant 0 : index
    %c8_83 = arith.constant 8 : index
    %c32_84 = arith.constant 32 : index
    %213 = vector.load %arg2[%c0_81, %c0_82, %c8_83, %c32_84] : memref<1x1x24x352xf32, #tpu.memory_space<vmem>>, vector<1x1x16x256xf32>
    %214 = vector.shape_cast %213 : vector<1x1x16x256xf32> to vector<16x256xf32>
    %215 = vector.extract_strided_slice %59 {offsets = [7, 0], sizes = [1, 256], strides = [1, 1]} : vector<32x256xf32> to vector<1x256xf32>
    %216 = vector.shape_cast %215 : vector<1x256xf32> to vector<1x256xf32>
    %217 = vector.broadcast %216 : vector<1x256xf32> to vector<4x256xf32>
    %218 = vector.extract_strided_slice %70 {offsets = [7, 0], sizes = [1, 256], strides = [1, 1]} : vector<32x256xf32> to vector<1x256xf32>
    %219 = vector.shape_cast %218 : vector<1x256xf32> to vector<1x256xf32>
    %220 = vector.broadcast %219 : vector<1x256xf32> to vector<4x256xf32>
    %221 = vector.extract_strided_slice %81 {offsets = [7, 0], sizes = [1, 256], strides = [1, 1]} : vector<32x256xf32> to vector<1x256xf32>
    %222 = vector.shape_cast %221 : vector<1x256xf32> to vector<1x256xf32>
    %223 = vector.broadcast %222 : vector<1x256xf32> to vector<4x256xf32>
    %224 = vector.extract_strided_slice %92 {offsets = [7, 0], sizes = [1, 256], strides = [1, 1]} : vector<32x256xf32> to vector<1x256xf32>
    %225 = vector.shape_cast %224 : vector<1x256xf32> to vector<1x256xf32>
    %226 = vector.broadcast %225 : vector<1x256xf32> to vector<4x256xf32>
    %227 = tpu.concatenate %217, %220, %223, %226 in 0 : vector<4x256xf32>, vector<4x256xf32>, vector<4x256xf32>, vector<4x256xf32> -> vector<16x256xf32>
    %228 = arith.mulf %214, %227 : vector<16x256xf32>
    %229 = arith.addf %212, %228 : vector<16x256xf32>
    %c0_85 = arith.constant 0 : index
    %c0_86 = arith.constant 0 : index
    %c8_87 = arith.constant 8 : index
    %c33_88 = arith.constant 33 : index
    %230 = vector.load %arg2[%c0_85, %c0_86, %c8_87, %c33_88] : memref<1x1x24x352xf32, #tpu.memory_space<vmem>>, vector<1x1x16x256xf32>
    %231 = vector.shape_cast %230 : vector<1x1x16x256xf32> to vector<16x256xf32>
    %232 = vector.extract_strided_slice %59 {offsets = [8, 0], sizes = [1, 256], strides = [1, 1]} : vector<32x256xf32> to vector<1x256xf32>
    %233 = vector.shape_cast %232 : vector<1x256xf32> to vector<1x256xf32>
    %234 = vector.broadcast %233 : vector<1x256xf32> to vector<4x256xf32>
    %235 = vector.extract_strided_slice %70 {offsets = [8, 0], sizes = [1, 256], strides = [1, 1]} : vector<32x256xf32> to vector<1x256xf32>
    %236 = vector.shape_cast %235 : vector<1x256xf32> to vector<1x256xf32>
    %237 = vector.broadcast %236 : vector<1x256xf32> to vector<4x256xf32>
    %238 = vector.extract_strided_slice %81 {offsets = [8, 0], sizes = [1, 256], strides = [1, 1]} : vector<32x256xf32> to vector<1x256xf32>
    %239 = vector.shape_cast %238 : vector<1x256xf32> to vector<1x256xf32>
    %240 = vector.broadcast %239 : vector<1x256xf32> to vector<4x256xf32>
    %241 = vector.extract_strided_slice %92 {offsets = [8, 0], sizes = [1, 256], strides = [1, 1]} : vector<32x256xf32> to vector<1x256xf32>
    %242 = vector.shape_cast %241 : vector<1x256xf32> to vector<1x256xf32>
    %243 = vector.broadcast %242 : vector<1x256xf32> to vector<4x256xf32>
    %244 = tpu.concatenate %234, %237, %240, %243 in 0 : vector<4x256xf32>, vector<4x256xf32>, vector<4x256xf32>, vector<4x256xf32> -> vector<16x256xf32>
    %245 = arith.mulf %231, %244 : vector<16x256xf32>
    %246 = arith.addf %229, %245 : vector<16x256xf32>
    %c0_89 = arith.constant 0 : index
    %c0_90 = arith.constant 0 : index
    %c8_91 = arith.constant 8 : index
    %c34 = arith.constant 34 : index
    %247 = vector.load %arg2[%c0_89, %c0_90, %c8_91, %c34] : memref<1x1x24x352xf32, #tpu.memory_space<vmem>>, vector<1x1x16x256xf32>
    %248 = vector.shape_cast %247 : vector<1x1x16x256xf32> to vector<16x256xf32>
    %249 = vector.extract_strided_slice %59 {offsets = [9, 0], sizes = [1, 256], strides = [1, 1]} : vector<32x256xf32> to vector<1x256xf32>
    %250 = vector.shape_cast %249 : vector<1x256xf32> to vector<1x256xf32>
    %251 = vector.broadcast %250 : vector<1x256xf32> to vector<4x256xf32>
    %252 = vector.extract_strided_slice %70 {offsets = [9, 0], sizes = [1, 256], strides = [1, 1]} : vector<32x256xf32> to vector<1x256xf32>
    %253 = vector.shape_cast %252 : vector<1x256xf32> to vector<1x256xf32>
    %254 = vector.broadcast %253 : vector<1x256xf32> to vector<4x256xf32>
    %255 = vector.extract_strided_slice %81 {offsets = [9, 0], sizes = [1, 256], strides = [1, 1]} : vector<32x256xf32> to vector<1x256xf32>
    %256 = vector.shape_cast %255 : vector<1x256xf32> to vector<1x256xf32>
    %257 = vector.broadcast %256 : vector<1x256xf32> to vector<4x256xf32>
    %258 = vector.extract_strided_slice %92 {offsets = [9, 0], sizes = [1, 256], strides = [1, 1]} : vector<32x256xf32> to vector<1x256xf32>
    %259 = vector.shape_cast %258 : vector<1x256xf32> to vector<1x256xf32>
    %260 = vector.broadcast %259 : vector<1x256xf32> to vector<4x256xf32>
    %261 = tpu.concatenate %251, %254, %257, %260 in 0 : vector<4x256xf32>, vector<4x256xf32>, vector<4x256xf32>, vector<4x256xf32> -> vector<16x256xf32>
    %262 = arith.mulf %248, %261 : vector<16x256xf32>
    %263 = arith.addf %246, %262 : vector<16x256xf32>
    %c0_92 = arith.constant 0 : index
    %c0_93 = arith.constant 0 : index
    %c8_94 = arith.constant 8 : index
    %c46 = arith.constant 46 : index
    %264 = vector.load %arg2[%c0_92, %c0_93, %c8_94, %c46] : memref<1x1x24x352xf32, #tpu.memory_space<vmem>>, vector<1x1x16x256xf32>
    %265 = vector.shape_cast %264 : vector<1x1x16x256xf32> to vector<16x256xf32>
    %266 = vector.extract_strided_slice %59 {offsets = [10, 0], sizes = [1, 256], strides = [1, 1]} : vector<32x256xf32> to vector<1x256xf32>
    %267 = vector.shape_cast %266 : vector<1x256xf32> to vector<1x256xf32>
    %268 = vector.broadcast %267 : vector<1x256xf32> to vector<4x256xf32>
    %269 = vector.extract_strided_slice %70 {offsets = [10, 0], sizes = [1, 256], strides = [1, 1]} : vector<32x256xf32> to vector<1x256xf32>
    %270 = vector.shape_cast %269 : vector<1x256xf32> to vector<1x256xf32>
    %271 = vector.broadcast %270 : vector<1x256xf32> to vector<4x256xf32>
    %272 = vector.extract_strided_slice %81 {offsets = [10, 0], sizes = [1, 256], strides = [1, 1]} : vector<32x256xf32> to vector<1x256xf32>
    %273 = vector.shape_cast %272 : vector<1x256xf32> to vector<1x256xf32>
    %274 = vector.broadcast %273 : vector<1x256xf32> to vector<4x256xf32>
    %275 = vector.extract_strided_slice %92 {offsets = [10, 0], sizes = [1, 256], strides = [1, 1]} : vector<32x256xf32> to vector<1x256xf32>
    %276 = vector.shape_cast %275 : vector<1x256xf32> to vector<1x256xf32>
    %277 = vector.broadcast %276 : vector<1x256xf32> to vector<4x256xf32>
    %278 = tpu.concatenate %268, %271, %274, %277 in 0 : vector<4x256xf32>, vector<4x256xf32>, vector<4x256xf32>, vector<4x256xf32> -> vector<16x256xf32>
    %279 = arith.mulf %265, %278 : vector<16x256xf32>
    %280 = arith.addf %263, %279 : vector<16x256xf32>
    %c0_95 = arith.constant 0 : index
    %c0_96 = arith.constant 0 : index
    %c8_97 = arith.constant 8 : index
    %c47_98 = arith.constant 47 : index
    %281 = vector.load %arg2[%c0_95, %c0_96, %c8_97, %c47_98] : memref<1x1x24x352xf32, #tpu.memory_space<vmem>>, vector<1x1x16x256xf32>
    %282 = vector.shape_cast %281 : vector<1x1x16x256xf32> to vector<16x256xf32>
    %283 = vector.extract_strided_slice %59 {offsets = [11, 0], sizes = [1, 256], strides = [1, 1]} : vector<32x256xf32> to vector<1x256xf32>
    %284 = vector.shape_cast %283 : vector<1x256xf32> to vector<1x256xf32>
    %285 = vector.broadcast %284 : vector<1x256xf32> to vector<4x256xf32>
    %286 = vector.extract_strided_slice %70 {offsets = [11, 0], sizes = [1, 256], strides = [1, 1]} : vector<32x256xf32> to vector<1x256xf32>
    %287 = vector.shape_cast %286 : vector<1x256xf32> to vector<1x256xf32>
    %288 = vector.broadcast %287 : vector<1x256xf32> to vector<4x256xf32>
    %289 = vector.extract_strided_slice %81 {offsets = [11, 0], sizes = [1, 256], strides = [1, 1]} : vector<32x256xf32> to vector<1x256xf32>
    %290 = vector.shape_cast %289 : vector<1x256xf32> to vector<1x256xf32>
    %291 = vector.broadcast %290 : vector<1x256xf32> to vector<4x256xf32>
    %292 = vector.extract_strided_slice %92 {offsets = [11, 0], sizes = [1, 256], strides = [1, 1]} : vector<32x256xf32> to vector<1x256xf32>
    %293 = vector.shape_cast %292 : vector<1x256xf32> to vector<1x256xf32>
    %294 = vector.broadcast %293 : vector<1x256xf32> to vector<4x256xf32>
    %295 = tpu.concatenate %285, %288, %291, %294 in 0 : vector<4x256xf32>, vector<4x256xf32>, vector<4x256xf32>, vector<4x256xf32> -> vector<16x256xf32>
    %296 = arith.mulf %282, %295 : vector<16x256xf32>
    %297 = arith.addf %280, %296 : vector<16x256xf32>
    %c0_99 = arith.constant 0 : index
    %c0_100 = arith.constant 0 : index
    %c8_101 = arith.constant 8 : index
    %c48_102 = arith.constant 48 : index
    %298 = vector.load %arg2[%c0_99, %c0_100, %c8_101, %c48_102] : memref<1x1x24x352xf32, #tpu.memory_space<vmem>>, vector<1x1x16x256xf32>
    %299 = vector.shape_cast %298 : vector<1x1x16x256xf32> to vector<16x256xf32>
    %300 = vector.extract_strided_slice %59 {offsets = [12, 0], sizes = [1, 256], strides = [1, 1]} : vector<32x256xf32> to vector<1x256xf32>
    %301 = vector.shape_cast %300 : vector<1x256xf32> to vector<1x256xf32>
    %302 = vector.broadcast %301 : vector<1x256xf32> to vector<4x256xf32>
    %303 = vector.extract_strided_slice %70 {offsets = [12, 0], sizes = [1, 256], strides = [1, 1]} : vector<32x256xf32> to vector<1x256xf32>
    %304 = vector.shape_cast %303 : vector<1x256xf32> to vector<1x256xf32>
    %305 = vector.broadcast %304 : vector<1x256xf32> to vector<4x256xf32>
    %306 = vector.extract_strided_slice %81 {offsets = [12, 0], sizes = [1, 256], strides = [1, 1]} : vector<32x256xf32> to vector<1x256xf32>
    %307 = vector.shape_cast %306 : vector<1x256xf32> to vector<1x256xf32>
    %308 = vector.broadcast %307 : vector<1x256xf32> to vector<4x256xf32>
    %309 = vector.extract_strided_slice %92 {offsets = [12, 0], sizes = [1, 256], strides = [1, 1]} : vector<32x256xf32> to vector<1x256xf32>
    %310 = vector.shape_cast %309 : vector<1x256xf32> to vector<1x256xf32>
    %311 = vector.broadcast %310 : vector<1x256xf32> to vector<4x256xf32>
    %312 = tpu.concatenate %302, %305, %308, %311 in 0 : vector<4x256xf32>, vector<4x256xf32>, vector<4x256xf32>, vector<4x256xf32> -> vector<16x256xf32>
    %313 = arith.mulf %299, %312 : vector<16x256xf32>
    %314 = arith.addf %297, %313 : vector<16x256xf32>
    %c0_103 = arith.constant 0 : index
    %c0_104 = arith.constant 0 : index
    %c8_105 = arith.constant 8 : index
    %c49_106 = arith.constant 49 : index
    %315 = vector.load %arg2[%c0_103, %c0_104, %c8_105, %c49_106] : memref<1x1x24x352xf32, #tpu.memory_space<vmem>>, vector<1x1x16x256xf32>
    %316 = vector.shape_cast %315 : vector<1x1x16x256xf32> to vector<16x256xf32>
    %317 = vector.extract_strided_slice %59 {offsets = [13, 0], sizes = [1, 256], strides = [1, 1]} : vector<32x256xf32> to vector<1x256xf32>
    %318 = vector.shape_cast %317 : vector<1x256xf32> to vector<1x256xf32>
    %319 = vector.broadcast %318 : vector<1x256xf32> to vector<4x256xf32>
    %320 = vector.extract_strided_slice %70 {offsets = [13, 0], sizes = [1, 256], strides = [1, 1]} : vector<32x256xf32> to vector<1x256xf32>
    %321 = vector.shape_cast %320 : vector<1x256xf32> to vector<1x256xf32>
    %322 = vector.broadcast %321 : vector<1x256xf32> to vector<4x256xf32>
    %323 = vector.extract_strided_slice %81 {offsets = [13, 0], sizes = [1, 256], strides = [1, 1]} : vector<32x256xf32> to vector<1x256xf32>
    %324 = vector.shape_cast %323 : vector<1x256xf32> to vector<1x256xf32>
    %325 = vector.broadcast %324 : vector<1x256xf32> to vector<4x256xf32>
    %326 = vector.extract_strided_slice %92 {offsets = [13, 0], sizes = [1, 256], strides = [1, 1]} : vector<32x256xf32> to vector<1x256xf32>
    %327 = vector.shape_cast %326 : vector<1x256xf32> to vector<1x256xf32>
    %328 = vector.broadcast %327 : vector<1x256xf32> to vector<4x256xf32>
    %329 = tpu.concatenate %319, %322, %325, %328 in 0 : vector<4x256xf32>, vector<4x256xf32>, vector<4x256xf32>, vector<4x256xf32> -> vector<16x256xf32>
    %330 = arith.mulf %316, %329 : vector<16x256xf32>
    %331 = arith.addf %314, %330 : vector<16x256xf32>
    %c0_107 = arith.constant 0 : index
    %c0_108 = arith.constant 0 : index
    %c8_109 = arith.constant 8 : index
    %c50 = arith.constant 50 : index
    %332 = vector.load %arg2[%c0_107, %c0_108, %c8_109, %c50] : memref<1x1x24x352xf32, #tpu.memory_space<vmem>>, vector<1x1x16x256xf32>
    %333 = vector.shape_cast %332 : vector<1x1x16x256xf32> to vector<16x256xf32>
    %334 = vector.extract_strided_slice %59 {offsets = [14, 0], sizes = [1, 256], strides = [1, 1]} : vector<32x256xf32> to vector<1x256xf32>
    %335 = vector.shape_cast %334 : vector<1x256xf32> to vector<1x256xf32>
    %336 = vector.broadcast %335 : vector<1x256xf32> to vector<4x256xf32>
    %337 = vector.extract_strided_slice %70 {offsets = [14, 0], sizes = [1, 256], strides = [1, 1]} : vector<32x256xf32> to vector<1x256xf32>
    %338 = vector.shape_cast %337 : vector<1x256xf32> to vector<1x256xf32>
    %339 = vector.broadcast %338 : vector<1x256xf32> to vector<4x256xf32>
    %340 = vector.extract_strided_slice %81 {offsets = [14, 0], sizes = [1, 256], strides = [1, 1]} : vector<32x256xf32> to vector<1x256xf32>
    %341 = vector.shape_cast %340 : vector<1x256xf32> to vector<1x256xf32>
    %342 = vector.broadcast %341 : vector<1x256xf32> to vector<4x256xf32>
    %343 = vector.extract_strided_slice %92 {offsets = [14, 0], sizes = [1, 256], strides = [1, 1]} : vector<32x256xf32> to vector<1x256xf32>
    %344 = vector.shape_cast %343 : vector<1x256xf32> to vector<1x256xf32>
    %345 = vector.broadcast %344 : vector<1x256xf32> to vector<4x256xf32>
    %346 = tpu.concatenate %336, %339, %342, %345 in 0 : vector<4x256xf32>, vector<4x256xf32>, vector<4x256xf32>, vector<4x256xf32> -> vector<16x256xf32>
    %347 = arith.mulf %333, %346 : vector<16x256xf32>
    %348 = arith.addf %331, %347 : vector<16x256xf32>
    %c0_110 = arith.constant 0 : index
    %c0_111 = arith.constant 0 : index
    %c8_112 = arith.constant 8 : index
    %c62 = arith.constant 62 : index
    %349 = vector.load %arg2[%c0_110, %c0_111, %c8_112, %c62] : memref<1x1x24x352xf32, #tpu.memory_space<vmem>>, vector<1x1x16x256xf32>
    %350 = vector.shape_cast %349 : vector<1x1x16x256xf32> to vector<16x256xf32>
    %351 = vector.extract_strided_slice %59 {offsets = [15, 0], sizes = [1, 256], strides = [1, 1]} : vector<32x256xf32> to vector<1x256xf32>
    %352 = vector.shape_cast %351 : vector<1x256xf32> to vector<1x256xf32>
    %353 = vector.broadcast %352 : vector<1x256xf32> to vector<4x256xf32>
    %354 = vector.extract_strided_slice %70 {offsets = [15, 0], sizes = [1, 256], strides = [1, 1]} : vector<32x256xf32> to vector<1x256xf32>
    %355 = vector.shape_cast %354 : vector<1x256xf32> to vector<1x256xf32>
    %356 = vector.broadcast %355 : vector<1x256xf32> to vector<4x256xf32>
    %357 = vector.extract_strided_slice %81 {offsets = [15, 0], sizes = [1, 256], strides = [1, 1]} : vector<32x256xf32> to vector<1x256xf32>
    %358 = vector.shape_cast %357 : vector<1x256xf32> to vector<1x256xf32>
    %359 = vector.broadcast %358 : vector<1x256xf32> to vector<4x256xf32>
    %360 = vector.extract_strided_slice %92 {offsets = [15, 0], sizes = [1, 256], strides = [1, 1]} : vector<32x256xf32> to vector<1x256xf32>
    %361 = vector.shape_cast %360 : vector<1x256xf32> to vector<1x256xf32>
    %362 = vector.broadcast %361 : vector<1x256xf32> to vector<4x256xf32>
    %363 = tpu.concatenate %353, %356, %359, %362 in 0 : vector<4x256xf32>, vector<4x256xf32>, vector<4x256xf32>, vector<4x256xf32> -> vector<16x256xf32>
    %364 = arith.mulf %350, %363 : vector<16x256xf32>
    %365 = arith.addf %348, %364 : vector<16x256xf32>
    %c0_113 = arith.constant 0 : index
    %c0_114 = arith.constant 0 : index
    %c8_115 = arith.constant 8 : index
    %c63_116 = arith.constant 63 : index
    %366 = vector.load %arg2[%c0_113, %c0_114, %c8_115, %c63_116] : memref<1x1x24x352xf32, #tpu.memory_space<vmem>>, vector<1x1x16x256xf32>
    %367 = vector.shape_cast %366 : vector<1x1x16x256xf32> to vector<16x256xf32>
    %368 = vector.extract_strided_slice %59 {offsets = [16, 0], sizes = [1, 256], strides = [1, 1]} : vector<32x256xf32> to vector<1x256xf32>
    %369 = vector.shape_cast %368 : vector<1x256xf32> to vector<1x256xf32>
    %370 = vector.broadcast %369 : vector<1x256xf32> to vector<4x256xf32>
    %371 = vector.extract_strided_slice %70 {offsets = [16, 0], sizes = [1, 256], strides = [1, 1]} : vector<32x256xf32> to vector<1x256xf32>
    %372 = vector.shape_cast %371 : vector<1x256xf32> to vector<1x256xf32>
    %373 = vector.broadcast %372 : vector<1x256xf32> to vector<4x256xf32>
    %374 = vector.extract_strided_slice %81 {offsets = [16, 0], sizes = [1, 256], strides = [1, 1]} : vector<32x256xf32> to vector<1x256xf32>
    %375 = vector.shape_cast %374 : vector<1x256xf32> to vector<1x256xf32>
    %376 = vector.broadcast %375 : vector<1x256xf32> to vector<4x256xf32>
    %377 = vector.extract_strided_slice %92 {offsets = [16, 0], sizes = [1, 256], strides = [1, 1]} : vector<32x256xf32> to vector<1x256xf32>
    %378 = vector.shape_cast %377 : vector<1x256xf32> to vector<1x256xf32>
    %379 = vector.broadcast %378 : vector<1x256xf32> to vector<4x256xf32>
    %380 = tpu.concatenate %370, %373, %376, %379 in 0 : vector<4x256xf32>, vector<4x256xf32>, vector<4x256xf32>, vector<4x256xf32> -> vector<16x256xf32>
    %381 = arith.mulf %367, %380 : vector<16x256xf32>
    %382 = arith.addf %365, %381 : vector<16x256xf32>
    %c0_117 = arith.constant 0 : index
    %c0_118 = arith.constant 0 : index
    %c8_119 = arith.constant 8 : index
    %c64_120 = arith.constant 64 : index
    %383 = vector.load %arg2[%c0_117, %c0_118, %c8_119, %c64_120] : memref<1x1x24x352xf32, #tpu.memory_space<vmem>>, vector<1x1x16x256xf32>
    %384 = vector.shape_cast %383 : vector<1x1x16x256xf32> to vector<16x256xf32>
    %385 = vector.extract_strided_slice %59 {offsets = [17, 0], sizes = [1, 256], strides = [1, 1]} : vector<32x256xf32> to vector<1x256xf32>
    %386 = vector.shape_cast %385 : vector<1x256xf32> to vector<1x256xf32>
    %387 = vector.broadcast %386 : vector<1x256xf32> to vector<4x256xf32>
    %388 = vector.extract_strided_slice %70 {offsets = [17, 0], sizes = [1, 256], strides = [1, 1]} : vector<32x256xf32> to vector<1x256xf32>
    %389 = vector.shape_cast %388 : vector<1x256xf32> to vector<1x256xf32>
    %390 = vector.broadcast %389 : vector<1x256xf32> to vector<4x256xf32>
    %391 = vector.extract_strided_slice %81 {offsets = [17, 0], sizes = [1, 256], strides = [1, 1]} : vector<32x256xf32> to vector<1x256xf32>
    %392 = vector.shape_cast %391 : vector<1x256xf32> to vector<1x256xf32>
    %393 = vector.broadcast %392 : vector<1x256xf32> to vector<4x256xf32>
    %394 = vector.extract_strided_slice %92 {offsets = [17, 0], sizes = [1, 256], strides = [1, 1]} : vector<32x256xf32> to vector<1x256xf32>
    %395 = vector.shape_cast %394 : vector<1x256xf32> to vector<1x256xf32>
    %396 = vector.broadcast %395 : vector<1x256xf32> to vector<4x256xf32>
    %397 = tpu.concatenate %387, %390, %393, %396 in 0 : vector<4x256xf32>, vector<4x256xf32>, vector<4x256xf32>, vector<4x256xf32> -> vector<16x256xf32>
    %398 = arith.mulf %384, %397 : vector<16x256xf32>
    %399 = arith.addf %382, %398 : vector<16x256xf32>
    %c0_121 = arith.constant 0 : index
    %c0_122 = arith.constant 0 : index
    %c8_123 = arith.constant 8 : index
    %c65_124 = arith.constant 65 : index
    %400 = vector.load %arg2[%c0_121, %c0_122, %c8_123, %c65_124] : memref<1x1x24x352xf32, #tpu.memory_space<vmem>>, vector<1x1x16x256xf32>
    %401 = vector.shape_cast %400 : vector<1x1x16x256xf32> to vector<16x256xf32>
    %402 = vector.extract_strided_slice %59 {offsets = [18, 0], sizes = [1, 256], strides = [1, 1]} : vector<32x256xf32> to vector<1x256xf32>
    %403 = vector.shape_cast %402 : vector<1x256xf32> to vector<1x256xf32>
    %404 = vector.broadcast %403 : vector<1x256xf32> to vector<4x256xf32>
    %405 = vector.extract_strided_slice %70 {offsets = [18, 0], sizes = [1, 256], strides = [1, 1]} : vector<32x256xf32> to vector<1x256xf32>
    %406 = vector.shape_cast %405 : vector<1x256xf32> to vector<1x256xf32>
    %407 = vector.broadcast %406 : vector<1x256xf32> to vector<4x256xf32>
    %408 = vector.extract_strided_slice %81 {offsets = [18, 0], sizes = [1, 256], strides = [1, 1]} : vector<32x256xf32> to vector<1x256xf32>
    %409 = vector.shape_cast %408 : vector<1x256xf32> to vector<1x256xf32>
    %410 = vector.broadcast %409 : vector<1x256xf32> to vector<4x256xf32>
    %411 = vector.extract_strided_slice %92 {offsets = [18, 0], sizes = [1, 256], strides = [1, 1]} : vector<32x256xf32> to vector<1x256xf32>
    %412 = vector.shape_cast %411 : vector<1x256xf32> to vector<1x256xf32>
    %413 = vector.broadcast %412 : vector<1x256xf32> to vector<4x256xf32>
    %414 = tpu.concatenate %404, %407, %410, %413 in 0 : vector<4x256xf32>, vector<4x256xf32>, vector<4x256xf32>, vector<4x256xf32> -> vector<16x256xf32>
    %415 = arith.mulf %401, %414 : vector<16x256xf32>
    %416 = arith.addf %399, %415 : vector<16x256xf32>
    %c0_125 = arith.constant 0 : index
    %c0_126 = arith.constant 0 : index
    %c8_127 = arith.constant 8 : index
    %c66 = arith.constant 66 : index
    %417 = vector.load %arg2[%c0_125, %c0_126, %c8_127, %c66] : memref<1x1x24x352xf32, #tpu.memory_space<vmem>>, vector<1x1x16x256xf32>
    %418 = vector.shape_cast %417 : vector<1x1x16x256xf32> to vector<16x256xf32>
    %419 = vector.extract_strided_slice %59 {offsets = [19, 0], sizes = [1, 256], strides = [1, 1]} : vector<32x256xf32> to vector<1x256xf32>
    %420 = vector.shape_cast %419 : vector<1x256xf32> to vector<1x256xf32>
    %421 = vector.broadcast %420 : vector<1x256xf32> to vector<4x256xf32>
    %422 = vector.extract_strided_slice %70 {offsets = [19, 0], sizes = [1, 256], strides = [1, 1]} : vector<32x256xf32> to vector<1x256xf32>
    %423 = vector.shape_cast %422 : vector<1x256xf32> to vector<1x256xf32>
    %424 = vector.broadcast %423 : vector<1x256xf32> to vector<4x256xf32>
    %425 = vector.extract_strided_slice %81 {offsets = [19, 0], sizes = [1, 256], strides = [1, 1]} : vector<32x256xf32> to vector<1x256xf32>
    %426 = vector.shape_cast %425 : vector<1x256xf32> to vector<1x256xf32>
    %427 = vector.broadcast %426 : vector<1x256xf32> to vector<4x256xf32>
    %428 = vector.extract_strided_slice %92 {offsets = [19, 0], sizes = [1, 256], strides = [1, 1]} : vector<32x256xf32> to vector<1x256xf32>
    %429 = vector.shape_cast %428 : vector<1x256xf32> to vector<1x256xf32>
    %430 = vector.broadcast %429 : vector<1x256xf32> to vector<4x256xf32>
    %431 = tpu.concatenate %421, %424, %427, %430 in 0 : vector<4x256xf32>, vector<4x256xf32>, vector<4x256xf32>, vector<4x256xf32> -> vector<16x256xf32>
    %432 = arith.mulf %418, %431 : vector<16x256xf32>
    %433 = arith.addf %416, %432 : vector<16x256xf32>
    %c0_128 = arith.constant 0 : index
    %c0_129 = arith.constant 0 : index
    %c8_130 = arith.constant 8 : index
    %c78 = arith.constant 78 : index
    %434 = vector.load %arg2[%c0_128, %c0_129, %c8_130, %c78] : memref<1x1x24x352xf32, #tpu.memory_space<vmem>>, vector<1x1x16x256xf32>
    %435 = vector.shape_cast %434 : vector<1x1x16x256xf32> to vector<16x256xf32>
    %436 = vector.extract_strided_slice %59 {offsets = [20, 0], sizes = [1, 256], strides = [1, 1]} : vector<32x256xf32> to vector<1x256xf32>
    %437 = vector.shape_cast %436 : vector<1x256xf32> to vector<1x256xf32>
    %438 = vector.broadcast %437 : vector<1x256xf32> to vector<4x256xf32>
    %439 = vector.extract_strided_slice %70 {offsets = [20, 0], sizes = [1, 256], strides = [1, 1]} : vector<32x256xf32> to vector<1x256xf32>
    %440 = vector.shape_cast %439 : vector<1x256xf32> to vector<1x256xf32>
    %441 = vector.broadcast %440 : vector<1x256xf32> to vector<4x256xf32>
    %442 = vector.extract_strided_slice %81 {offsets = [20, 0], sizes = [1, 256], strides = [1, 1]} : vector<32x256xf32> to vector<1x256xf32>
    %443 = vector.shape_cast %442 : vector<1x256xf32> to vector<1x256xf32>
    %444 = vector.broadcast %443 : vector<1x256xf32> to vector<4x256xf32>
    %445 = vector.extract_strided_slice %92 {offsets = [20, 0], sizes = [1, 256], strides = [1, 1]} : vector<32x256xf32> to vector<1x256xf32>
    %446 = vector.shape_cast %445 : vector<1x256xf32> to vector<1x256xf32>
    %447 = vector.broadcast %446 : vector<1x256xf32> to vector<4x256xf32>
    %448 = tpu.concatenate %438, %441, %444, %447 in 0 : vector<4x256xf32>, vector<4x256xf32>, vector<4x256xf32>, vector<4x256xf32> -> vector<16x256xf32>
    %449 = arith.mulf %435, %448 : vector<16x256xf32>
    %450 = arith.addf %433, %449 : vector<16x256xf32>
    %c0_131 = arith.constant 0 : index
    %c0_132 = arith.constant 0 : index
    %c8_133 = arith.constant 8 : index
    %c79 = arith.constant 79 : index
    %451 = vector.load %arg2[%c0_131, %c0_132, %c8_133, %c79] : memref<1x1x24x352xf32, #tpu.memory_space<vmem>>, vector<1x1x16x256xf32>
    %452 = vector.shape_cast %451 : vector<1x1x16x256xf32> to vector<16x256xf32>
    %453 = vector.extract_strided_slice %59 {offsets = [21, 0], sizes = [1, 256], strides = [1, 1]} : vector<32x256xf32> to vector<1x256xf32>
    %454 = vector.shape_cast %453 : vector<1x256xf32> to vector<1x256xf32>
    %455 = vector.broadcast %454 : vector<1x256xf32> to vector<4x256xf32>
    %456 = vector.extract_strided_slice %70 {offsets = [21, 0], sizes = [1, 256], strides = [1, 1]} : vector<32x256xf32> to vector<1x256xf32>
    %457 = vector.shape_cast %456 : vector<1x256xf32> to vector<1x256xf32>
    %458 = vector.broadcast %457 : vector<1x256xf32> to vector<4x256xf32>
    %459 = vector.extract_strided_slice %81 {offsets = [21, 0], sizes = [1, 256], strides = [1, 1]} : vector<32x256xf32> to vector<1x256xf32>
    %460 = vector.shape_cast %459 : vector<1x256xf32> to vector<1x256xf32>
    %461 = vector.broadcast %460 : vector<1x256xf32> to vector<4x256xf32>
    %462 = vector.extract_strided_slice %92 {offsets = [21, 0], sizes = [1, 256], strides = [1, 1]} : vector<32x256xf32> to vector<1x256xf32>
    %463 = vector.shape_cast %462 : vector<1x256xf32> to vector<1x256xf32>
    %464 = vector.broadcast %463 : vector<1x256xf32> to vector<4x256xf32>
    %465 = tpu.concatenate %455, %458, %461, %464 in 0 : vector<4x256xf32>, vector<4x256xf32>, vector<4x256xf32>, vector<4x256xf32> -> vector<16x256xf32>
    %466 = arith.mulf %452, %465 : vector<16x256xf32>
    %467 = arith.addf %450, %466 : vector<16x256xf32>
    %c0_134 = arith.constant 0 : index
    %c0_135 = arith.constant 0 : index
    %c8_136 = arith.constant 8 : index
    %c80 = arith.constant 80 : index
    %468 = vector.load %arg2[%c0_134, %c0_135, %c8_136, %c80] : memref<1x1x24x352xf32, #tpu.memory_space<vmem>>, vector<1x1x16x256xf32>
    %469 = vector.shape_cast %468 : vector<1x1x16x256xf32> to vector<16x256xf32>
    %470 = vector.extract_strided_slice %59 {offsets = [22, 0], sizes = [1, 256], strides = [1, 1]} : vector<32x256xf32> to vector<1x256xf32>
    %471 = vector.shape_cast %470 : vector<1x256xf32> to vector<1x256xf32>
    %472 = vector.broadcast %471 : vector<1x256xf32> to vector<4x256xf32>
    %473 = vector.extract_strided_slice %70 {offsets = [22, 0], sizes = [1, 256], strides = [1, 1]} : vector<32x256xf32> to vector<1x256xf32>
    %474 = vector.shape_cast %473 : vector<1x256xf32> to vector<1x256xf32>
    %475 = vector.broadcast %474 : vector<1x256xf32> to vector<4x256xf32>
    %476 = vector.extract_strided_slice %81 {offsets = [22, 0], sizes = [1, 256], strides = [1, 1]} : vector<32x256xf32> to vector<1x256xf32>
    %477 = vector.shape_cast %476 : vector<1x256xf32> to vector<1x256xf32>
    %478 = vector.broadcast %477 : vector<1x256xf32> to vector<4x256xf32>
    %479 = vector.extract_strided_slice %92 {offsets = [22, 0], sizes = [1, 256], strides = [1, 1]} : vector<32x256xf32> to vector<1x256xf32>
    %480 = vector.shape_cast %479 : vector<1x256xf32> to vector<1x256xf32>
    %481 = vector.broadcast %480 : vector<1x256xf32> to vector<4x256xf32>
    %482 = tpu.concatenate %472, %475, %478, %481 in 0 : vector<4x256xf32>, vector<4x256xf32>, vector<4x256xf32>, vector<4x256xf32> -> vector<16x256xf32>
    %483 = arith.mulf %469, %482 : vector<16x256xf32>
    %484 = arith.addf %467, %483 : vector<16x256xf32>
    %c0_137 = arith.constant 0 : index
    %c0_138 = arith.constant 0 : index
    %c8_139 = arith.constant 8 : index
    %c81 = arith.constant 81 : index
    %485 = vector.load %arg2[%c0_137, %c0_138, %c8_139, %c81] : memref<1x1x24x352xf32, #tpu.memory_space<vmem>>, vector<1x1x16x256xf32>
    %486 = vector.shape_cast %485 : vector<1x1x16x256xf32> to vector<16x256xf32>
    %487 = vector.extract_strided_slice %59 {offsets = [23, 0], sizes = [1, 256], strides = [1, 1]} : vector<32x256xf32> to vector<1x256xf32>
    %488 = vector.shape_cast %487 : vector<1x256xf32> to vector<1x256xf32>
    %489 = vector.broadcast %488 : vector<1x256xf32> to vector<4x256xf32>
    %490 = vector.extract_strided_slice %70 {offsets = [23, 0], sizes = [1, 256], strides = [1, 1]} : vector<32x256xf32> to vector<1x256xf32>
    %491 = vector.shape_cast %490 : vector<1x256xf32> to vector<1x256xf32>
    %492 = vector.broadcast %491 : vector<1x256xf32> to vector<4x256xf32>
    %493 = vector.extract_strided_slice %81 {offsets = [23, 0], sizes = [1, 256], strides = [1, 1]} : vector<32x256xf32> to vector<1x256xf32>
    %494 = vector.shape_cast %493 : vector<1x256xf32> to vector<1x256xf32>
    %495 = vector.broadcast %494 : vector<1x256xf32> to vector<4x256xf32>
    %496 = vector.extract_strided_slice %92 {offsets = [23, 0], sizes = [1, 256], strides = [1, 1]} : vector<32x256xf32> to vector<1x256xf32>
    %497 = vector.shape_cast %496 : vector<1x256xf32> to vector<1x256xf32>
    %498 = vector.broadcast %497 : vector<1x256xf32> to vector<4x256xf32>
    %499 = tpu.concatenate %489, %492, %495, %498 in 0 : vector<4x256xf32>, vector<4x256xf32>, vector<4x256xf32>, vector<4x256xf32> -> vector<16x256xf32>
    %500 = arith.mulf %486, %499 : vector<16x256xf32>
    %501 = arith.addf %484, %500 : vector<16x256xf32>
    %c0_140 = arith.constant 0 : index
    %c0_141 = arith.constant 0 : index
    %c8_142 = arith.constant 8 : index
    %c82 = arith.constant 82 : index
    %502 = vector.load %arg2[%c0_140, %c0_141, %c8_142, %c82] : memref<1x1x24x352xf32, #tpu.memory_space<vmem>>, vector<1x1x16x256xf32>
    %503 = vector.shape_cast %502 : vector<1x1x16x256xf32> to vector<16x256xf32>
    %504 = vector.extract_strided_slice %59 {offsets = [24, 0], sizes = [1, 256], strides = [1, 1]} : vector<32x256xf32> to vector<1x256xf32>
    %505 = vector.shape_cast %504 : vector<1x256xf32> to vector<1x256xf32>
    %506 = vector.broadcast %505 : vector<1x256xf32> to vector<4x256xf32>
    %507 = vector.extract_strided_slice %70 {offsets = [24, 0], sizes = [1, 256], strides = [1, 1]} : vector<32x256xf32> to vector<1x256xf32>
    %508 = vector.shape_cast %507 : vector<1x256xf32> to vector<1x256xf32>
    %509 = vector.broadcast %508 : vector<1x256xf32> to vector<4x256xf32>
    %510 = vector.extract_strided_slice %81 {offsets = [24, 0], sizes = [1, 256], strides = [1, 1]} : vector<32x256xf32> to vector<1x256xf32>
    %511 = vector.shape_cast %510 : vector<1x256xf32> to vector<1x256xf32>
    %512 = vector.broadcast %511 : vector<1x256xf32> to vector<4x256xf32>
    %513 = vector.extract_strided_slice %92 {offsets = [24, 0], sizes = [1, 256], strides = [1, 1]} : vector<32x256xf32> to vector<1x256xf32>
    %514 = vector.shape_cast %513 : vector<1x256xf32> to vector<1x256xf32>
    %515 = vector.broadcast %514 : vector<1x256xf32> to vector<4x256xf32>
    %516 = tpu.concatenate %506, %509, %512, %515 in 0 : vector<4x256xf32>, vector<4x256xf32>, vector<4x256xf32>, vector<4x256xf32> -> vector<16x256xf32>
    %517 = arith.mulf %503, %516 : vector<16x256xf32>
    %518 = arith.addf %501, %517 : vector<16x256xf32>
    %519 = vector.shape_cast %57 : vector<1x256xf32> to vector<1x256xf32>
    %520 = vector.broadcast %519 : vector<1x256xf32> to vector<4x256xf32>
    %521 = vector.shape_cast %68 : vector<1x256xf32> to vector<1x256xf32>
    %522 = vector.broadcast %521 : vector<1x256xf32> to vector<4x256xf32>
    %523 = vector.shape_cast %79 : vector<1x256xf32> to vector<1x256xf32>
    %524 = vector.broadcast %523 : vector<1x256xf32> to vector<4x256xf32>
    %525 = vector.shape_cast %90 : vector<1x256xf32> to vector<1x256xf32>
    %526 = vector.broadcast %525 : vector<1x256xf32> to vector<4x256xf32>
    %527 = tpu.concatenate %520, %522, %524, %526 in 0 : vector<4x256xf32>, vector<4x256xf32>, vector<4x256xf32>, vector<4x256xf32> -> vector<16x256xf32>
    %528 = arith.mulf %518, %527 : vector<16x256xf32>
    %c0_143 = arith.constant 0 : index
    %c0_144 = arith.constant 0 : index
    %c0_145 = arith.constant 0 : index
    %529 = vector.load %arg5[%c0_143, %c0_144, %c0_145] : memref<1x16x256xf32, #tpu.memory_space<vmem>>, vector<1x16x256xf32>
    %530 = vector.shape_cast %529 : vector<1x16x256xf32> to vector<16x256xf32>
    %531 = vector.shape_cast %528 : vector<16x256xf32> to vector<1x16x256xf32>
    tpu.vector_store %arg5[%c0_143, %c0_144, %c0_145], %531 {strides = array<i32>} : memref<1x16x256xf32, #tpu.memory_space<vmem>>, vector<1x16x256xf32>,
    return
  }
  func.func @transform_0(%arg0: i32, %arg1: i32) -> (i32, i32, i32, i32) {
    %c0_i32 = arith.constant 0 : i32
    %c0_i32_0 = arith.constant 0 : i32
    %c0_i32_1 = arith.constant 0 : i32
    return %arg0, %arg1, %c0_i32, %c0_i32_0 : i32, i32, i32, i32
  }
  func.func @transform_1(%arg0: i32, %arg1: i32) -> (i32, i32) {
    %c0_i32 = arith.constant 0 : i32
    %c0_i32_0 = arith.constant 0 : i32
    %c0_i32_1 = arith.constant 0 : i32
    return %c0_i32, %c0_i32_0 : i32, i32
  }
  func.func @transform_2(%arg0: i32, %arg1: i32) -> (i32, i32) {
    %c0_i32 = arith.constant 0 : i32
    %c0_i32_0 = arith.constant 0 : i32
    %c0_i32_1 = arith.constant 0 : i32
    return %c0_i32, %c0_i32_0 : i32, i32
  }
  func.func @transform_3(%arg0: i32, %arg1: i32) -> (i32, i32, i32) {
    %c0_i32 = arith.constant 0 : i32
    %c0_i32_0 = arith.constant 0 : i32
    return %arg0, %c0_i32, %arg1 : i32, i32, i32
  }
}

</mosaic_0001>

<llo_original>
// kernel: _lambda_.1
$region0: #{_lambda_.1}
  #allocation0 [shape = 'u32[]', space=smem, size = 0x4, offset = 0x4, fixed_abs, tag = 'smem constant byte address 0x4 - core index']
  #allocation1 [shape = 'u32[144,128]{1,0:T(1,128)}', space=vmem, size = 0x12000, scoped, tag = 'internal scratch']
  %s0 = inlined_call_operand.vmem [shape: f32[2,1,24,352], index: 0, kind: input, shape index: {}]
  %s1 = inlined_call_operand.vmem [shape: bf16[128,72], index: 1, kind: input, shape index: {}]
  %s2 = inlined_call_operand.vmem [shape: f32[32,256], index: 2, kind: input, shape index: {}]
  %s3 = inlined_call_operand.vmem [shape: f32[2,16,256], index: 3, kind: output, shape index: {}]
  %s4 = sld [smem:[#allocation0]]
  $region45: #{_lambda_.1} parent=0
    _
  %s6 = ssub.s32 1, %s4
  %s7 = scalar_select 0, %s6, %s4
  loop: start=0, step=1, limit=4
  $region2: #{_lambda_.1} parent=0 // loop_pre_header
    _
  $region3: #{_lambda_.1} parent=0 // loop_header
    %s9 = sphi 0, %s13
    %p10 = scmp.ge.s32.totalorder %s9, 4
    %s16 = sphi 0, %s28
    %s17 = sphi 0, %s24
    %s18 = sphi 0, %s16
    %s19 = sphi 0, %s17
    %s20 = sphi 0, %s18
    %s21 = sphi 0, %s19
    %s33 = sphi 0, %s35
    %s36 = sphi 0, %s33
    %s37 = sphi 0, %s36
    %s53 = sphi 0, %s37
    %s57 = sphi 0, %s57
    %s59 = sphi 0, %s57
    %s60 = sphi 0, %s59
    %s74 = sphi 0, %s60
    %s78 = sphi 0, %s78
    %s80 = sphi 0, %s78
    %s81 = sphi 0, %s80
    %s95 = sphi 0, %s81
    %s103 = sphi 0, %s105
    %s106 = sphi 0, %s103
    %s107 = sphi 0, %s106
    %s123 = sphi 0, %s107
  $region4: #{_lambda_.1} parent=0 // loop_header_branch
    %12 = sbr.rel (%p10) target = $region8
  $region5: #{_lambda_.1} parent=0 // loop_body
    %s14 = ssub.s32 %s9, 1
    %s15 = ssub.s32 %s9, 2
    %s22 = sadd.s32 1, %s17
    %p23 = scmp.ge.s32.totalorder %s22, 1
    %s24 = scalar_select %p23, 0, %s22
    %s25 = sadd.s32 1, %s16
    %s26 = scalar_select %p23, %s25, %s16
    %p27 = scmp.ge.s32.totalorder %s26, 2
    %s28 = scalar_select %p27, 0, %s26
    %s29 = ssub.s32 %s16, %s28
    %s30 = ssub.s32 %s17, %s24
    %s31 = sor.u32 %s29, %s30
    %p32 = scmp.eq.s32.totalorder %s31, 0
    %s34 = sadd.s32 %s33, 1
    %s35 = scalar_select %p32, %s33, %s34
    %p38 = pneg %p32
    %p39 = scmp.eq.s32.totalorder %s9, 1
    %p40 = por %p38, %p39
    %p41 = scmp.ne.s32.totalorder %s33, %s36
    %p42 = scmp.eq.s32.totalorder %s9, 0
    %p43 = por %p41, %p42
    %p44 = scmp.ne.s32.totalorder %s33, %s36
    %p45 = scmp.eq.s32.totalorder %s14, 1
    %p46 = por %p44, %p45
    %p47 = scmp.ne.s32.totalorder %s36, %s37
    %p48 = scmp.eq.s32.totalorder %s14, 0
    %p49 = por %p47, %p48
    %p50 = scmp.ne.s32.totalorder %s36, %s37
    %p51 = scmp.eq.s32.totalorder %s15, 1
    %p52 = por %p50, %p51
    %p54 = scmp.ne.s32.totalorder %s37, %s53
    %p55 = scmp.eq.s32.totalorder %s15, 0
    %p56 = por %p54, %p55
    %s58 = sadd.s32 %s57, 1
    %p61 = scmp.eq.s32.totalorder %s9, 1
    %p62 = scmp.ne.s32.totalorder %s57, %s59
    %p63 = scmp.eq.s32.totalorder %s9, 0
    %p64 = por %p62, %p63
    %p65 = scmp.ne.s32.totalorder %s57, %s59
    %p66 = scmp.eq.s32.totalorder %s14, 1
    %p67 = por %p65, %p66
    %p68 = scmp.ne.s32.totalorder %s59, %s60
    %p69 = scmp.eq.s32.totalorder %s14, 0
    %p70 = por %p68, %p69
    %p71 = scmp.ne.s32.totalorder %s59, %s60
    %p72 = scmp.eq.s32.totalorder %s15, 1
    %p73 = por %p71, %p72
    %p75 = scmp.ne.s32.totalorder %s60, %s74
    %p76 = scmp.eq.s32.totalorder %s15, 0
    %p77 = por %p75, %p76
    %s79 = sadd.s32 %s78, 1
    %p82 = scmp.eq.s32.totalorder %s9, 1
    %p83 = scmp.ne.s32.totalorder %s78, %s80
    %p84 = scmp.eq.s32.totalorder %s9, 0
    %p85 = por %p83, %p84
    %p86 = scmp.ne.s32.totalorder %s78, %s80
    %p87 = scmp.eq.s32.totalorder %s14, 1
    %p88 = por %p86, %p87
    %p89 = scmp.ne.s32.totalorder %s80, %s81
    %p90 = scmp.eq.s32.totalorder %s14, 0
    %p91 = por %p89, %p90
    %p92 = scmp.ne.s32.totalorder %s80, %s81
    %p93 = scmp.eq.s32.totalorder %s15, 1
    %p94 = por %p92, %p93
    %p96 = scmp.ne.s32.totalorder %s81, %s95
    %p97 = scmp.eq.s32.totalorder %s15, 0
    %p98 = por %p96, %p97
    %s99 = ssub.s32 %s16, %s28
    %s100 = ssub.s32 %s17, %s24
    %s101 = sor.u32 %s99, %s100
    %p102 = scmp.eq.s32.totalorder %s101, 0
    %s104 = sadd.s32 %s103, 1
    %s105 = scalar_select %p102, %s103, %s104
    %p108 = pneg %p102
    %p109 = scmp.eq.s32.totalorder %s9, 1
    %p110 = por %p108, %p109
    %p111 = scmp.ne.s32.totalorder %s103, %s106
    %p112 = scmp.eq.s32.totalorder %s9, 0
    %p113 = por %p111, %p112
    %p114 = scmp.ne.s32.totalorder %s103, %s106
    %p115 = scmp.eq.s32.totalorder %s14, 1
    %p116 = por %p114, %p115
    %p117 = scmp.ne.s32.totalorder %s106, %s107
    %p118 = scmp.eq.s32.totalorder %s14, 0
    %p119 = por %p117, %p118
    %p120 = scmp.ne.s32.totalorder %s106, %s107
    %p121 = scmp.eq.s32.totalorder %s15, 1
    %p122 = por %p120, %p121
    %p124 = scmp.ne.s32.totalorder %s107, %s123
    %p125 = scmp.eq.s32.totalorder %s15, 0
    %p126 = por %p124, %p125
    %p127 = scmp.le.s32.totalorder 1, %s9
    %p128 = scmp.lt.s32.totalorder %s9, 3
    %p129 = pnand %p127, %p128
    %p130 = pneg %p129
    // Predicated region
    $region9: #{_lambda_.1} parent=5 // pred_check
      _
    $region10: #{_lambda_.1} parent=5 // pred_check_branch
      %132 = sbr.rel (%p129) target = $region12
    $region11: #{_lambda_.1} parent=5 // pred_region
      %s133 = ssub.s32 %s9, 1
      // Predicated region
      $region13: #{_lambda_.1} parent=11 // pred_check
        %p134 = pneg %p70
      $region14: #{_lambda_.1} parent=11 // pred_check_branch
        %136 = sbr.rel (%p134) target = $region16
      $region15: #{_lambda_.1} parent=11 // pred_region
        _
      $region16: #{_lambda_.1} parent=11 // pred_fallthru
        _
      // Predicated region
      $region17: #{_lambda_.1} parent=11 // pred_check
        %p137 = pneg %p91
      $region18: #{_lambda_.1} parent=11 // pred_check_branch
        %139 = sbr.rel (%p137) target = $region20
      $region19: #{_lambda_.1} parent=11 // pred_region
        _
      $region20: #{_lambda_.1} parent=11 // pred_fallthru
        _
    $region12: #{_lambda_.1} parent=5 // pred_fallthru
      _
    %p140 = scmp.lt.s32.totalorder %s9, 2
    // Predicated region
    $region21: #{_lambda_.1} parent=5 // pred_check
      %p141 = pneg %p140
    $region22: #{_lambda_.1} parent=5 // pred_check_branch
      %143 = sbr.rel (%p141) target = $region24
    $region23: #{_lambda_.1} parent=5 // pred_region
      // Predicated region
      $region25: #{_lambda_.1} parent=23 // pred_check
        %p144 = pneg %p43
      $region26: #{_lambda_.1} parent=23 // pred_check_branch
        %146 = sbr.rel (%p144) target = $region28
      $region27: #{_lambda_.1} parent=23 // pred_region
        %p147 = scmp.lt.s32.totalorder %s16, 1
        %s148 = scalar_select %p147, %s16, 1
        %p149 = scmp.lt.s32.totalorder %s17, 0
        %s150 = scalar_select %p149, %s17, 0
        %s151 = smul.addr %s150, 9
        %s152 = smul.addr %s148, 9
        %s153 = sadd.s32 %s151, %s152
        %s154 = smul.addr %s153, 8
        %s155 = scalar_lea.vmem %s0, %s154
      $region28: #{_lambda_.1} parent=23 // pred_fallthru
        _
    $region24: #{_lambda_.1} parent=5 // pred_fallthru
      _
    %p156 = scmp.le.s32.totalorder 1, %s9
    %p157 = scmp.lt.s32.totalorder %s9, 3
    %p158 = pnand %p156, %p157
    %p159 = pneg %p158
    // Predicated region
    $region29: #{_lambda_.1} parent=5 // pred_check
      _
    $region30: #{_lambda_.1} parent=5 // pred_check_branch
      %161 = sbr.rel (%p158) target = $region32
    $region31: #{_lambda_.1} parent=5 // pred_region
      %s162 = ssub.s32 %s9, 1
      %p163 = scmp.lt.s32.totalorder %s18, 1
      %s164 = scalar_select %p163, %s18, 1
      %p165 = scmp.lt.s32.totalorder %s19, 0
      %s166 = scalar_select %p165, %s19, 0
      %s167 = smul.addr %s166, 9
      %s168 = smul.addr %s164, 9
      %s169 = sadd.s32 %s167, %s168
      %s170 = smul.addr %s169, 8
      %s171 = scalar_lea.vmem %s0, %s170
      %p172 = pneg %p49
      %p173 = pneg %p46
      %p174 = pneg %p70
      %p175 = pneg %p67
      %p176 = pneg %p91
      %p177 = pneg %p88
      %p178 = pneg %p119
      %p179 = pneg %p116
      %s180 = smul.u32 2, %s19
      %p181 = scmp.lt.s32.totalorder %s18, 1
      %s182 = scalar_select %p181, %s18, 1
      %p183 = scmp.lt.s32.totalorder %s180, 1
      %s184 = scalar_select %p183, %s180, 1
      %s185 = smul.addr %s182, 4
      %s186 = sadd.s32 %s184, %s185
      %s187 = smul.addr %s186, 8
      %s188 = scalar_lea.vmem %s3, %s187
      %p189 = scmp.lt.s32.totalorder %s18, 1
      %s190 = scalar_select %p189, %s18, 1
      %p191 = scmp.lt.s32.totalorder %s19, 0
      %s192 = scalar_select %p191, %s19, 0
      %s193 = smul.addr %s192, 9
      %s194 = smul.addr %s190, 9
      %s195 = sadd.s32 %s193, %s194
      %s196 = smul.addr %s195, 8
      %s197 = scalar_lea.vmem %s0, %s196
      %s198 = smul.u32 2, %s19
      %p199 = scmp.lt.s32.totalorder %s18, 1
      %s200 = scalar_select %p199, %s18, 1
      %p201 = scmp.lt.s32.totalorder %s198, 1
      %s202 = scalar_select %p201, %s198, 1
      %s203 = smul.addr %s200, 4
      %s204 = sadd.s32 %s202, %s203
      %s205 = smul.addr %s204, 8
      %s206 = scalar_lea.vmem %s3, %s205
      %s207 = smul.u32 2, %s19
      %v209 = vld [vmem:[%s197] sm:$0xff]
      %v210 = vld [vmem:[%s197 + $0x8] sm:$0xff]
      %v211 = vld [vmem:[%s197 + $0x10] sm:$0xff]
      %s212 = scalar_lea.vmem %s2, 1
      %v213 = vld [vmem:[%s212] ss:$8 sm:$0x3]
      %v215 = vlaneseq
      %v216 = vshrl.u32 %v215, 7
      %v217 = vsub.s32 0, %v216
      %v218 = vrot.slane %v213, %v217
      %v219 = vlaneseq
      %v220 = vshrl.u32 %v219, 7
      %v221 = vsub.s32 1, %v220
      %v222 = vrot.slane %v213, %v221
      %223 = vrot.lane.b32.xlu0 %v218, 31
      %v224 = vpop.permute.xlu0 %223
      %225 = vrot.lane.b32.xlu0 %v222, 31
      %v226 = vpop.permute.xlu0 %225
      %vm227 = vcmask 252928
      %v228 = vsel %vm227, %v224, %v226
      %v232 = vmul.f32 %v209, %v224
      %v233 = vmul.f32 %v210, %v228
      %v234 = vmul.f32 %v211, %v226
      %s235 = scalar_lea.vmem %s2, 2
      %v236 = vld [vmem:[%s235] ss:$8 sm:$0x3]
      %v238 = vlaneseq
      %v239 = vshrl.u32 %v238, 7
      %v240 = vsub.s32 0, %v239
      %v241 = vrot.slane %v236, %v240
      %v242 = vlaneseq
      %v243 = vshrl.u32 %v242, 7
      %v244 = vsub.s32 1, %v243
      %v245 = vrot.slane %v236, %v244
      %246 = vrot.lane.b32.xlu0 %v241, 32
      %v247 = vpop.permute.xlu0 %246
      %248 = vrot.lane.b32.xlu0 %v245, 32
      %v249 = vpop.permute.xlu0 %248
      %vm250 = vcmask 261120
      %v251 = vsel %vm250, %v247, %v249
      %v255 = vmul.f32 %v209, %v247
      %v256 = vmul.f32 %v210, %v251
      %v257 = vmul.f32 %v211, %v249
      %s258 = scalar_lea.vmem %s2, 3
      %v259 = vld [vmem:[%s258] ss:$8 sm:$0x3]
      %v261 = vlaneseq
      %v262 = vshrl.u32 %v261, 7
      %v263 = vsub.s32 0, %v262
      %v264 = vrot.slane %v259, %v263
      %v265 = vlaneseq
      %v266 = vshrl.u32 %v265, 7
      %v267 = vsub.s32 1, %v266
      %v268 = vrot.slane %v259, %v267
      %269 = vrot.lane.b32.xlu0 %v264, 33
      %v270 = vpop.permute.xlu0 %269
      %271 = vrot.lane.b32.xlu0 %v268, 33
      %v272 = vpop.permute.xlu0 %271
      %vm273 = vcmask 269312
      %v274 = vsel %vm273, %v270, %v272
      %v278 = vmul.f32 %v209, %v270
      %v279 = vmul.f32 %v210, %v274
      %v280 = vmul.f32 %v211, %v272
      %281 = vrot.lane.b32.xlu0 %v218, 47
      %v282 = vpop.permute.xlu0 %281
      %283 = vrot.lane.b32.xlu0 %v222, 47
      %v284 = vpop.permute.xlu0 %283
      %vm285 = vcmask 384000
      %v286 = vsel %vm285, %v282, %v284
      %v290 = vmul.f32 %v209, %v282
      %v291 = vmul.f32 %v210, %v286
      %v292 = vmul.f32 %v211, %v284
      %293 = vrot.lane.b32.xlu0 %v241, 48
      %v294 = vpop.permute.xlu0 %293
      %295 = vrot.lane.b32.xlu0 %v245, 48
      %v296 = vpop.permute.xlu0 %295
      %vm297 = vcmask 392192
      %v298 = vsel %vm297, %v294, %v296
      %v302 = vmul.f32 %v209, %v294
      %v303 = vmul.f32 %v210, %v298
      %v304 = vmul.f32 %v211, %v296
      %305 = vrot.lane.b32.xlu0 %v264, 49
      %v306 = vpop.permute.xlu0 %305
      %307 = vrot.lane.b32.xlu0 %v268, 49
      %v308 = vpop.permute.xlu0 %307
      %vm309 = vcmask 400384
      %v310 = vsel %vm309, %v306, %v308
      %v314 = vmul.f32 %v209, %v306
      %v315 = vmul.f32 %v210, %v310
      %v316 = vmul.f32 %v211, %v308
      %317 = vrot.lane.b32.xlu0 %v218, 63
      %v318 = vpop.permute.xlu0 %317
      %319 = vrot.lane.b32.xlu0 %v222, 63
      %v320 = vpop.permute.xlu0 %319
      %vm321 = vcmask 515072
      %v322 = vsel %vm321, %v318, %v320
      %v326 = vmul.f32 %v209, %v318
      %v327 = vmul.f32 %v210, %v322
      %v328 = vmul.f32 %v211, %v320
      %329 = vrot.lane.b32.xlu0 %v241, 64
      %v330 = vpop.permute.xlu0 %329
      %331 = vrot.lane.b32.xlu0 %v245, 64
      %v332 = vpop.permute.xlu0 %331
      %vm333 = vcmask 523264
      %v334 = vsel %vm333, %v330, %v332
      %v338 = vmul.f32 %v209, %v330
      %v339 = vmul.f32 %v210, %v334
      %v340 = vmul.f32 %v211, %v332
      %341 = vrot.lane.b32.xlu0 %v264, 65
      %v342 = vpop.permute.xlu0 %341
      %343 = vrot.lane.b32.xlu0 %v268, 65
      %v344 = vpop.permute.xlu0 %343
      %vm345 = vcmask 531456
      %v346 = vsel %vm345, %v342, %v344
      %v350 = vmul.f32 %v209, %v342
      %v351 = vmul.f32 %v210, %v346
      %v352 = vmul.f32 %v211, %v344
      %356 = vrot.lane.b32.xlu0 %v255, 127
      %v357 = vpop.permute.xlu0 %356
      %358 = vrot.lane.b32.xlu0 %v256, 127
      %v359 = vpop.permute.xlu0 %358
      %360 = vrot.lane.b32.xlu0 %v257, 127
      %v361 = vpop.permute.xlu0 %360
      %vm362 = vcmask 1039360
      %v363 = vsel %vm362, %v357, %v359
      %v364 = vsel %vm362, %v359, %v361
      %371 = vrot.lane.b32.xlu0 %v278, 126
      %v372 = vpop.permute.xlu0 %371
      %373 = vrot.lane.b32.xlu0 %v279, 126
      %v374 = vpop.permute.xlu0 %373
      %375 = vrot.lane.b32.xlu0 %v280, 126
      %v376 = vpop.permute.xlu0 %375
      %vm377 = vcmask 1031168
      %v378 = vsel %vm377, %v372, %v374
      %v379 = vsel %vm377, %v374, %v376
      %386 = vrot.lane.b32.xlu0 %v290, 112
      %v387 = vpop.permute.xlu0 %386
      %388 = vrot.lane.b32.xlu0 %v291, 112
      %v389 = vpop.permute.xlu0 %388
      %390 = vrot.lane.b32.xlu0 %v292, 112
      %v391 = vpop.permute.xlu0 %390
      %vm392 = vcmask 916480
      %v393 = vsel %vm392, %v387, %v389
      %v394 = vsel %vm392, %v389, %v391
      %401 = vrot.lane.b32.xlu0 %v302, 111
      %v402 = vpop.permute.xlu0 %401
      %403 = vrot.lane.b32.xlu0 %v303, 111
      %v404 = vpop.permute.xlu0 %403
      %405 = vrot.lane.b32.xlu0 %v304, 111
      %v406 = vpop.permute.xlu0 %405
      %vm407 = vcmask 908288
      %v408 = vsel %vm407, %v402, %v404
      %v409 = vsel %vm407, %v404, %v406
      %416 = vrot.lane.b32.xlu0 %v314, 110
      %v417 = vpop.permute.xlu0 %416
      %418 = vrot.lane.b32.xlu0 %v315, 110
      %v419 = vpop.permute.xlu0 %418
      %420 = vrot.lane.b32.xlu0 %v316, 110
      %v421 = vpop.permute.xlu0 %420
      %vm422 = vcmask 900096
      %v423 = vsel %vm422, %v417, %v419
      %v424 = vsel %vm422, %v419, %v421
      %431 = vrot.lane.b32.xlu0 %v326, 96
      %v432 = vpop.permute.xlu0 %431
      %433 = vrot.lane.b32.xlu0 %v327, 96
      %v434 = vpop.permute.xlu0 %433
      %435 = vrot.lane.b32.xlu0 %v328, 96
      %v436 = vpop.permute.xlu0 %435
      %vm437 = vcmask 785408
      %v438 = vsel %vm437, %v432, %v434
      %v439 = vsel %vm437, %v434, %v436
      %446 = vrot.lane.b32.xlu0 %v338, 95
      %v447 = vpop.permute.xlu0 %446
      %448 = vrot.lane.b32.xlu0 %v339, 95
      %v449 = vpop.permute.xlu0 %448
      %450 = vrot.lane.b32.xlu0 %v340, 95
      %v451 = vpop.permute.xlu0 %450
      %vm452 = vcmask 777216
      %v453 = vsel %vm452, %v447, %v449
      %v454 = vsel %vm452, %v449, %v451
      %461 = vrot.lane.b32.xlu0 %v350, 94
      %v462 = vpop.permute.xlu0 %461
      %463 = vrot.lane.b32.xlu0 %v351, 94
      %v464 = vpop.permute.xlu0 %463
      %465 = vrot.lane.b32.xlu0 %v352, 94
      %v466 = vpop.permute.xlu0 %465
      %vm467 = vcmask 769024
      %v468 = vsel %vm467, %v462, %v464
      %v469 = vsel %vm467, %v464, %v466
      %v473 = vpack.c.bf16 %v363, %v232
      %v474 = vpack.c.bf16 %v364, %v233
      %v475 = vpack.c.bf16 %v361, %v234
      %v476 = vpack.c.bf16 %v393, %v378
      %v477 = vpack.c.bf16 %v394, %v379
      %v478 = vpack.c.bf16 %v391, %v376
      %v479 = vpack.c.bf16 %v423, %v408
      %v480 = vpack.c.bf16 %v424, %v409
      %v481 = vpack.c.bf16 %v421, %v406
      %v482 = vpack.c.bf16 %v453, %v438
      %v483 = vpack.c.bf16 %v454, %v439
      %v484 = vpack.c.bf16 %v451, %v436
      %v485 = vpack.c.bf16 %v468, %v468
      %v486 = vpack.c.bf16 %v469, %v469
      %v487 = vpack.c.bf16 %v466, %v466
      %v488 = vld [vmem:[%s1] sm:$0xf]
      %v489 = vld [vmem:[%s1 + $0x4] sm:$0xf]
      %v490 = vld [vmem:[%s1 + $0x8] sm:$0xf]
      %v491 = vld [vmem:[%s1 + $0xc] sm:$0xf]
      %v492 = vld [vmem:[%s1 + $0x10] sm:$0xf]
      %v493 = vld [vmem:[%s1 + $0x14] sm:$0xf]
      %v494 = vld [vmem:[%s1 + $0x18] sm:$0xf]
      %v495 = vld [vmem:[%s1 + $0x1c] sm:$0xf]
      %v496 = vld [vmem:[%s1 + $0x20] sm:$0xf]
      %v497 = vld [vmem:[%s1 + $0x24] sm:$0xf]
      %v498 = vld [vmem:[%s1 + $0x28] sm:$0xf]
      %v499 = vld [vmem:[%s1 + $0x2c] sm:$0xf]
      %v500 = vld [vmem:[%s1 + $0x30] sm:$0xf]
      %v501 = vld [vmem:[%s1 + $0x34] sm:$0xf]
      %v502 = vld [vmem:[%s1 + $0x38] sm:$0xf]
      %v503 = vld [vmem:[%s1 + $0x3c] sm:$0xf]
      %v520 = vunpack.c.l.b16 %v488
      %v521 = vunpack.c.l.b16 %v489
      %v522 = vunpack.c.l.b16 %v490
      %v523 = vunpack.c.l.b16 %v491
      %v524 = vunpack.c.l.b16 %v492
      %v525 = vunpack.c.l.b16 %v493
      %v526 = vunpack.c.l.b16 %v494
      %v527 = vunpack.c.l.b16 %v495
      %v528 = vunpack.c.l.b16 %v496
      %v529 = vunpack.c.l.b16 %v497
      %v530 = vunpack.c.l.b16 %v498
      %v531 = vunpack.c.l.b16 %v499
      %v532 = vunpack.c.l.b16 %v500
      %v533 = vunpack.c.l.b16 %v501
      %v534 = vunpack.c.l.b16 %v502
      %v535 = vunpack.c.l.b16 %v503
      %v536 = vpack.c.b16 %v521, %v520
      %v537 = vpack.c.b16 %v523, %v522
      %v538 = vpack.c.b16 %v525, %v524
      %v539 = vpack.c.b16 %v527, %v526
      %v540 = vpack.c.b16 %v529, %v528
      %v541 = vpack.c.b16 %v531, %v530
      %v542 = vpack.c.b16 %v533, %v532
      %v543 = vpack.c.b16 %v535, %v534
      %559 = vrot.lane.b32.xlu0 %v473, 97
      %v560 = vpop.permute.xlu0 %559
      %561 = vrot.lane.b32.xlu0 %v474, 97
      %v562 = vpop.permute.xlu0 %561
      %563 = vrot.lane.b32.xlu0 %v475, 97
      %v564 = vpop.permute.xlu0 %563
      %565 = vrot.lane.b32.xlu0 %v476, 97
      %v566 = vpop.permute.xlu0 %565
      %567 = vrot.lane.b32.xlu0 %v477, 97
      %v568 = vpop.permute.xlu0 %567
      %569 = vrot.lane.b32.xlu0 %v478, 97
      %v570 = vpop.permute.xlu0 %569
      %571 = vrot.lane.b32.xlu0 %v479, 97
      %v572 = vpop.permute.xlu0 %571
      %573 = vrot.lane.b32.xlu0 %v480, 97
      %v574 = vpop.permute.xlu0 %573
      %575 = vrot.lane.b32.xlu0 %v481, 97
      %v576 = vpop.permute.xlu0 %575
      %577 = vrot.lane.b32.xlu0 %v482, 97
      %v578 = vpop.permute.xlu0 %577
      %579 = vrot.lane.b32.xlu0 %v483, 97
      %v580 = vpop.permute.xlu0 %579
      %581 = vrot.lane.b32.xlu0 %v484, 97
      %v582 = vpop.permute.xlu0 %581
      %583 = vrot.lane.b32.xlu0 %v485, 97
      %v584 = vpop.permute.xlu0 %583
      %585 = vrot.lane.b32.xlu0 %v486, 97
      %v586 = vpop.permute.xlu0 %585
      %587 = vrot.lane.b32.xlu0 %v487, 97
      %v588 = vpop.permute.xlu0 %587
      %vm589 = vcmask 793600
      %v590 = vsel %vm589, %v560, %v562
      %v591 = vsel %vm589, %v562, %v564
      %v592 = vsel %vm589, %v566, %v568
      %v593 = vsel %vm589, %v568, %v570
      %v594 = vsel %vm589, %v572, %v574
      %v595 = vsel %vm589, %v574, %v576
      %v596 = vsel %vm589, %v578, %v580
      %v597 = vsel %vm589, %v580, %v582
      %v598 = vsel %vm589, %v584, %v586
      %v599 = vsel %vm589, %v586, %v588
      %vm608 = vcmask 588800
      %v610 = vsel %vm608, %v536, 0
      %v613 = vsel %vm608, %v537, 0
      %v616 = vsel %vm608, %v538, 0
      %v619 = vsel %vm608, %v539, 0
      %v622 = vsel %vm608, %v540, 0
      %v625 = vsel %vm608, %v541, 0
      %v628 = vsel %vm608, %v542, 0
      %v631 = vsel %vm608, %v543, 0
      %vm633 = vcmask 1043456
      %v635 = vsel %vm633, %v598, 0
      %v638 = vsel %vm633, %v599, 0
      %640 = vmatprep.subr.bf16.mxu0 %v591
      %641 = vmatpush1.bf16.msra.mxu0 %v590
      %642 = vmatprep.subr.bf16.mxu0 %v593
      %643 = vmatpush1.bf16.msra.mxu0 %v592
      %644 = vmatprep.subr.bf16.mxu0 %v595
      %645 = vmatpush1.bf16.msra.mxu0 %v594
      %646 = vmatprep.subr.bf16.mxu0 %v597
      %647 = vmatpush1.bf16.msra.mxu0 %v596
      %648 = vmatprep.subr.bf16.mxu0 %v638
      %649 = vmatpush1.bf16.msra.mxu0 %v635
      %650 = vmatprep.subr.bf16.mxu0 0
      %651 = vmatpush1.bf16.msra.mxu0 0
      %652 = vmatprep.subr.bf16.mxu0 0
      %653 = vmatpush1.bf16.msra.mxu0 0
      %654 = vmatprep.subr.bf16.mxu0 0
      %655 = vmatpush1.bf16.msra.mxu0 0
      %656 = vmatprep.subr.bf16.mxu0 0
      %657 = vmatpush1.bf16.msra.mxu0 0
      %658 = vmatprep.subr.bf16.mxu0 0
      %659 = vmatpush1.bf16.msra.mxu0 0
      %660 = vmatprep.subr.bf16.mxu0 0
      %661 = vmatpush1.bf16.msra.mxu0 0
      %662 = vmatprep.subr.bf16.mxu0 0
      %663 = vmatpush1.bf16.msra.mxu0 0
      %664 = vmatprep.subr.bf16.mxu0 0
      %665 = vmatpush1.bf16.msra.mxu0 0
      %666 = vmatprep.subr.bf16.mxu0 0
      %667 = vmatpush1.bf16.msra.mxu0 0
      %668 = vmatprep.subr.bf16.mxu0 0
      %669 = vmatpush1.bf16.msra.mxu0 0
      %670 = vmatprep.subr.bf16.mxu0 0
      %671 = vmatpush1.bf16.msra.mxu0 0
      %672 = vmatprep.mubr.bf16.mxu0 0
      %673 = vmatmul.mubr.bf16.gmra.mrb[0].mxu0 %v610
      %v674 = vpop.f32.mrb[0].mxu0
      %v675 = vadd.f32 0.0, %v674
      %v676 = vpop.f32.mrb[0].mxu0
      %v677 = vadd.f32 0.0, %v676
      %v678 = vpop.f32.mrb[0].mxu0
      %v679 = vadd.f32 0.0, %v678
      %v680 = vpop.f32.mrb[0].mxu0
      %v681 = vadd.f32 0.0, %v680
      %682 = vmatprep.mubr.bf16.mxu0 0
      %683 = vmatmul.mubr.bf16.gmra.mrb[0].mxu0 %v613
      %v684 = vpop.f32.mrb[0].mxu0
      %v685 = vadd.f32 0.0, %v684
      %v686 = vpop.f32.mrb[0].mxu0
      %v687 = vadd.f32 0.0, %v686
      %v688 = vpop.f32.mrb[0].mxu0
      %v689 = vadd.f32 0.0, %v688
      %v690 = vpop.f32.mrb[0].mxu0
      %v691 = vadd.f32 0.0, %v690
      %692 = vmatprep.mubr.bf16.mxu0 0
      %693 = vmatmul.mubr.bf16.gmra.mrb[0].mxu0 %v616
      %v694 = vpop.f32.mrb[0].mxu0
      %v695 = vadd.f32 0.0, %v694
      %v696 = vpop.f32.mrb[0].mxu0
      %v697 = vadd.f32 0.0, %v696
      %v698 = vpop.f32.mrb[0].mxu0
      %v699 = vadd.f32 0.0, %v698
      %v700 = vpop.f32.mrb[0].mxu0
      %v701 = vadd.f32 0.0, %v700
      %702 = vmatprep.mubr.bf16.mxu0 0
      %703 = vmatmul.mubr.bf16.gmra.mrb[0].mxu0 %v619
      %v704 = vpop.f32.mrb[0].mxu0
      %v705 = vadd.f32 0.0, %v704
      %v706 = vpop.f32.mrb[0].mxu0
      %v707 = vadd.f32 0.0, %v706
      %v708 = vpop.f32.mrb[0].mxu0
      %v709 = vadd.f32 0.0, %v708
      %v710 = vpop.f32.mrb[0].mxu0
      %v711 = vadd.f32 0.0, %v710
      %712 = vmatprep.mubr.bf16.mxu0 0
      %713 = vmatmul.mubr.bf16.gmra.mrb[0].mxu0 %v622
      %v714 = vpop.f32.mrb[0].mxu0
      %v715 = vadd.f32 0.0, %v714
      %v716 = vpop.f32.mrb[0].mxu0
      %v717 = vadd.f32 0.0, %v716
      %v718 = vpop.f32.mrb[0].mxu0
      %v719 = vadd.f32 0.0, %v718
      %v720 = vpop.f32.mrb[0].mxu0
      %v721 = vadd.f32 0.0, %v720
      %722 = vmatprep.mubr.bf16.mxu0 0
      %723 = vmatmul.mubr.bf16.gmra.mrb[0].mxu0 %v625
      %v724 = vpop.f32.mrb[0].mxu0
      %v725 = vadd.f32 0.0, %v724
      %v726 = vpop.f32.mrb[0].mxu0
      %v727 = vadd.f32 0.0, %v726
      %v728 = vpop.f32.mrb[0].mxu0
      %v729 = vadd.f32 0.0, %v728
      %v730 = vpop.f32.mrb[0].mxu0
      %v731 = vadd.f32 0.0, %v730
      %732 = vmatprep.mubr.bf16.mxu0 0
      %733 = vmatmul.mubr.bf16.gmra.mrb[0].mxu0 %v628
      %v734 = vpop.f32.mrb[0].mxu0
      %v735 = vadd.f32 0.0, %v734
      %v736 = vpop.f32.mrb[0].mxu0
      %v737 = vadd.f32 0.0, %v736
      %v738 = vpop.f32.mrb[0].mxu0
      %v739 = vadd.f32 0.0, %v738
      %v740 = vpop.f32.mrb[0].mxu0
      %v741 = vadd.f32 0.0, %v740
      %742 = vmatprep.mubr.bf16.mxu0 0
      %743 = vmatmul.mubr.bf16.gmra.mrb[0].mxu0 %v631
      %v744 = vpop.f32.mrb[0].mxu0
      %v745 = vadd.f32 0.0, %v744
      %v746 = vpop.f32.mrb[0].mxu0
      %v747 = vadd.f32 0.0, %v746
      %v748 = vpop.f32.mrb[0].mxu0
      %v749 = vadd.f32 0.0, %v748
      %v750 = vpop.f32.mrb[0].mxu0
      %v751 = vadd.f32 0.0, %v750
      %752 = vdwg.mxu0
      %v753 = vmax.f32 %v675, %v685
      %v754 = vmax.f32 %v679, %v689
      %v755 = vmax.f32 %v753, %v754
      %v756 = vrot.slane %v755, 4
      %v757 = vmax.f32 %v755, %v756
      %v758 = vrot.slane %v757, 2
      %v759 = vmax.f32 %v757, %v758
      %v760 = vrot.slane %v759, 1
      %v761 = vmax.f32 %v759, %v760
      %v762 = vmax.f32 %v677, %v687
      %v763 = vmax.f32 %v681, %v691
      %v764 = vmax.f32 %v762, %v763
      %v765 = vrot.slane %v764, 4
      %v766 = vmax.f32 %v764, %v765
      %v767 = vrot.slane %v766, 2
      %v768 = vmax.f32 %v766, %v767
      %v769 = vrot.slane %v768, 1
      %v770 = vmax.f32 %v768, %v769
      %v771 = vsub.f32 %v675, %v761
      %v772 = vsub.f32 %v677, %v770
      %v773 = vsub.f32 %v679, %v761
      %v774 = vsub.f32 %v681, %v770
      %v775 = vsub.f32 %v685, %v761
      %v776 = vsub.f32 %v687, %v770
      %v777 = vsub.f32 %v689, %v761
      %v778 = vsub.f32 %v691, %v770
      %v779 = vmul.f32 %v771, 1.442695
      %v780 = vpow.pop %v779
      %v781 = vmul.f32 %v772, 1.442695
      %v782 = vpow.pop %v781
      %v783 = vmul.f32 %v773, 1.442695
      %v784 = vpow.pop %v783
      %v785 = vmul.f32 %v774, 1.442695
      %v786 = vpow.pop %v785
      %v787 = vmul.f32 %v775, 1.442695
      %v788 = vpow.pop %v787
      %v789 = vmul.f32 %v776, 1.442695
      %v790 = vpow.pop %v789
      %v791 = vmul.f32 %v777, 1.442695
      %v792 = vpow.pop %v791
      %v793 = vmul.f32 %v778, 1.442695
      %v794 = vpow.pop %v793
      %v795 = vadd.f32 %v780, %v784
      %v796 = vadd.f32 %v795, %v788
      %v797 = vadd.f32 %v796, %v792
      %v798 = vrot.slane %v797, 4
      %v799 = vadd.f32 %v797, %v798
      %v800 = vrot.slane %v799, 2
      %v801 = vadd.f32 %v799, %v800
      %v802 = vrot.slane %v801, 1
      %v803 = vadd.f32 %v801, %v802
      %v804 = vadd.f32 %v782, %v786
      %v805 = vadd.f32 %v804, %v790
      %v806 = vadd.f32 %v805, %v794
      %v807 = vrot.slane %v806, 4
      %v808 = vadd.f32 %v806, %v807
      %v809 = vrot.slane %v808, 2
      %v810 = vadd.f32 %v808, %v809
      %v811 = vrot.slane %v810, 1
      %v812 = vadd.f32 %v810, %v811
      %v813 = vrcp.pop %v803
      %v814 = vrcp.pop %v812
      %v815 = vld [vmem:[%s2] sm:$0xff]
      %v816 = vld [vmem:[%s2 + $0x8] sm:$0xff]
      %v817 = vld [vmem:[%s2 + $0x10] sm:$0xff]
      %v818 = vld [vmem:[%s2 + $0x18] sm:$0xff]
      %v819 = vld [vmem:[%s2 + $0x20] sm:$0xff]
      %v820 = vld [vmem:[%s2 + $0x28] sm:$0xff]
      %v821 = vld [vmem:[%s2 + $0x30] sm:$0xff]
      %v822 = vld [vmem:[%s2 + $0x38] sm:$0xff]
      %v823 = vmul.f32 %v780, %v815
      %v824 = vmul.f32 %v782, %v816
      %v825 = vmul.f32 %v784, %v817
      %v826 = vmul.f32 %v786, %v818
      %v827 = vmul.f32 %v788, %v819
      %v828 = vmul.f32 %v790, %v820
      %v829 = vmul.f32 %v792, %v821
      %v830 = vmul.f32 %v794, %v822
      %v831 = vmax.f32 %v695, %v705
      %v832 = vmax.f32 %v699, %v709
      %v833 = vmax.f32 %v831, %v832
      %v834 = vrot.slane %v833, 4
      %v835 = vmax.f32 %v833, %v834
      %v836 = vrot.slane %v835, 2
      %v837 = vmax.f32 %v835, %v836
      %v838 = vrot.slane %v837, 1
      %v839 = vmax.f32 %v837, %v838
      %v840 = vmax.f32 %v697, %v707
      %v841 = vmax.f32 %v701, %v711
      %v842 = vmax.f32 %v840, %v841
      %v843 = vrot.slane %v842, 4
      %v844 = vmax.f32 %v842, %v843
      %v845 = vrot.slane %v844, 2
      %v846 = vmax.f32 %v844, %v845
      %v847 = vrot.slane %v846, 1
      %v848 = vmax.f32 %v846, %v847
      %v849 = vsub.f32 %v695, %v839
      %v850 = vsub.f32 %v697, %v848
      %v851 = vsub.f32 %v699, %v839
      %v852 = vsub.f32 %v701, %v848
      %v853 = vsub.f32 %v705, %v839
      %v854 = vsub.f32 %v707, %v848
      %v855 = vsub.f32 %v709, %v839
      %v856 = vsub.f32 %v711, %v848
      %v857 = vmul.f32 %v849, 1.442695
      %v858 = vpow.pop %v857
      %v859 = vmul.f32 %v850, 1.442695
      %v860 = vpow.pop %v859
      %v861 = vmul.f32 %v851, 1.442695
      %v862 = vpow.pop %v861
      %v863 = vmul.f32 %v852, 1.442695
      %v864 = vpow.pop %v863
      %v865 = vmul.f32 %v853, 1.442695
      %v866 = vpow.pop %v865
      %v867 = vmul.f32 %v854, 1.442695
      %v868 = vpow.pop %v867
      %v869 = vmul.f32 %v855, 1.442695
      %v870 = vpow.pop %v869
      %v871 = vmul.f32 %v856, 1.442695
      %v872 = vpow.pop %v871
      %v873 = vadd.f32 %v858, %v862
      %v874 = vadd.f32 %v873, %v866
      %v875 = vadd.f32 %v874, %v870
      %v876 = vrot.slane %v875, 4
      %v877 = vadd.f32 %v875, %v876
      %v878 = vrot.slane %v877, 2
      %v879 = vadd.f32 %v877, %v878
      %v880 = vrot.slane %v879, 1
      %v881 = vadd.f32 %v879, %v880
      %v882 = vadd.f32 %v860, %v864
      %v883 = vadd.f32 %v882, %v868
      %v884 = vadd.f32 %v883, %v872
      %v885 = vrot.slane %v884, 4
      %v886 = vadd.f32 %v884, %v885
      %v887 = vrot.slane %v886, 2
      %v888 = vadd.f32 %v886, %v887
      %v889 = vrot.slane %v888, 1
      %v890 = vadd.f32 %v888, %v889
      %v891 = vrcp.pop %v881
      %v892 = vrcp.pop %v890
      %v893 = vmul.f32 %v858, %v815
      %v894 = vmul.f32 %v860, %v816
      %v895 = vmul.f32 %v862, %v817
      %v896 = vmul.f32 %v864, %v818
      %v897 = vmul.f32 %v866, %v819
      %v898 = vmul.f32 %v868, %v820
      %v899 = vmul.f32 %v870, %v821
      %v900 = vmul.f32 %v872, %v822
      %v901 = vmax.f32 %v715, %v725
      %v902 = vmax.f32 %v719, %v729
      %v903 = vmax.f32 %v901, %v902
      %v904 = vrot.slane %v903, 4
      %v905 = vmax.f32 %v903, %v904
      %v906 = vrot.slane %v905, 2
      %v907 = vmax.f32 %v905, %v906
      %v908 = vrot.slane %v907, 1
      %v909 = vmax.f32 %v907, %v908
      %v910 = vmax.f32 %v717, %v727
      %v911 = vmax.f32 %v721, %v731
      %v912 = vmax.f32 %v910, %v911
      %v913 = vrot.slane %v912, 4
      %v914 = vmax.f32 %v912, %v913
      %v915 = vrot.slane %v914, 2
      %v916 = vmax.f32 %v914, %v915
      %v917 = vrot.slane %v916, 1
      %v918 = vmax.f32 %v916, %v917
      %v919 = vsub.f32 %v715, %v909
      %v920 = vsub.f32 %v717, %v918
      %v921 = vsub.f32 %v719, %v909
      %v922 = vsub.f32 %v721, %v918
      %v923 = vsub.f32 %v725, %v909
      %v924 = vsub.f32 %v727, %v918
      %v925 = vsub.f32 %v729, %v909
      %v926 = vsub.f32 %v731, %v918
      %v927 = vmul.f32 %v919, 1.442695
      %v928 = vpow.pop %v927
      %v929 = vmul.f32 %v920, 1.442695
      %v930 = vpow.pop %v929
      %v931 = vmul.f32 %v921, 1.442695
      %v932 = vpow.pop %v931
      %v933 = vmul.f32 %v922, 1.442695
      %v934 = vpow.pop %v933
      %v935 = vmul.f32 %v923, 1.442695
      %v936 = vpow.pop %v935
      %v937 = vmul.f32 %v924, 1.442695
      %v938 = vpow.pop %v937
      %v939 = vmul.f32 %v925, 1.442695
      %v940 = vpow.pop %v939
      %v941 = vmul.f32 %v926, 1.442695
      %v942 = vpow.pop %v941
      %v943 = vadd.f32 %v928, %v932
      %v944 = vadd.f32 %v943, %v936
      %v945 = vadd.f32 %v944, %v940
      %v946 = vrot.slane %v945, 4
      %v947 = vadd.f32 %v945, %v946
      %v948 = vrot.slane %v947, 2
      %v949 = vadd.f32 %v947, %v948
      %v950 = vrot.slane %v949, 1
      %v951 = vadd.f32 %v949, %v950
      %v952 = vadd.f32 %v930, %v934
      %v953 = vadd.f32 %v952, %v938
      %v954 = vadd.f32 %v953, %v942
      %v955 = vrot.slane %v954, 4
      %v956 = vadd.f32 %v954, %v955
      %v957 = vrot.slane %v956, 2
      %v958 = vadd.f32 %v956, %v957
      %v959 = vrot.slane %v958, 1
      %v960 = vadd.f32 %v958, %v959
      %v961 = vrcp.pop %v951
      %v962 = vrcp.pop %v960
      %v963 = vmul.f32 %v928, %v815
      %v964 = vmul.f32 %v930, %v816
      %v965 = vmul.f32 %v932, %v817
      %v966 = vmul.f32 %v934, %v818
      %v967 = vmul.f32 %v936, %v819
      %v968 = vmul.f32 %v938, %v820
      %v969 = vmul.f32 %v940, %v821
      %v970 = vmul.f32 %v942, %v822
      %v971 = vmax.f32 %v735, %v745
      %v972 = vmax.f32 %v739, %v749
      %v973 = vmax.f32 %v971, %v972
      %v974 = vrot.slane %v973, 4
      %v975 = vmax.f32 %v973, %v974
      %v976 = vrot.slane %v975, 2
      %v977 = vmax.f32 %v975, %v976
      %v978 = vrot.slane %v977, 1
      %v979 = vmax.f32 %v977, %v978
      %v980 = vmax.f32 %v737, %v747
      %v981 = vmax.f32 %v741, %v751
      %v982 = vmax.f32 %v980, %v981
      %v983 = vrot.slane %v982, 4
      %v984 = vmax.f32 %v982, %v983
      %v985 = vrot.slane %v984, 2
      %v986 = vmax.f32 %v984, %v985
      %v987 = vrot.slane %v986, 1
      %v988 = vmax.f32 %v986, %v987
      %v989 = vsub.f32 %v735, %v979
      %v990 = vsub.f32 %v737, %v988
      %v991 = vsub.f32 %v739, %v979
      %v992 = vsub.f32 %v741, %v988
      %v993 = vsub.f32 %v745, %v979
      %v994 = vsub.f32 %v747, %v988
      %v995 = vsub.f32 %v749, %v979
      %v996 = vsub.f32 %v751, %v988
      %v997 = vmul.f32 %v989, 1.442695
      %v998 = vpow.pop %v997
      %v999 = vmul.f32 %v990, 1.442695
      %v1000 = vpow.pop %v999
      %v1001 = vmul.f32 %v991, 1.442695
      %v1002 = vpow.pop %v1001
      %v1003 = vmul.f32 %v992, 1.442695
      %v1004 = vpow.pop %v1003
      %v1005 = vmul.f32 %v993, 1.442695
      %v1006 = vpow.pop %v1005
      %v1007 = vmul.f32 %v994, 1.442695
      %v1008 = vpow.pop %v1007
      %v1009 = vmul.f32 %v995, 1.442695
      %v1010 = vpow.pop %v1009
      %v1011 = vmul.f32 %v996, 1.442695
      %v1012 = vpow.pop %v1011
      %v1013 = vadd.f32 %v998, %v1002
      %v1014 = vadd.f32 %v1013, %v1006
      %v1015 = vadd.f32 %v1014, %v1010
      %v1016 = vrot.slane %v1015, 4
      %v1017 = vadd.f32 %v1015, %v1016
      %v1018 = vrot.slane %v1017, 2
      %v1019 = vadd.f32 %v1017, %v1018
      %v1020 = vrot.slane %v1019, 1
      %v1021 = vadd.f32 %v1019, %v1020
      %v1022 = vadd.f32 %v1000, %v1004
      %v1023 = vadd.f32 %v1022, %v1008
      %v1024 = vadd.f32 %v1023, %v1012
      %v1025 = vrot.slane %v1024, 4
      %v1026 = vadd.f32 %v1024, %v1025
      %v1027 = vrot.slane %v1026, 2
      %v1028 = vadd.f32 %v1026, %v1027
      %v1029 = vrot.slane %v1028, 1
      %v1030 = vadd.f32 %v1028, %v1029
      %v1031 = vrcp.pop %v1021
      %v1032 = vrcp.pop %v1030
      %v1033 = vmul.f32 %v998, %v815
      %v1034 = vmul.f32 %v1000, %v816
      %v1035 = vmul.f32 %v1002, %v817
      %v1036 = vmul.f32 %v1004, %v818
      %v1037 = vmul.f32 %v1006, %v819
      %v1038 = vmul.f32 %v1008, %v820
      %v1039 = vmul.f32 %v1010, %v821
      %v1040 = vmul.f32 %v1012, %v822
      %v1041 = vld [vmem:[%s197 + $0x18] sm:$0xff]
      %v1042 = vld [vmem:[%s197 + $0x20] sm:$0xff]
      %v1043 = vld [vmem:[%s197 + $0x28] sm:$0xff]
      %v1044 = vld [vmem:[%s197 + $0x30] sm:$0xff]
      %v1045 = vld [vmem:[%s197 + $0x38] sm:$0xff]
      %v1046 = vld [vmem:[%s197 + $0x40] sm:$0xff]
      %v1047 = vlaneseq
      %v1048 = vshrl.u32 %v1047, 7
      %v1049 = vsub.s32 0, %v1048
      %v1050 = vrot.slane %v823, %v1049
      %v1051 = vlaneseq
      %v1052 = vshrl.u32 %v1051, 7
      %v1053 = vsub.s32 0, %v1052
      %v1054 = vrot.slane %v824, %v1053
      %v1055 = vlaneseq
      %v1056 = vshrl.u32 %v1055, 7
      %v1057 = vsub.s32 0, %v1056
      %v1058 = vrot.slane %v893, %v1057
      %v1059 = vlaneseq
      %v1060 = vshrl.u32 %v1059, 7
      %v1061 = vsub.s32 0, %v1060
      %v1062 = vrot.slane %v894, %v1061
      %v1063 = vlaneseq
      %v1064 = vshrl.u32 %v1063, 7
      %v1065 = vsub.s32 0, %v1064
      %v1066 = vrot.slane %v963, %v1065
      %v1067 = vlaneseq
      %v1068 = vshrl.u32 %v1067, 7
      %v1069 = vsub.s32 0, %v1068
      %v1070 = vrot.slane %v964, %v1069
      %v1071 = vlaneseq
      %v1072 = vshrl.u32 %v1071, 7
      %v1073 = vsub.s32 0, %v1072
      %v1074 = vrot.slane %v1033, %v1073
      %v1075 = vlaneseq
      %v1076 = vshrl.u32 %v1075, 7
      %v1077 = vsub.s32 0, %v1076
      %v1078 = vrot.slane %v1034, %v1077
      %v1079 = vsel %vm633, %v1050, %v1058
      %v1080 = vsel %vm633, %v1054, %v1062
      %v1081 = vsel %vm633, %v1066, %v1074
      %v1082 = vsel %vm633, %v1070, %v1078
      %1087 = vrot.lane.b32.xlu0 %v1079, 14
      %v1088 = vpop.permute.xlu0 %1087
      %1089 = vrot.lane.b32.xlu0 %v1080, 14
      %v1090 = vpop.permute.xlu0 %1089
      %1091 = vrot.lane.b32.xlu0 %v1081, 14
      %v1092 = vpop.permute.xlu0 %1091
      %1093 = vrot.lane.b32.xlu0 %v1082, 14
      %v1094 = vpop.permute.xlu0 %1093
      %vm1095 = vcmask 113664
      %v1096 = vsel %vm1095, %v1088, %v1090
      %v1097 = vsel %vm1095, %v1092, %v1094
      %v1104 = vmul.f32 %v1041, %v1088
      %v1105 = vmul.f32 %v1042, %v1096
      %v1106 = vmul.f32 %v1043, %v1090
      %v1107 = vmul.f32 %v1044, %v1092
      %v1108 = vmul.f32 %v1045, %v1097
      %v1109 = vmul.f32 %v1046, %v1094
      %v1110 = vadd.f32 %v1104, 0.0
      %v1111 = vadd.f32 %v1105, 0.0
      %v1112 = vadd.f32 %v1106, 0.0
      %v1113 = vadd.f32 %v1107, 0.0
      %v1114 = vadd.f32 %v1108, 0.0
      %v1115 = vadd.f32 %v1109, 0.0
      %v1116 = vlaneseq
      %v1117 = vshrl.u32 %v1116, 7
      %v1118 = vsub.s32 1, %v1117
      %v1119 = vrot.slane %v823, %v1118
      %v1120 = vlaneseq
      %v1121 = vshrl.u32 %v1120, 7
      %v1122 = vsub.s32 1, %v1121
      %v1123 = vrot.slane %v824, %v1122
      %v1124 = vlaneseq
      %v1125 = vshrl.u32 %v1124, 7
      %v1126 = vsub.s32 1, %v1125
      %v1127 = vrot.slane %v893, %v1126
      %v1128 = vlaneseq
      %v1129 = vshrl.u32 %v1128, 7
      %v1130 = vsub.s32 1, %v1129
      %v1131 = vrot.slane %v894, %v1130
      %v1132 = vlaneseq
      %v1133 = vshrl.u32 %v1132, 7
      %v1134 = vsub.s32 1, %v1133
      %v1135 = vrot.slane %v963, %v1134
      %v1136 = vlaneseq
      %v1137 = vshrl.u32 %v1136, 7
      %v1138 = vsub.s32 1, %v1137
      %v1139 = vrot.slane %v964, %v1138
      %v1140 = vlaneseq
      %v1141 = vshrl.u32 %v1140, 7
      %v1142 = vsub.s32 1, %v1141
      %v1143 = vrot.slane %v1033, %v1142
      %v1144 = vlaneseq
      %v1145 = vshrl.u32 %v1144, 7
      %v1146 = vsub.s32 1, %v1145
      %v1147 = vrot.slane %v1034, %v1146
      %v1148 = vsel %vm633, %v1119, %v1127
      %v1149 = vsel %vm633, %v1123, %v1131
      %v1150 = vsel %vm633, %v1135, %v1143
      %v1151 = vsel %vm633, %v1139, %v1147
      %1156 = vrot.lane.b32.xlu0 %v1148, 15
      %v1157 = vpop.permute.xlu0 %1156
      %1158 = vrot.lane.b32.xlu0 %v1149, 15
      %v1159 = vpop.permute.xlu0 %1158
      %1160 = vrot.lane.b32.xlu0 %v1150, 15
      %v1161 = vpop.permute.xlu0 %1160
      %1162 = vrot.lane.b32.xlu0 %v1151, 15
      %v1163 = vpop.permute.xlu0 %1162
      %vm1164 = vcmask 121856
      %v1165 = vsel %vm1164, %v1157, %v1159
      %v1166 = vsel %vm1164, %v1161, %v1163
      %v1173 = vmul.f32 %v1041, %v1157
      %v1174 = vmul.f32 %v1042, %v1165
      %v1175 = vmul.f32 %v1043, %v1159
      %v1176 = vmul.f32 %v1044, %v1161
      %v1177 = vmul.f32 %v1045, %v1166
      %v1178 = vmul.f32 %v1046, %v1163
      %1185 = vrot.lane.b32.xlu0 %v1173, 127
      %v1186 = vpop.permute.xlu0 %1185
      %1187 = vrot.lane.b32.xlu0 %v1174, 127
      %v1188 = vpop.permute.xlu0 %1187
      %1189 = vrot.lane.b32.xlu0 %v1175, 127
      %v1190 = vpop.permute.xlu0 %1189
      %1191 = vrot.lane.b32.xlu0 %v1176, 127
      %v1192 = vpop.permute.xlu0 %1191
      %1193 = vrot.lane.b32.xlu0 %v1177, 127
      %v1194 = vpop.permute.xlu0 %1193
      %1195 = vrot.lane.b32.xlu0 %v1178, 127
      %v1196 = vpop.permute.xlu0 %1195
      %v1197 = vsel %vm362, %v1186, %v1188
      %v1198 = vsel %vm362, %v1188, %v1190
      %v1199 = vsel %vm362, %v1192, %v1194
      %v1200 = vsel %vm362, %v1194, %v1196
      %v1207 = vadd.f32 %v1110, %v1197
      %v1208 = vadd.f32 %v1111, %v1198
      %v1209 = vadd.f32 %v1112, %v1190
      %v1210 = vadd.f32 %v1113, %v1199
      %v1211 = vadd.f32 %v1114, %v1200
      %v1212 = vadd.f32 %v1115, %v1196
      %v1213 = vlaneseq
      %v1214 = vshrl.u32 %v1213, 7
      %v1215 = vsub.s32 2, %v1214
      %v1216 = vrot.slane %v823, %v1215
      %v1217 = vlaneseq
      %v1218 = vshrl.u32 %v1217, 7
      %v1219 = vsub.s32 2, %v1218
      %v1220 = vrot.slane %v824, %v1219
      %v1221 = vlaneseq
      %v1222 = vshrl.u32 %v1221, 7
      %v1223 = vsub.s32 2, %v1222
      %v1224 = vrot.slane %v893, %v1223
      %v1225 = vlaneseq
      %v1226 = vshrl.u32 %v1225, 7
      %v1227 = vsub.s32 2, %v1226
      %v1228 = vrot.slane %v894, %v1227
      %v1229 = vlaneseq
      %v1230 = vshrl.u32 %v1229, 7
      %v1231 = vsub.s32 2, %v1230
      %v1232 = vrot.slane %v963, %v1231
      %v1233 = vlaneseq
      %v1234 = vshrl.u32 %v1233, 7
      %v1235 = vsub.s32 2, %v1234
      %v1236 = vrot.slane %v964, %v1235
      %v1237 = vlaneseq
      %v1238 = vshrl.u32 %v1237, 7
      %v1239 = vsub.s32 2, %v1238
      %v1240 = vrot.slane %v1033, %v1239
      %v1241 = vlaneseq
      %v1242 = vshrl.u32 %v1241, 7
      %v1243 = vsub.s32 2, %v1242
      %v1244 = vrot.slane %v1034, %v1243
      %v1245 = vsel %vm633, %v1216, %v1224
      %v1246 = vsel %vm633, %v1220, %v1228
      %v1247 = vsel %vm633, %v1232, %v1240
      %v1248 = vsel %vm633, %v1236, %v1244
      %1253 = vrot.lane.b32.xlu0 %v1245, 16
      %v1254 = vpop.permute.xlu0 %1253
      %1255 = vrot.lane.b32.xlu0 %v1246, 16
      %v1256 = vpop.permute.xlu0 %1255
      %1257 = vrot.lane.b32.xlu0 %v1247, 16
      %v1258 = vpop.permute.xlu0 %1257
      %1259 = vrot.lane.b32.xlu0 %v1248, 16
      %v1260 = vpop.permute.xlu0 %1259
      %vm1261 = vcmask 130048
      %v1262 = vsel %vm1261, %v1254, %v1256
      %v1263 = vsel %vm1261, %v1258, %v1260
      %v1270 = vmul.f32 %v1041, %v1254
      %v1271 = vmul.f32 %v1042, %v1262
      %v1272 = vmul.f32 %v1043, %v1256
      %v1273 = vmul.f32 %v1044, %v1258
      %v1274 = vmul.f32 %v1045, %v1263
      %v1275 = vmul.f32 %v1046, %v1260
      %1282 = vrot.lane.b32.xlu0 %v1270, 126
      %v1283 = vpop.permute.xlu0 %1282
      %1284 = vrot.lane.b32.xlu0 %v1271, 126
      %v1285 = vpop.permute.xlu0 %1284
      %1286 = vrot.lane.b32.xlu0 %v1272, 126
      %v1287 = vpop.permute.xlu0 %1286
      %1288 = vrot.lane.b32.xlu0 %v1273, 126
      %v1289 = vpop.permute.xlu0 %1288
      %1290 = vrot.lane.b32.xlu0 %v1274, 126
      %v1291 = vpop.permute.xlu0 %1290
      %1292 = vrot.lane.b32.xlu0 %v1275, 126
      %v1293 = vpop.permute.xlu0 %1292
      %v1294 = vsel %vm377, %v1283, %v1285
      %v1295 = vsel %vm377, %v1285, %v1287
      %v1296 = vsel %vm377, %v1289, %v1291
      %v1297 = vsel %vm377, %v1291, %v1293
      %v1304 = vadd.f32 %v1207, %v1294
      %v1305 = vadd.f32 %v1208, %v1295
      %v1306 = vadd.f32 %v1209, %v1287
      %v1307 = vadd.f32 %v1210, %v1296
      %v1308 = vadd.f32 %v1211, %v1297
      %v1309 = vadd.f32 %v1212, %v1293
      %v1310 = vlaneseq
      %v1311 = vshrl.u32 %v1310, 7
      %v1312 = vsub.s32 3, %v1311
      %v1313 = vrot.slane %v823, %v1312
      %v1314 = vlaneseq
      %v1315 = vshrl.u32 %v1314, 7
      %v1316 = vsub.s32 3, %v1315
      %v1317 = vrot.slane %v824, %v1316
      %v1318 = vlaneseq
      %v1319 = vshrl.u32 %v1318, 7
      %v1320 = vsub.s32 3, %v1319
      %v1321 = vrot.slane %v893, %v1320
      %v1322 = vlaneseq
      %v1323 = vshrl.u32 %v1322, 7
      %v1324 = vsub.s32 3, %v1323
      %v1325 = vrot.slane %v894, %v1324
      %v1326 = vlaneseq
      %v1327 = vshrl.u32 %v1326, 7
      %v1328 = vsub.s32 3, %v1327
      %v1329 = vrot.slane %v963, %v1328
      %v1330 = vlaneseq
      %v1331 = vshrl.u32 %v1330, 7
      %v1332 = vsub.s32 3, %v1331
      %v1333 = vrot.slane %v964, %v1332
      %v1334 = vlaneseq
      %v1335 = vshrl.u32 %v1334, 7
      %v1336 = vsub.s32 3, %v1335
      %v1337 = vrot.slane %v1033, %v1336
      %v1338 = vlaneseq
      %v1339 = vshrl.u32 %v1338, 7
      %v1340 = vsub.s32 3, %v1339
      %v1341 = vrot.slane %v1034, %v1340
      %v1342 = vsel %vm633, %v1313, %v1321
      %v1343 = vsel %vm633, %v1317, %v1325
      %v1344 = vsel %vm633, %v1329, %v1337
      %v1345 = vsel %vm633, %v1333, %v1341
      %1350 = vrot.lane.b32.xlu0 %v1342, 17
      %v1351 = vpop.permute.xlu0 %1350
      %1352 = vrot.lane.b32.xlu0 %v1343, 17
      %v1353 = vpop.permute.xlu0 %1352
      %1354 = vrot.lane.b32.xlu0 %v1344, 17
      %v1355 = vpop.permute.xlu0 %1354
      %1356 = vrot.lane.b32.xlu0 %v1345, 17
      %v1357 = vpop.permute.xlu0 %1356
      %vm1358 = vcmask 138240
      %v1359 = vsel %vm1358, %v1351, %v1353
      %v1360 = vsel %vm1358, %v1355, %v1357
      %v1367 = vmul.f32 %v1041, %v1351
      %v1368 = vmul.f32 %v1042, %v1359
      %v1369 = vmul.f32 %v1043, %v1353
      %v1370 = vmul.f32 %v1044, %v1355
      %v1371 = vmul.f32 %v1045, %v1360
      %v1372 = vmul.f32 %v1046, %v1357
      %1379 = vrot.lane.b32.xlu0 %v1367, 125
      %v1380 = vpop.permute.xlu0 %1379
      %1381 = vrot.lane.b32.xlu0 %v1368, 125
      %v1382 = vpop.permute.xlu0 %1381
      %1383 = vrot.lane.b32.xlu0 %v1369, 125
      %v1384 = vpop.permute.xlu0 %1383
      %1385 = vrot.lane.b32.xlu0 %v1370, 125
      %v1386 = vpop.permute.xlu0 %1385
      %1387 = vrot.lane.b32.xlu0 %v1371, 125
      %v1388 = vpop.permute.xlu0 %1387
      %1389 = vrot.lane.b32.xlu0 %v1372, 125
      %v1390 = vpop.permute.xlu0 %1389
      %vm1391 = vcmask 1022976
      %v1392 = vsel %vm1391, %v1380, %v1382
      %v1393 = vsel %vm1391, %v1382, %v1384
      %v1394 = vsel %vm1391, %v1386, %v1388
      %v1395 = vsel %vm1391, %v1388, %v1390
      %v1402 = vadd.f32 %v1304, %v1392
      %v1403 = vadd.f32 %v1305, %v1393
      %v1404 = vadd.f32 %v1306, %v1384
      %v1405 = vadd.f32 %v1307, %v1394
      %v1406 = vadd.f32 %v1308, %v1395
      %v1407 = vadd.f32 %v1309, %v1390
      %v1408 = vlaneseq
      %v1409 = vshrl.u32 %v1408, 7
      %v1410 = vsub.s32 4, %v1409
      %v1411 = vrot.slane %v823, %v1410
      %v1412 = vlaneseq
      %v1413 = vshrl.u32 %v1412, 7
      %v1414 = vsub.s32 4, %v1413
      %v1415 = vrot.slane %v824, %v1414
      %v1416 = vlaneseq
      %v1417 = vshrl.u32 %v1416, 7
      %v1418 = vsub.s32 4, %v1417
      %v1419 = vrot.slane %v893, %v1418
      %v1420 = vlaneseq
      %v1421 = vshrl.u32 %v1420, 7
      %v1422 = vsub.s32 4, %v1421
      %v1423 = vrot.slane %v894, %v1422
      %v1424 = vlaneseq
      %v1425 = vshrl.u32 %v1424, 7
      %v1426 = vsub.s32 4, %v1425
      %v1427 = vrot.slane %v963, %v1426
      %v1428 = vlaneseq
      %v1429 = vshrl.u32 %v1428, 7
      %v1430 = vsub.s32 4, %v1429
      %v1431 = vrot.slane %v964, %v1430
      %v1432 = vlaneseq
      %v1433 = vshrl.u32 %v1432, 7
      %v1434 = vsub.s32 4, %v1433
      %v1435 = vrot.slane %v1033, %v1434
      %v1436 = vlaneseq
      %v1437 = vshrl.u32 %v1436, 7
      %v1438 = vsub.s32 4, %v1437
      %v1439 = vrot.slane %v1034, %v1438
      %v1440 = vsel %vm633, %v1411, %v1419
      %v1441 = vsel %vm633, %v1415, %v1423
      %v1442 = vsel %vm633, %v1427, %v1435
      %v1443 = vsel %vm633, %v1431, %v1439
      %1448 = vrot.lane.b32.xlu0 %v1440, 18
      %v1449 = vpop.permute.xlu0 %1448
      %1450 = vrot.lane.b32.xlu0 %v1441, 18
      %v1451 = vpop.permute.xlu0 %1450
      %1452 = vrot.lane.b32.xlu0 %v1442, 18
      %v1453 = vpop.permute.xlu0 %1452
      %1454 = vrot.lane.b32.xlu0 %v1443, 18
      %v1455 = vpop.permute.xlu0 %1454
      %vm1456 = vcmask 146432
      %v1457 = vsel %vm1456, %v1449, %v1451
      %v1458 = vsel %vm1456, %v1453, %v1455
      %v1465 = vmul.f32 %v1041, %v1449
      %v1466 = vmul.f32 %v1042, %v1457
      %v1467 = vmul.f32 %v1043, %v1451
      %v1468 = vmul.f32 %v1044, %v1453
      %v1469 = vmul.f32 %v1045, %v1458
      %v1470 = vmul.f32 %v1046, %v1455
      %1477 = vrot.lane.b32.xlu0 %v1465, 124
      %v1478 = vpop.permute.xlu0 %1477
      %1479 = vrot.lane.b32.xlu0 %v1466, 124
      %v1480 = vpop.permute.xlu0 %1479
      %1481 = vrot.lane.b32.xlu0 %v1467, 124
      %v1482 = vpop.permute.xlu0 %1481
      %1483 = vrot.lane.b32.xlu0 %v1468, 124
      %v1484 = vpop.permute.xlu0 %1483
      %1485 = vrot.lane.b32.xlu0 %v1469, 124
      %v1486 = vpop.permute.xlu0 %1485
      %1487 = vrot.lane.b32.xlu0 %v1470, 124
      %v1488 = vpop.permute.xlu0 %1487
      %vm1489 = vcmask 1014784
      %v1490 = vsel %vm1489, %v1478, %v1480
      %v1491 = vsel %vm1489, %v1480, %v1482
      %v1492 = vsel %vm1489, %v1484, %v1486
      %v1493 = vsel %vm1489, %v1486, %v1488
      %v1500 = vadd.f32 %v1402, %v1490
      %v1501 = vadd.f32 %v1403, %v1491
      %v1502 = vadd.f32 %v1404, %v1482
      %v1503 = vadd.f32 %v1405, %v1492
      %v1504 = vadd.f32 %v1406, %v1493
      %v1505 = vadd.f32 %v1407, %v1488
      %v1506 = vlaneseq
      %v1507 = vshrl.u32 %v1506, 7
      %v1508 = vsub.s32 5, %v1507
      %v1509 = vrot.slane %v823, %v1508
      %v1510 = vlaneseq
      %v1511 = vshrl.u32 %v1510, 7
      %v1512 = vsub.s32 5, %v1511
      %v1513 = vrot.slane %v824, %v1512
      %v1514 = vlaneseq
      %v1515 = vshrl.u32 %v1514, 7
      %v1516 = vsub.s32 5, %v1515
      %v1517 = vrot.slane %v893, %v1516
      %v1518 = vlaneseq
      %v1519 = vshrl.u32 %v1518, 7
      %v1520 = vsub.s32 5, %v1519
      %v1521 = vrot.slane %v894, %v1520
      %v1522 = vlaneseq
      %v1523 = vshrl.u32 %v1522, 7
      %v1524 = vsub.s32 5, %v1523
      %v1525 = vrot.slane %v963, %v1524
      %v1526 = vlaneseq
      %v1527 = vshrl.u32 %v1526, 7
      %v1528 = vsub.s32 5, %v1527
      %v1529 = vrot.slane %v964, %v1528
      %v1530 = vlaneseq
      %v1531 = vshrl.u32 %v1530, 7
      %v1532 = vsub.s32 5, %v1531
      %v1533 = vrot.slane %v1033, %v1532
      %v1534 = vlaneseq
      %v1535 = vshrl.u32 %v1534, 7
      %v1536 = vsub.s32 5, %v1535
      %v1537 = vrot.slane %v1034, %v1536
      %v1538 = vsel %vm633, %v1509, %v1517
      %v1539 = vsel %vm633, %v1513, %v1521
      %v1540 = vsel %vm633, %v1525, %v1533
      %v1541 = vsel %vm633, %v1529, %v1537
      %1546 = vrot.lane.b32.xlu0 %v1538, 30
      %v1547 = vpop.permute.xlu0 %1546
      %1548 = vrot.lane.b32.xlu0 %v1539, 30
      %v1549 = vpop.permute.xlu0 %1548
      %1550 = vrot.lane.b32.xlu0 %v1540, 30
      %v1551 = vpop.permute.xlu0 %1550
      %1552 = vrot.lane.b32.xlu0 %v1541, 30
      %v1553 = vpop.permute.xlu0 %1552
      %vm1554 = vcmask 244736
      %v1555 = vsel %vm1554, %v1547, %v1549
      %v1556 = vsel %vm1554, %v1551, %v1553
      %v1563 = vmul.f32 %v1041, %v1547
      %v1564 = vmul.f32 %v1042, %v1555
      %v1565 = vmul.f32 %v1043, %v1549
      %v1566 = vmul.f32 %v1044, %v1551
      %v1567 = vmul.f32 %v1045, %v1556
      %v1568 = vmul.f32 %v1046, %v1553
      %1575 = vrot.lane.b32.xlu0 %v1563, 112
      %v1576 = vpop.permute.xlu0 %1575
      %1577 = vrot.lane.b32.xlu0 %v1564, 112
      %v1578 = vpop.permute.xlu0 %1577
      %1579 = vrot.lane.b32.xlu0 %v1565, 112
      %v1580 = vpop.permute.xlu0 %1579
      %1581 = vrot.lane.b32.xlu0 %v1566, 112
      %v1582 = vpop.permute.xlu0 %1581
      %1583 = vrot.lane.b32.xlu0 %v1567, 112
      %v1584 = vpop.permute.xlu0 %1583
      %1585 = vrot.lane.b32.xlu0 %v1568, 112
      %v1586 = vpop.permute.xlu0 %1585
      %v1587 = vsel %vm392, %v1576, %v1578
      %v1588 = vsel %vm392, %v1578, %v1580
      %v1589 = vsel %vm392, %v1582, %v1584
      %v1590 = vsel %vm392, %v1584, %v1586
      %v1597 = vadd.f32 %v1500, %v1587
      %v1598 = vadd.f32 %v1501, %v1588
      %v1599 = vadd.f32 %v1502, %v1580
      %v1600 = vadd.f32 %v1503, %v1589
      %v1601 = vadd.f32 %v1504, %v1590
      %v1602 = vadd.f32 %v1505, %v1586
      %v1603 = vlaneseq
      %v1604 = vshrl.u32 %v1603, 7
      %v1605 = vsub.s32 6, %v1604
      %v1606 = vrot.slane %v823, %v1605
      %v1607 = vlaneseq
      %v1608 = vshrl.u32 %v1607, 7
      %v1609 = vsub.s32 6, %v1608
      %v1610 = vrot.slane %v824, %v1609
      %v1611 = vlaneseq
      %v1612 = vshrl.u32 %v1611, 7
      %v1613 = vsub.s32 6, %v1612
      %v1614 = vrot.slane %v893, %v1613
      %v1615 = vlaneseq
      %v1616 = vshrl.u32 %v1615, 7
      %v1617 = vsub.s32 6, %v1616
      %v1618 = vrot.slane %v894, %v1617
      %v1619 = vlaneseq
      %v1620 = vshrl.u32 %v1619, 7
      %v1621 = vsub.s32 6, %v1620
      %v1622 = vrot.slane %v963, %v1621
      %v1623 = vlaneseq
      %v1624 = vshrl.u32 %v1623, 7
      %v1625 = vsub.s32 6, %v1624
      %v1626 = vrot.slane %v964, %v1625
      %v1627 = vlaneseq
      %v1628 = vshrl.u32 %v1627, 7
      %v1629 = vsub.s32 6, %v1628
      %v1630 = vrot.slane %v1033, %v1629
      %v1631 = vlaneseq
      %v1632 = vshrl.u32 %v1631, 7
      %v1633 = vsub.s32 6, %v1632
      %v1634 = vrot.slane %v1034, %v1633
      %v1635 = vsel %vm633, %v1606, %v1614
      %v1636 = vsel %vm633, %v1610, %v1618
      %v1637 = vsel %vm633, %v1622, %v1630
      %v1638 = vsel %vm633, %v1626, %v1634
      %1643 = vrot.lane.b32.xlu0 %v1635, 31
      %v1644 = vpop.permute.xlu0 %1643
      %1645 = vrot.lane.b32.xlu0 %v1636, 31
      %v1646 = vpop.permute.xlu0 %1645
      %1647 = vrot.lane.b32.xlu0 %v1637, 31
      %v1648 = vpop.permute.xlu0 %1647
      %1649 = vrot.lane.b32.xlu0 %v1638, 31
      %v1650 = vpop.permute.xlu0 %1649
      %v1651 = vsel %vm227, %v1644, %v1646
      %v1652 = vsel %vm227, %v1648, %v1650
      %v1659 = vmul.f32 %v1041, %v1644
      %v1660 = vmul.f32 %v1042, %v1651
      %v1661 = vmul.f32 %v1043, %v1646
      %v1662 = vmul.f32 %v1044, %v1648
      %v1663 = vmul.f32 %v1045, %v1652
      %v1664 = vmul.f32 %v1046, %v1650
      %1671 = vrot.lane.b32.xlu0 %v1659, 111
      %v1672 = vpop.permute.xlu0 %1671
      %1673 = vrot.lane.b32.xlu0 %v1660, 111
      %v1674 = vpop.permute.xlu0 %1673
      %1675 = vrot.lane.b32.xlu0 %v1661, 111
      %v1676 = vpop.permute.xlu0 %1675
      %1677 = vrot.lane.b32.xlu0 %v1662, 111
      %v1678 = vpop.permute.xlu0 %1677
      %1679 = vrot.lane.b32.xlu0 %v1663, 111
      %v1680 = vpop.permute.xlu0 %1679
      %1681 = vrot.lane.b32.xlu0 %v1664, 111
      %v1682 = vpop.permute.xlu0 %1681
      %v1683 = vsel %vm407, %v1672, %v1674
      %v1684 = vsel %vm407, %v1674, %v1676
      %v1685 = vsel %vm407, %v1678, %v1680
      %v1686 = vsel %vm407, %v1680, %v1682
      %v1693 = vadd.f32 %v1597, %v1683
      %v1694 = vadd.f32 %v1598, %v1684
      %v1695 = vadd.f32 %v1599, %v1676
      %v1696 = vadd.f32 %v1600, %v1685
      %v1697 = vadd.f32 %v1601, %v1686
      %v1698 = vadd.f32 %v1602, %v1682
      %v1699 = vlaneseq
      %v1700 = vshrl.u32 %v1699, 7
      %v1701 = vsub.s32 7, %v1700
      %v1702 = vrot.slane %v823, %v1701
      %v1703 = vlaneseq
      %v1704 = vshrl.u32 %v1703, 7
      %v1705 = vsub.s32 7, %v1704
      %v1706 = vrot.slane %v824, %v1705
      %v1707 = vlaneseq
      %v1708 = vshrl.u32 %v1707, 7
      %v1709 = vsub.s32 7, %v1708
      %v1710 = vrot.slane %v893, %v1709
      %v1711 = vlaneseq
      %v1712 = vshrl.u32 %v1711, 7
      %v1713 = vsub.s32 7, %v1712
      %v1714 = vrot.slane %v894, %v1713
      %v1715 = vlaneseq
      %v1716 = vshrl.u32 %v1715, 7
      %v1717 = vsub.s32 7, %v1716
      %v1718 = vrot.slane %v963, %v1717
      %v1719 = vlaneseq
      %v1720 = vshrl.u32 %v1719, 7
      %v1721 = vsub.s32 7, %v1720
      %v1722 = vrot.slane %v964, %v1721
      %v1723 = vlaneseq
      %v1724 = vshrl.u32 %v1723, 7
      %v1725 = vsub.s32 7, %v1724
      %v1726 = vrot.slane %v1033, %v1725
      %v1727 = vlaneseq
      %v1728 = vshrl.u32 %v1727, 7
      %v1729 = vsub.s32 7, %v1728
      %v1730 = vrot.slane %v1034, %v1729
      %v1731 = vsel %vm633, %v1702, %v1710
      %v1732 = vsel %vm633, %v1706, %v1714
      %v1733 = vsel %vm633, %v1718, %v1726
      %v1734 = vsel %vm633, %v1722, %v1730
      %1739 = vrot.lane.b32.xlu0 %v1731, 32
      %v1740 = vpop.permute.xlu0 %1739
      %1741 = vrot.lane.b32.xlu0 %v1732, 32
      %v1742 = vpop.permute.xlu0 %1741
      %1743 = vrot.lane.b32.xlu0 %v1733, 32
      %v1744 = vpop.permute.xlu0 %1743
      %1745 = vrot.lane.b32.xlu0 %v1734, 32
      %v1746 = vpop.permute.xlu0 %1745
      %v1747 = vsel %vm250, %v1740, %v1742
      %v1748 = vsel %vm250, %v1744, %v1746
      %v1755 = vmul.f32 %v1041, %v1740
      %v1756 = vmul.f32 %v1042, %v1747
      %v1757 = vmul.f32 %v1043, %v1742
      %v1758 = vmul.f32 %v1044, %v1744
      %v1759 = vmul.f32 %v1045, %v1748
      %v1760 = vmul.f32 %v1046, %v1746
      %1767 = vrot.lane.b32.xlu0 %v1755, 110
      %v1768 = vpop.permute.xlu0 %1767
      %1769 = vrot.lane.b32.xlu0 %v1756, 110
      %v1770 = vpop.permute.xlu0 %1769
      %1771 = vrot.lane.b32.xlu0 %v1757, 110
      %v1772 = vpop.permute.xlu0 %1771
      %1773 = vrot.lane.b32.xlu0 %v1758, 110
      %v1774 = vpop.permute.xlu0 %1773
      %1775 = vrot.lane.b32.xlu0 %v1759, 110
      %v1776 = vpop.permute.xlu0 %1775
      %1777 = vrot.lane.b32.xlu0 %v1760, 110
      %v1778 = vpop.permute.xlu0 %1777
      %v1779 = vsel %vm422, %v1768, %v1770
      %v1780 = vsel %vm422, %v1770, %v1772
      %v1781 = vsel %vm422, %v1774, %v1776
      %v1782 = vsel %vm422, %v1776, %v1778
      %v1789 = vadd.f32 %v1693, %v1779
      %v1790 = vadd.f32 %v1694, %v1780
      %v1791 = vadd.f32 %v1695, %v1772
      %v1792 = vadd.f32 %v1696, %v1781
      %v1793 = vadd.f32 %v1697, %v1782
      %v1794 = vadd.f32 %v1698, %v1778
      %v1795 = vlaneseq
      %v1796 = vshrl.u32 %v1795, 7
      %v1797 = vsub.s32 0, %v1796
      %v1798 = vrot.slane %v825, %v1797
      %v1799 = vlaneseq
      %v1800 = vshrl.u32 %v1799, 7
      %v1801 = vsub.s32 0, %v1800
      %v1802 = vrot.slane %v826, %v1801
      %v1803 = vlaneseq
      %v1804 = vshrl.u32 %v1803, 7
      %v1805 = vsub.s32 0, %v1804
      %v1806 = vrot.slane %v895, %v1805
      %v1807 = vlaneseq
      %v1808 = vshrl.u32 %v1807, 7
      %v1809 = vsub.s32 0, %v1808
      %v1810 = vrot.slane %v896, %v1809
      %v1811 = vlaneseq
      %v1812 = vshrl.u32 %v1811, 7
      %v1813 = vsub.s32 0, %v1812
      %v1814 = vrot.slane %v965, %v1813
      %v1815 = vlaneseq
      %v1816 = vshrl.u32 %v1815, 7
      %v1817 = vsub.s32 0, %v1816
      %v1818 = vrot.slane %v966, %v1817
      %v1819 = vlaneseq
      %v1820 = vshrl.u32 %v1819, 7
      %v1821 = vsub.s32 0, %v1820
      %v1822 = vrot.slane %v1035, %v1821
      %v1823 = vlaneseq
      %v1824 = vshrl.u32 %v1823, 7
      %v1825 = vsub.s32 0, %v1824
      %v1826 = vrot.slane %v1036, %v1825
      %v1827 = vsel %vm633, %v1798, %v1806
      %v1828 = vsel %vm633, %v1802, %v1810
      %v1829 = vsel %vm633, %v1814, %v1822
      %v1830 = vsel %vm633, %v1818, %v1826
      %1835 = vrot.lane.b32.xlu0 %v1827, 33
      %v1836 = vpop.permute.xlu0 %1835
      %1837 = vrot.lane.b32.xlu0 %v1828, 33
      %v1838 = vpop.permute.xlu0 %1837
      %1839 = vrot.lane.b32.xlu0 %v1829, 33
      %v1840 = vpop.permute.xlu0 %1839
      %1841 = vrot.lane.b32.xlu0 %v1830, 33
      %v1842 = vpop.permute.xlu0 %1841
      %v1843 = vsel %vm273, %v1836, %v1838
      %v1844 = vsel %vm273, %v1840, %v1842
      %v1851 = vmul.f32 %v1041, %v1836
      %v1852 = vmul.f32 %v1042, %v1843
      %v1853 = vmul.f32 %v1043, %v1838
      %v1854 = vmul.f32 %v1044, %v1840
      %v1855 = vmul.f32 %v1045, %v1844
      %v1856 = vmul.f32 %v1046, %v1842
      %1863 = vrot.lane.b32.xlu0 %v1851, 109
      %v1864 = vpop.permute.xlu0 %1863
      %1865 = vrot.lane.b32.xlu0 %v1852, 109
      %v1866 = vpop.permute.xlu0 %1865
      %1867 = vrot.lane.b32.xlu0 %v1853, 109
      %v1868 = vpop.permute.xlu0 %1867
      %1869 = vrot.lane.b32.xlu0 %v1854, 109
      %v1870 = vpop.permute.xlu0 %1869
      %1871 = vrot.lane.b32.xlu0 %v1855, 109
      %v1872 = vpop.permute.xlu0 %1871
      %1873 = vrot.lane.b32.xlu0 %v1856, 109
      %v1874 = vpop.permute.xlu0 %1873
      %vm1875 = vcmask 891904
      %v1876 = vsel %vm1875, %v1864, %v1866
      %v1877 = vsel %vm1875, %v1866, %v1868
      %v1878 = vsel %vm1875, %v1870, %v1872
      %v1879 = vsel %vm1875, %v1872, %v1874
      %v1886 = vadd.f32 %v1789, %v1876
      %v1887 = vadd.f32 %v1790, %v1877
      %v1888 = vadd.f32 %v1791, %v1868
      %v1889 = vadd.f32 %v1792, %v1878
      %v1890 = vadd.f32 %v1793, %v1879
      %v1891 = vadd.f32 %v1794, %v1874
      %v1892 = vlaneseq
      %v1893 = vshrl.u32 %v1892, 7
      %v1894 = vsub.s32 1, %v1893
      %v1895 = vrot.slane %v825, %v1894
      %v1896 = vlaneseq
      %v1897 = vshrl.u32 %v1896, 7
      %v1898 = vsub.s32 1, %v1897
      %v1899 = vrot.slane %v826, %v1898
      %v1900 = vlaneseq
      %v1901 = vshrl.u32 %v1900, 7
      %v1902 = vsub.s32 1, %v1901
      %v1903 = vrot.slane %v895, %v1902
      %v1904 = vlaneseq
      %v1905 = vshrl.u32 %v1904, 7
      %v1906 = vsub.s32 1, %v1905
      %v1907 = vrot.slane %v896, %v1906
      %v1908 = vlaneseq
      %v1909 = vshrl.u32 %v1908, 7
      %v1910 = vsub.s32 1, %v1909
      %v1911 = vrot.slane %v965, %v1910
      %v1912 = vlaneseq
      %v1913 = vshrl.u32 %v1912, 7
      %v1914 = vsub.s32 1, %v1913
      %v1915 = vrot.slane %v966, %v1914
      %v1916 = vlaneseq
      %v1917 = vshrl.u32 %v1916, 7
      %v1918 = vsub.s32 1, %v1917
      %v1919 = vrot.slane %v1035, %v1918
      %v1920 = vlaneseq
      %v1921 = vshrl.u32 %v1920, 7
      %v1922 = vsub.s32 1, %v1921
      %v1923 = vrot.slane %v1036, %v1922
      %v1924 = vsel %vm633, %v1895, %v1903
      %v1925 = vsel %vm633, %v1899, %v1907
      %v1926 = vsel %vm633, %v1911, %v1919
      %v1927 = vsel %vm633, %v1915, %v1923
      %1932 = vrot.lane.b32.xlu0 %v1924, 34
      %v1933 = vpop.permute.xlu0 %1932
      %1934 = vrot.lane.b32.xlu0 %v1925, 34
      %v1935 = vpop.permute.xlu0 %1934
      %1936 = vrot.lane.b32.xlu0 %v1926, 34
      %v1937 = vpop.permute.xlu0 %1936
      %1938 = vrot.lane.b32.xlu0 %v1927, 34
      %v1939 = vpop.permute.xlu0 %1938
      %vm1940 = vcmask 277504
      %v1941 = vsel %vm1940, %v1933, %v1935
      %v1942 = vsel %vm1940, %v1937, %v1939
      %v1949 = vmul.f32 %v1041, %v1933
      %v1950 = vmul.f32 %v1042, %v1941
      %v1951 = vmul.f32 %v1043, %v1935
      %v1952 = vmul.f32 %v1044, %v1937
      %v1953 = vmul.f32 %v1045, %v1942
      %v1954 = vmul.f32 %v1046, %v1939
      %1961 = vrot.lane.b32.xlu0 %v1949, 108
      %v1962 = vpop.permute.xlu0 %1961
      %1963 = vrot.lane.b32.xlu0 %v1950, 108
      %v1964 = vpop.permute.xlu0 %1963
      %1965 = vrot.lane.b32.xlu0 %v1951, 108
      %v1966 = vpop.permute.xlu0 %1965
      %1967 = vrot.lane.b32.xlu0 %v1952, 108
      %v1968 = vpop.permute.xlu0 %1967
      %1969 = vrot.lane.b32.xlu0 %v1953, 108
      %v1970 = vpop.permute.xlu0 %1969
      %1971 = vrot.lane.b32.xlu0 %v1954, 108
      %v1972 = vpop.permute.xlu0 %1971
      %vm1973 = vcmask 883712
      %v1974 = vsel %vm1973, %v1962, %v1964
      %v1975 = vsel %vm1973, %v1964, %v1966
      %v1976 = vsel %vm1973, %v1968, %v1970
      %v1977 = vsel %vm1973, %v1970, %v1972
      %v1984 = vadd.f32 %v1886, %v1974
      %v1985 = vadd.f32 %v1887, %v1975
      %v1986 = vadd.f32 %v1888, %v1966
      %v1987 = vadd.f32 %v1889, %v1976
      %v1988 = vadd.f32 %v1890, %v1977
      %v1989 = vadd.f32 %v1891, %v1972
      %v1990 = vlaneseq
      %v1991 = vshrl.u32 %v1990, 7
      %v1992 = vsub.s32 2, %v1991
      %v1993 = vrot.slane %v825, %v1992
      %v1994 = vlaneseq
      %v1995 = vshrl.u32 %v1994, 7
      %v1996 = vsub.s32 2, %v1995
      %v1997 = vrot.slane %v826, %v1996
      %v1998 = vlaneseq
      %v1999 = vshrl.u32 %v1998, 7
      %v2000 = vsub.s32 2, %v1999
      %v2001 = vrot.slane %v895, %v2000
      %v2002 = vlaneseq
      %v2003 = vshrl.u32 %v2002, 7
      %v2004 = vsub.s32 2, %v2003
      %v2005 = vrot.slane %v896, %v2004
      %v2006 = vlaneseq
      %v2007 = vshrl.u32 %v2006, 7
      %v2008 = vsub.s32 2, %v2007
      %v2009 = vrot.slane %v965, %v2008
      %v2010 = vlaneseq
      %v2011 = vshrl.u32 %v2010, 7
      %v2012 = vsub.s32 2, %v2011
      %v2013 = vrot.slane %v966, %v2012
      %v2014 = vlaneseq
      %v2015 = vshrl.u32 %v2014, 7
      %v2016 = vsub.s32 2, %v2015
      %v2017 = vrot.slane %v1035, %v2016
      %v2018 = vlaneseq
      %v2019 = vshrl.u32 %v2018, 7
      %v2020 = vsub.s32 2, %v2019
      %v2021 = vrot.slane %v1036, %v2020
      %v2022 = vsel %vm633, %v1993, %v2001
      %v2023 = vsel %vm633, %v1997, %v2005
      %v2024 = vsel %vm633, %v2009, %v2017
      %v2025 = vsel %vm633, %v2013, %v2021
      %2030 = vrot.lane.b32.xlu0 %v2022, 46
      %v2031 = vpop.permute.xlu0 %2030
      %2032 = vrot.lane.b32.xlu0 %v2023, 46
      %v2033 = vpop.permute.xlu0 %2032
      %2034 = vrot.lane.b32.xlu0 %v2024, 46
      %v2035 = vpop.permute.xlu0 %2034
      %2036 = vrot.lane.b32.xlu0 %v2025, 46
      %v2037 = vpop.permute.xlu0 %2036
      %vm2038 = vcmask 375808
      %v2039 = vsel %vm2038, %v2031, %v2033
      %v2040 = vsel %vm2038, %v2035, %v2037
      %v2047 = vmul.f32 %v1041, %v2031
      %v2048 = vmul.f32 %v1042, %v2039
      %v2049 = vmul.f32 %v1043, %v2033
      %v2050 = vmul.f32 %v1044, %v2035
      %v2051 = vmul.f32 %v1045, %v2040
      %v2052 = vmul.f32 %v1046, %v2037
      %2059 = vrot.lane.b32.xlu0 %v2047, 96
      %v2060 = vpop.permute.xlu0 %2059
      %2061 = vrot.lane.b32.xlu0 %v2048, 96
      %v2062 = vpop.permute.xlu0 %2061
      %2063 = vrot.lane.b32.xlu0 %v2049, 96
      %v2064 = vpop.permute.xlu0 %2063
      %2065 = vrot.lane.b32.xlu0 %v2050, 96
      %v2066 = vpop.permute.xlu0 %2065
      %2067 = vrot.lane.b32.xlu0 %v2051, 96
      %v2068 = vpop.permute.xlu0 %2067
      %2069 = vrot.lane.b32.xlu0 %v2052, 96
      %v2070 = vpop.permute.xlu0 %2069
      %v2071 = vsel %vm437, %v2060, %v2062
      %v2072 = vsel %vm437, %v2062, %v2064
      %v2073 = vsel %vm437, %v2066, %v2068
      %v2074 = vsel %vm437, %v2068, %v2070
      %v2081 = vadd.f32 %v1984, %v2071
      %v2082 = vadd.f32 %v1985, %v2072
      %v2083 = vadd.f32 %v1986, %v2064
      %v2084 = vadd.f32 %v1987, %v2073
      %v2085 = vadd.f32 %v1988, %v2074
      %v2086 = vadd.f32 %v1989, %v2070
      %v2087 = vlaneseq
      %v2088 = vshrl.u32 %v2087, 7
      %v2089 = vsub.s32 3, %v2088
      %v2090 = vrot.slane %v825, %v2089
      %v2091 = vlaneseq
      %v2092 = vshrl.u32 %v2091, 7
      %v2093 = vsub.s32 3, %v2092
      %v2094 = vrot.slane %v826, %v2093
      %v2095 = vlaneseq
      %v2096 = vshrl.u32 %v2095, 7
      %v2097 = vsub.s32 3, %v2096
      %v2098 = vrot.slane %v895, %v2097
      %v2099 = vlaneseq
      %v2100 = vshrl.u32 %v2099, 7
      %v2101 = vsub.s32 3, %v2100
      %v2102 = vrot.slane %v896, %v2101
      %v2103 = vlaneseq
      %v2104 = vshrl.u32 %v2103, 7
      %v2105 = vsub.s32 3, %v2104
      %v2106 = vrot.slane %v965, %v2105
      %v2107 = vlaneseq
      %v2108 = vshrl.u32 %v2107, 7
      %v2109 = vsub.s32 3, %v2108
      %v2110 = vrot.slane %v966, %v2109
      %v2111 = vlaneseq
      %v2112 = vshrl.u32 %v2111, 7
      %v2113 = vsub.s32 3, %v2112
      %v2114 = vrot.slane %v1035, %v2113
      %v2115 = vlaneseq
      %v2116 = vshrl.u32 %v2115, 7
      %v2117 = vsub.s32 3, %v2116
      %v2118 = vrot.slane %v1036, %v2117
      %v2119 = vsel %vm633, %v2090, %v2098
      %v2120 = vsel %vm633, %v2094, %v2102
      %v2121 = vsel %vm633, %v2106, %v2114
      %v2122 = vsel %vm633, %v2110, %v2118
      %2127 = vrot.lane.b32.xlu0 %v2119, 47
      %v2128 = vpop.permute.xlu0 %2127
      %2129 = vrot.lane.b32.xlu0 %v2120, 47
      %v2130 = vpop.permute.xlu0 %2129
      %2131 = vrot.lane.b32.xlu0 %v2121, 47
      %v2132 = vpop.permute.xlu0 %2131
      %2133 = vrot.lane.b32.xlu0 %v2122, 47
      %v2134 = vpop.permute.xlu0 %2133
      %v2135 = vsel %vm285, %v2128, %v2130
      %v2136 = vsel %vm285, %v2132, %v2134
      %v2143 = vmul.f32 %v1041, %v2128
      %v2144 = vmul.f32 %v1042, %v2135
      %v2145 = vmul.f32 %v1043, %v2130
      %v2146 = vmul.f32 %v1044, %v2132
      %v2147 = vmul.f32 %v1045, %v2136
      %v2148 = vmul.f32 %v1046, %v2134
      %2155 = vrot.lane.b32.xlu0 %v2143, 95
      %v2156 = vpop.permute.xlu0 %2155
      %2157 = vrot.lane.b32.xlu0 %v2144, 95
      %v2158 = vpop.permute.xlu0 %2157
      %2159 = vrot.lane.b32.xlu0 %v2145, 95
      %v2160 = vpop.permute.xlu0 %2159
      %2161 = vrot.lane.b32.xlu0 %v2146, 95
      %v2162 = vpop.permute.xlu0 %2161
      %2163 = vrot.lane.b32.xlu0 %v2147, 95
      %v2164 = vpop.permute.xlu0 %2163
      %2165 = vrot.lane.b32.xlu0 %v2148, 95
      %v2166 = vpop.permute.xlu0 %2165
      %v2167 = vsel %vm452, %v2156, %v2158
      %v2168 = vsel %vm452, %v2158, %v2160
      %v2169 = vsel %vm452, %v2162, %v2164
      %v2170 = vsel %vm452, %v2164, %v2166
      %v2177 = vadd.f32 %v2081, %v2167
      %v2178 = vadd.f32 %v2082, %v2168
      %v2179 = vadd.f32 %v2083, %v2160
      %v2180 = vadd.f32 %v2084, %v2169
      %v2181 = vadd.f32 %v2085, %v2170
      %v2182 = vadd.f32 %v2086, %v2166
      %v2183 = vlaneseq
      %v2184 = vshrl.u32 %v2183, 7
      %v2185 = vsub.s32 4, %v2184
      %v2186 = vrot.slane %v825, %v2185
      %v2187 = vlaneseq
      %v2188 = vshrl.u32 %v2187, 7
      %v2189 = vsub.s32 4, %v2188
      %v2190 = vrot.slane %v826, %v2189
      %v2191 = vlaneseq
      %v2192 = vshrl.u32 %v2191, 7
      %v2193 = vsub.s32 4, %v2192
      %v2194 = vrot.slane %v895, %v2193
      %v2195 = vlaneseq
      %v2196 = vshrl.u32 %v2195, 7
      %v2197 = vsub.s32 4, %v2196
      %v2198 = vrot.slane %v896, %v2197
      %v2199 = vlaneseq
      %v2200 = vshrl.u32 %v2199, 7
      %v2201 = vsub.s32 4, %v2200
      %v2202 = vrot.slane %v965, %v2201
      %v2203 = vlaneseq
      %v2204 = vshrl.u32 %v2203, 7
      %v2205 = vsub.s32 4, %v2204
      %v2206 = vrot.slane %v966, %v2205
      %v2207 = vlaneseq
      %v2208 = vshrl.u32 %v2207, 7
      %v2209 = vsub.s32 4, %v2208
      %v2210 = vrot.slane %v1035, %v2209
      %v2211 = vlaneseq
      %v2212 = vshrl.u32 %v2211, 7
      %v2213 = vsub.s32 4, %v2212
      %v2214 = vrot.slane %v1036, %v2213
      %v2215 = vsel %vm633, %v2186, %v2194
      %v2216 = vsel %vm633, %v2190, %v2198
      %v2217 = vsel %vm633, %v2202, %v2210
      %v2218 = vsel %vm633, %v2206, %v2214
      %2223 = vrot.lane.b32.xlu0 %v2215, 48
      %v2224 = vpop.permute.xlu0 %2223
      %2225 = vrot.lane.b32.xlu0 %v2216, 48
      %v2226 = vpop.permute.xlu0 %2225
      %2227 = vrot.lane.b32.xlu0 %v2217, 48
      %v2228 = vpop.permute.xlu0 %2227
      %2229 = vrot.lane.b32.xlu0 %v2218, 48
      %v2230 = vpop.permute.xlu0 %2229
      %v2231 = vsel %vm297, %v2224, %v2226
      %v2232 = vsel %vm297, %v2228, %v2230
      %v2239 = vmul.f32 %v1041, %v2224
      %v2240 = vmul.f32 %v1042, %v2231
      %v2241 = vmul.f32 %v1043, %v2226
      %v2242 = vmul.f32 %v1044, %v2228
      %v2243 = vmul.f32 %v1045, %v2232
      %v2244 = vmul.f32 %v1046, %v2230
      %2251 = vrot.lane.b32.xlu0 %v2239, 94
      %v2252 = vpop.permute.xlu0 %2251
      %2253 = vrot.lane.b32.xlu0 %v2240, 94
      %v2254 = vpop.permute.xlu0 %2253
      %2255 = vrot.lane.b32.xlu0 %v2241, 94
      %v2256 = vpop.permute.xlu0 %2255
      %2257 = vrot.lane.b32.xlu0 %v2242, 94
      %v2258 = vpop.permute.xlu0 %2257
      %2259 = vrot.lane.b32.xlu0 %v2243, 94
      %v2260 = vpop.permute.xlu0 %2259
      %2261 = vrot.lane.b32.xlu0 %v2244, 94
      %v2262 = vpop.permute.xlu0 %2261
      %v2263 = vsel %vm467, %v2252, %v2254
      %v2264 = vsel %vm467, %v2254, %v2256
      %v2265 = vsel %vm467, %v2258, %v2260
      %v2266 = vsel %vm467, %v2260, %v2262
      %v2273 = vadd.f32 %v2177, %v2263
      %v2274 = vadd.f32 %v2178, %v2264
      %v2275 = vadd.f32 %v2179, %v2256
      %v2276 = vadd.f32 %v2180, %v2265
      %v2277 = vadd.f32 %v2181, %v2266
      %v2278 = vadd.f32 %v2182, %v2262
      %v2279 = vlaneseq
      %v2280 = vshrl.u32 %v2279, 7
      %v2281 = vsub.s32 5, %v2280
      %v2282 = vrot.slane %v825, %v2281
      %v2283 = vlaneseq
      %v2284 = vshrl.u32 %v2283, 7
      %v2285 = vsub.s32 5, %v2284
      %v2286 = vrot.slane %v826, %v2285
      %v2287 = vlaneseq
      %v2288 = vshrl.u32 %v2287, 7
      %v2289 = vsub.s32 5, %v2288
      %v2290 = vrot.slane %v895, %v2289
      %v2291 = vlaneseq
      %v2292 = vshrl.u32 %v2291, 7
      %v2293 = vsub.s32 5, %v2292
      %v2294 = vrot.slane %v896, %v2293
      %v2295 = vlaneseq
      %v2296 = vshrl.u32 %v2295, 7
      %v2297 = vsub.s32 5, %v2296
      %v2298 = vrot.slane %v965, %v2297
      %v2299 = vlaneseq
      %v2300 = vshrl.u32 %v2299, 7
      %v2301 = vsub.s32 5, %v2300
      %v2302 = vrot.slane %v966, %v2301
      %v2303 = vlaneseq
      %v2304 = vshrl.u32 %v2303, 7
      %v2305 = vsub.s32 5, %v2304
      %v2306 = vrot.slane %v1035, %v2305
      %v2307 = vlaneseq
      %v2308 = vshrl.u32 %v2307, 7
      %v2309 = vsub.s32 5, %v2308
      %v2310 = vrot.slane %v1036, %v2309
      %v2311 = vsel %vm633, %v2282, %v2290
      %v2312 = vsel %vm633, %v2286, %v2294
      %v2313 = vsel %vm633, %v2298, %v2306
      %v2314 = vsel %vm633, %v2302, %v2310
      %2319 = vrot.lane.b32.xlu0 %v2311, 49
      %v2320 = vpop.permute.xlu0 %2319
      %2321 = vrot.lane.b32.xlu0 %v2312, 49
      %v2322 = vpop.permute.xlu0 %2321
      %2323 = vrot.lane.b32.xlu0 %v2313, 49
      %v2324 = vpop.permute.xlu0 %2323
      %2325 = vrot.lane.b32.xlu0 %v2314, 49
      %v2326 = vpop.permute.xlu0 %2325
      %v2327 = vsel %vm309, %v2320, %v2322
      %v2328 = vsel %vm309, %v2324, %v2326
      %v2335 = vmul.f32 %v1041, %v2320
      %v2336 = vmul.f32 %v1042, %v2327
      %v2337 = vmul.f32 %v1043, %v2322
      %v2338 = vmul.f32 %v1044, %v2324
      %v2339 = vmul.f32 %v1045, %v2328
      %v2340 = vmul.f32 %v1046, %v2326
      %2347 = vrot.lane.b32.xlu0 %v2335, 93
      %v2348 = vpop.permute.xlu0 %2347
      %2349 = vrot.lane.b32.xlu0 %v2336, 93
      %v2350 = vpop.permute.xlu0 %2349
      %2351 = vrot.lane.b32.xlu0 %v2337, 93
      %v2352 = vpop.permute.xlu0 %2351
      %2353 = vrot.lane.b32.xlu0 %v2338, 93
      %v2354 = vpop.permute.xlu0 %2353
      %2355 = vrot.lane.b32.xlu0 %v2339, 93
      %v2356 = vpop.permute.xlu0 %2355
      %2357 = vrot.lane.b32.xlu0 %v2340, 93
      %v2358 = vpop.permute.xlu0 %2357
      %vm2359 = vcmask 760832
      %v2360 = vsel %vm2359, %v2348, %v2350
      %v2361 = vsel %vm2359, %v2350, %v2352
      %v2362 = vsel %vm2359, %v2354, %v2356
      %v2363 = vsel %vm2359, %v2356, %v2358
      %v2370 = vadd.f32 %v2273, %v2360
      %v2371 = vadd.f32 %v2274, %v2361
      %v2372 = vadd.f32 %v2275, %v2352
      %v2373 = vadd.f32 %v2276, %v2362
      %v2374 = vadd.f32 %v2277, %v2363
      %v2375 = vadd.f32 %v2278, %v2358
      %v2376 = vlaneseq
      %v2377 = vshrl.u32 %v2376, 7
      %v2378 = vsub.s32 6, %v2377
      %v2379 = vrot.slane %v825, %v2378
      %v2380 = vlaneseq
      %v2381 = vshrl.u32 %v2380, 7
      %v2382 = vsub.s32 6, %v2381
      %v2383 = vrot.slane %v826, %v2382
      %v2384 = vlaneseq
      %v2385 = vshrl.u32 %v2384, 7
      %v2386 = vsub.s32 6, %v2385
      %v2387 = vrot.slane %v895, %v2386
      %v2388 = vlaneseq
      %v2389 = vshrl.u32 %v2388, 7
      %v2390 = vsub.s32 6, %v2389
      %v2391 = vrot.slane %v896, %v2390
      %v2392 = vlaneseq
      %v2393 = vshrl.u32 %v2392, 7
      %v2394 = vsub.s32 6, %v2393
      %v2395 = vrot.slane %v965, %v2394
      %v2396 = vlaneseq
      %v2397 = vshrl.u32 %v2396, 7
      %v2398 = vsub.s32 6, %v2397
      %v2399 = vrot.slane %v966, %v2398
      %v2400 = vlaneseq
      %v2401 = vshrl.u32 %v2400, 7
      %v2402 = vsub.s32 6, %v2401
      %v2403 = vrot.slane %v1035, %v2402
      %v2404 = vlaneseq
      %v2405 = vshrl.u32 %v2404, 7
      %v2406 = vsub.s32 6, %v2405
      %v2407 = vrot.slane %v1036, %v2406
      %v2408 = vsel %vm633, %v2379, %v2387
      %v2409 = vsel %vm633, %v2383, %v2391
      %v2410 = vsel %vm633, %v2395, %v2403
      %v2411 = vsel %vm633, %v2399, %v2407
      %2416 = vrot.lane.b32.xlu0 %v2408, 50
      %v2417 = vpop.permute.xlu0 %2416
      %2418 = vrot.lane.b32.xlu0 %v2409, 50
      %v2419 = vpop.permute.xlu0 %2418
      %2420 = vrot.lane.b32.xlu0 %v2410, 50
      %v2421 = vpop.permute.xlu0 %2420
      %2422 = vrot.lane.b32.xlu0 %v2411, 50
      %v2423 = vpop.permute.xlu0 %2422
      %vm2424 = vcmask 408576
      %v2425 = vsel %vm2424, %v2417, %v2419
      %v2426 = vsel %vm2424, %v2421, %v2423
      %v2433 = vmul.f32 %v1041, %v2417
      %v2434 = vmul.f32 %v1042, %v2425
      %v2435 = vmul.f32 %v1043, %v2419
      %v2436 = vmul.f32 %v1044, %v2421
      %v2437 = vmul.f32 %v1045, %v2426
      %v2438 = vmul.f32 %v1046, %v2423
      %2445 = vrot.lane.b32.xlu0 %v2433, 92
      %v2446 = vpop.permute.xlu0 %2445
      %2447 = vrot.lane.b32.xlu0 %v2434, 92
      %v2448 = vpop.permute.xlu0 %2447
      %2449 = vrot.lane.b32.xlu0 %v2435, 92
      %v2450 = vpop.permute.xlu0 %2449
      %2451 = vrot.lane.b32.xlu0 %v2436, 92
      %v2452 = vpop.permute.xlu0 %2451
      %2453 = vrot.lane.b32.xlu0 %v2437, 92
      %v2454 = vpop.permute.xlu0 %2453
      %2455 = vrot.lane.b32.xlu0 %v2438, 92
      %v2456 = vpop.permute.xlu0 %2455
      %vm2457 = vcmask 752640
      %v2458 = vsel %vm2457, %v2446, %v2448
      %v2459 = vsel %vm2457, %v2448, %v2450
      %v2460 = vsel %vm2457, %v2452, %v2454
      %v2461 = vsel %vm2457, %v2454, %v2456
      %v2468 = vadd.f32 %v2370, %v2458
      %v2469 = vadd.f32 %v2371, %v2459
      %v2470 = vadd.f32 %v2372, %v2450
      %v2471 = vadd.f32 %v2373, %v2460
      %v2472 = vadd.f32 %v2374, %v2461
      %v2473 = vadd.f32 %v2375, %v2456
      %v2474 = vlaneseq
      %v2475 = vshrl.u32 %v2474, 7
      %v2476 = vsub.s32 7, %v2475
      %v2477 = vrot.slane %v825, %v2476
      %v2478 = vlaneseq
      %v2479 = vshrl.u32 %v2478, 7
      %v2480 = vsub.s32 7, %v2479
      %v2481 = vrot.slane %v826, %v2480
      %v2482 = vlaneseq
      %v2483 = vshrl.u32 %v2482, 7
      %v2484 = vsub.s32 7, %v2483
      %v2485 = vrot.slane %v895, %v2484
      %v2486 = vlaneseq
      %v2487 = vshrl.u32 %v2486, 7
      %v2488 = vsub.s32 7, %v2487
      %v2489 = vrot.slane %v896, %v2488
      %v2490 = vlaneseq
      %v2491 = vshrl.u32 %v2490, 7
      %v2492 = vsub.s32 7, %v2491
      %v2493 = vrot.slane %v965, %v2492
      %v2494 = vlaneseq
      %v2495 = vshrl.u32 %v2494, 7
      %v2496 = vsub.s32 7, %v2495
      %v2497 = vrot.slane %v966, %v2496
      %v2498 = vlaneseq
      %v2499 = vshrl.u32 %v2498, 7
      %v2500 = vsub.s32 7, %v2499
      %v2501 = vrot.slane %v1035, %v2500
      %v2502 = vlaneseq
      %v2503 = vshrl.u32 %v2502, 7
      %v2504 = vsub.s32 7, %v2503
      %v2505 = vrot.slane %v1036, %v2504
      %v2506 = vsel %vm633, %v2477, %v2485
      %v2507 = vsel %vm633, %v2481, %v2489
      %v2508 = vsel %vm633, %v2493, %v2501
      %v2509 = vsel %vm633, %v2497, %v2505
      %2514 = vrot.lane.b32.xlu0 %v2506, 62
      %v2515 = vpop.permute.xlu0 %2514
      %2516 = vrot.lane.b32.xlu0 %v2507, 62
      %v2517 = vpop.permute.xlu0 %2516
      %2518 = vrot.lane.b32.xlu0 %v2508, 62
      %v2519 = vpop.permute.xlu0 %2518
      %2520 = vrot.lane.b32.xlu0 %v2509, 62
      %v2521 = vpop.permute.xlu0 %2520
      %vm2522 = vcmask 506880
      %v2523 = vsel %vm2522, %v2515, %v2517
      %v2524 = vsel %vm2522, %v2519, %v2521
      %v2531 = vmul.f32 %v1041, %v2515
      %v2532 = vmul.f32 %v1042, %v2523
      %v2533 = vmul.f32 %v1043, %v2517
      %v2534 = vmul.f32 %v1044, %v2519
      %v2535 = vmul.f32 %v1045, %v2524
      %v2536 = vmul.f32 %v1046, %v2521
      %2543 = vrot.lane.b32.xlu0 %v2531, 80
      %v2544 = vpop.permute.xlu0 %2543
      %2545 = vrot.lane.b32.xlu0 %v2532, 80
      %v2546 = vpop.permute.xlu0 %2545
      %2547 = vrot.lane.b32.xlu0 %v2533, 80
      %v2548 = vpop.permute.xlu0 %2547
      %2549 = vrot.lane.b32.xlu0 %v2534, 80
      %v2550 = vpop.permute.xlu0 %2549
      %2551 = vrot.lane.b32.xlu0 %v2535, 80
      %v2552 = vpop.permute.xlu0 %2551
      %2553 = vrot.lane.b32.xlu0 %v2536, 80
      %v2554 = vpop.permute.xlu0 %2553
      %vm2555 = vcmask 654336
      %v2556 = vsel %vm2555, %v2544, %v2546
      %v2557 = vsel %vm2555, %v2546, %v2548
      %v2558 = vsel %vm2555, %v2550, %v2552
      %v2559 = vsel %vm2555, %v2552, %v2554
      %v2566 = vadd.f32 %v2468, %v2556
      %v2567 = vadd.f32 %v2469, %v2557
      %v2568 = vadd.f32 %v2470, %v2548
      %v2569 = vadd.f32 %v2471, %v2558
      %v2570 = vadd.f32 %v2472, %v2559
      %v2571 = vadd.f32 %v2473, %v2554
      %v2572 = vlaneseq
      %v2573 = vshrl.u32 %v2572, 7
      %v2574 = vsub.s32 0, %v2573
      %v2575 = vrot.slane %v827, %v2574
      %v2576 = vlaneseq
      %v2577 = vshrl.u32 %v2576, 7
      %v2578 = vsub.s32 0, %v2577
      %v2579 = vrot.slane %v828, %v2578
      %v2580 = vlaneseq
      %v2581 = vshrl.u32 %v2580, 7
      %v2582 = vsub.s32 0, %v2581
      %v2583 = vrot.slane %v897, %v2582
      %v2584 = vlaneseq
      %v2585 = vshrl.u32 %v2584, 7
      %v2586 = vsub.s32 0, %v2585
      %v2587 = vrot.slane %v898, %v2586
      %v2588 = vlaneseq
      %v2589 = vshrl.u32 %v2588, 7
      %v2590 = vsub.s32 0, %v2589
      %v2591 = vrot.slane %v967, %v2590
      %v2592 = vlaneseq
      %v2593 = vshrl.u32 %v2592, 7
      %v2594 = vsub.s32 0, %v2593
      %v2595 = vrot.slane %v968, %v2594
      %v2596 = vlaneseq
      %v2597 = vshrl.u32 %v2596, 7
      %v2598 = vsub.s32 0, %v2597
      %v2599 = vrot.slane %v1037, %v2598
      %v2600 = vlaneseq
      %v2601 = vshrl.u32 %v2600, 7
      %v2602 = vsub.s32 0, %v2601
      %v2603 = vrot.slane %v1038, %v2602
      %v2604 = vsel %vm633, %v2575, %v2583
      %v2605 = vsel %vm633, %v2579, %v2587
      %v2606 = vsel %vm633, %v2591, %v2599
      %v2607 = vsel %vm633, %v2595, %v2603
      %2612 = vrot.lane.b32.xlu0 %v2604, 63
      %v2613 = vpop.permute.xlu0 %2612
      %2614 = vrot.lane.b32.xlu0 %v2605, 63
      %v2615 = vpop.permute.xlu0 %2614
      %2616 = vrot.lane.b32.xlu0 %v2606, 63
      %v2617 = vpop.permute.xlu0 %2616
      %2618 = vrot.lane.b32.xlu0 %v2607, 63
      %v2619 = vpop.permute.xlu0 %2618
      %v2620 = vsel %vm321, %v2613, %v2615
      %v2621 = vsel %vm321, %v2617, %v2619
      %v2628 = vmul.f32 %v1041, %v2613
      %v2629 = vmul.f32 %v1042, %v2620
      %v2630 = vmul.f32 %v1043, %v2615
      %v2631 = vmul.f32 %v1044, %v2617
      %v2632 = vmul.f32 %v1045, %v2621
      %v2633 = vmul.f32 %v1046, %v2619
      %2640 = vrot.lane.b32.xlu0 %v2628, 79
      %v2641 = vpop.permute.xlu0 %2640
      %2642 = vrot.lane.b32.xlu0 %v2629, 79
      %v2643 = vpop.permute.xlu0 %2642
      %2644 = vrot.lane.b32.xlu0 %v2630, 79
      %v2645 = vpop.permute.xlu0 %2644
      %2646 = vrot.lane.b32.xlu0 %v2631, 79
      %v2647 = vpop.permute.xlu0 %2646
      %2648 = vrot.lane.b32.xlu0 %v2632, 79
      %v2649 = vpop.permute.xlu0 %2648
      %2650 = vrot.lane.b32.xlu0 %v2633, 79
      %v2651 = vpop.permute.xlu0 %2650
      %vm2652 = vcmask 646144
      %v2653 = vsel %vm2652, %v2641, %v2643
      %v2654 = vsel %vm2652, %v2643, %v2645
      %v2655 = vsel %vm2652, %v2647, %v2649
      %v2656 = vsel %vm2652, %v2649, %v2651
      %v2663 = vadd.f32 %v2566, %v2653
      %v2664 = vadd.f32 %v2567, %v2654
      %v2665 = vadd.f32 %v2568, %v2645
      %v2666 = vadd.f32 %v2569, %v2655
      %v2667 = vadd.f32 %v2570, %v2656
      %v2668 = vadd.f32 %v2571, %v2651
      %v2669 = vlaneseq
      %v2670 = vshrl.u32 %v2669, 7
      %v2671 = vsub.s32 1, %v2670
      %v2672 = vrot.slane %v827, %v2671
      %v2673 = vlaneseq
      %v2674 = vshrl.u32 %v2673, 7
      %v2675 = vsub.s32 1, %v2674
      %v2676 = vrot.slane %v828, %v2675
      %v2677 = vlaneseq
      %v2678 = vshrl.u32 %v2677, 7
      %v2679 = vsub.s32 1, %v2678
      %v2680 = vrot.slane %v897, %v2679
      %v2681 = vlaneseq
      %v2682 = vshrl.u32 %v2681, 7
      %v2683 = vsub.s32 1, %v2682
      %v2684 = vrot.slane %v898, %v2683
      %v2685 = vlaneseq
      %v2686 = vshrl.u32 %v2685, 7
      %v2687 = vsub.s32 1, %v2686
      %v2688 = vrot.slane %v967, %v2687
      %v2689 = vlaneseq
      %v2690 = vshrl.u32 %v2689, 7
      %v2691 = vsub.s32 1, %v2690
      %v2692 = vrot.slane %v968, %v2691
      %v2693 = vlaneseq
      %v2694 = vshrl.u32 %v2693, 7
      %v2695 = vsub.s32 1, %v2694
      %v2696 = vrot.slane %v1037, %v2695
      %v2697 = vlaneseq
      %v2698 = vshrl.u32 %v2697, 7
      %v2699 = vsub.s32 1, %v2698
      %v2700 = vrot.slane %v1038, %v2699
      %v2701 = vsel %vm633, %v2672, %v2680
      %v2702 = vsel %vm633, %v2676, %v2684
      %v2703 = vsel %vm633, %v2688, %v2696
      %v2704 = vsel %vm633, %v2692, %v2700
      %2709 = vrot.lane.b32.xlu0 %v2701, 64
      %v2710 = vpop.permute.xlu0 %2709
      %2711 = vrot.lane.b32.xlu0 %v2702, 64
      %v2712 = vpop.permute.xlu0 %2711
      %2713 = vrot.lane.b32.xlu0 %v2703, 64
      %v2714 = vpop.permute.xlu0 %2713
      %2715 = vrot.lane.b32.xlu0 %v2704, 64
      %v2716 = vpop.permute.xlu0 %2715
      %v2717 = vsel %vm333, %v2710, %v2712
      %v2718 = vsel %vm333, %v2714, %v2716
      %v2725 = vmul.f32 %v1041, %v2710
      %v2726 = vmul.f32 %v1042, %v2717
      %v2727 = vmul.f32 %v1043, %v2712
      %v2728 = vmul.f32 %v1044, %v2714
      %v2729 = vmul.f32 %v1045, %v2718
      %v2730 = vmul.f32 %v1046, %v2716
      %2737 = vrot.lane.b32.xlu0 %v2725, 78
      %v2738 = vpop.permute.xlu0 %2737
      %2739 = vrot.lane.b32.xlu0 %v2726, 78
      %v2740 = vpop.permute.xlu0 %2739
      %2741 = vrot.lane.b32.xlu0 %v2727, 78
      %v2742 = vpop.permute.xlu0 %2741
      %2743 = vrot.lane.b32.xlu0 %v2728, 78
      %v2744 = vpop.permute.xlu0 %2743
      %2745 = vrot.lane.b32.xlu0 %v2729, 78
      %v2746 = vpop.permute.xlu0 %2745
      %2747 = vrot.lane.b32.xlu0 %v2730, 78
      %v2748 = vpop.permute.xlu0 %2747
      %vm2749 = vcmask 637952
      %v2750 = vsel %vm2749, %v2738, %v2740
      %v2751 = vsel %vm2749, %v2740, %v2742
      %v2752 = vsel %vm2749, %v2744, %v2746
      %v2753 = vsel %vm2749, %v2746, %v2748
      %v2760 = vadd.f32 %v2663, %v2750
      %v2761 = vadd.f32 %v2664, %v2751
      %v2762 = vadd.f32 %v2665, %v2742
      %v2763 = vadd.f32 %v2666, %v2752
      %v2764 = vadd.f32 %v2667, %v2753
      %v2765 = vadd.f32 %v2668, %v2748
      %v2766 = vlaneseq
      %v2767 = vshrl.u32 %v2766, 7
      %v2768 = vsub.s32 2, %v2767
      %v2769 = vrot.slane %v827, %v2768
      %v2770 = vlaneseq
      %v2771 = vshrl.u32 %v2770, 7
      %v2772 = vsub.s32 2, %v2771
      %v2773 = vrot.slane %v828, %v2772
      %v2774 = vlaneseq
      %v2775 = vshrl.u32 %v2774, 7
      %v2776 = vsub.s32 2, %v2775
      %v2777 = vrot.slane %v897, %v2776
      %v2778 = vlaneseq
      %v2779 = vshrl.u32 %v2778, 7
      %v2780 = vsub.s32 2, %v2779
      %v2781 = vrot.slane %v898, %v2780
      %v2782 = vlaneseq
      %v2783 = vshrl.u32 %v2782, 7
      %v2784 = vsub.s32 2, %v2783
      %v2785 = vrot.slane %v967, %v2784
      %v2786 = vlaneseq
      %v2787 = vshrl.u32 %v2786, 7
      %v2788 = vsub.s32 2, %v2787
      %v2789 = vrot.slane %v968, %v2788
      %v2790 = vlaneseq
      %v2791 = vshrl.u32 %v2790, 7
      %v2792 = vsub.s32 2, %v2791
      %v2793 = vrot.slane %v1037, %v2792
      %v2794 = vlaneseq
      %v2795 = vshrl.u32 %v2794, 7
      %v2796 = vsub.s32 2, %v2795
      %v2797 = vrot.slane %v1038, %v2796
      %v2798 = vsel %vm633, %v2769, %v2777
      %v2799 = vsel %vm633, %v2773, %v2781
      %v2800 = vsel %vm633, %v2785, %v2793
      %v2801 = vsel %vm633, %v2789, %v2797
      %2806 = vrot.lane.b32.xlu0 %v2798, 65
      %v2807 = vpop.permute.xlu0 %2806
      %2808 = vrot.lane.b32.xlu0 %v2799, 65
      %v2809 = vpop.permute.xlu0 %2808
      %2810 = vrot.lane.b32.xlu0 %v2800, 65
      %v2811 = vpop.permute.xlu0 %2810
      %2812 = vrot.lane.b32.xlu0 %v2801, 65
      %v2813 = vpop.permute.xlu0 %2812
      %v2814 = vsel %vm345, %v2807, %v2809
      %v2815 = vsel %vm345, %v2811, %v2813
      %v2822 = vmul.f32 %v1041, %v2807
      %v2823 = vmul.f32 %v1042, %v2814
      %v2824 = vmul.f32 %v1043, %v2809
      %v2825 = vmul.f32 %v1044, %v2811
      %v2826 = vmul.f32 %v1045, %v2815
      %v2827 = vmul.f32 %v1046, %v2813
      %2834 = vrot.lane.b32.xlu0 %v2822, 77
      %v2835 = vpop.permute.xlu0 %2834
      %2836 = vrot.lane.b32.xlu0 %v2823, 77
      %v2837 = vpop.permute.xlu0 %2836
      %2838 = vrot.lane.b32.xlu0 %v2824, 77
      %v2839 = vpop.permute.xlu0 %2838
      %2840 = vrot.lane.b32.xlu0 %v2825, 77
      %v2841 = vpop.permute.xlu0 %2840
      %2842 = vrot.lane.b32.xlu0 %v2826, 77
      %v2843 = vpop.permute.xlu0 %2842
      %2844 = vrot.lane.b32.xlu0 %v2827, 77
      %v2845 = vpop.permute.xlu0 %2844
      %vm2846 = vcmask 629760
      %v2847 = vsel %vm2846, %v2835, %v2837
      %v2848 = vsel %vm2846, %v2837, %v2839
      %v2849 = vsel %vm2846, %v2841, %v2843
      %v2850 = vsel %vm2846, %v2843, %v2845
      %v2857 = vadd.f32 %v2760, %v2847
      %v2858 = vadd.f32 %v2761, %v2848
      %v2859 = vadd.f32 %v2762, %v2839
      %v2860 = vadd.f32 %v2763, %v2849
      %v2861 = vadd.f32 %v2764, %v2850
      %v2862 = vadd.f32 %v2765, %v2845
      %v2863 = vlaneseq
      %v2864 = vshrl.u32 %v2863, 7
      %v2865 = vsub.s32 3, %v2864
      %v2866 = vrot.slane %v827, %v2865
      %v2867 = vlaneseq
      %v2868 = vshrl.u32 %v2867, 7
      %v2869 = vsub.s32 3, %v2868
      %v2870 = vrot.slane %v828, %v2869
      %v2871 = vlaneseq
      %v2872 = vshrl.u32 %v2871, 7
      %v2873 = vsub.s32 3, %v2872
      %v2874 = vrot.slane %v897, %v2873
      %v2875 = vlaneseq
      %v2876 = vshrl.u32 %v2875, 7
      %v2877 = vsub.s32 3, %v2876
      %v2878 = vrot.slane %v898, %v2877
      %v2879 = vlaneseq
      %v2880 = vshrl.u32 %v2879, 7
      %v2881 = vsub.s32 3, %v2880
      %v2882 = vrot.slane %v967, %v2881
      %v2883 = vlaneseq
      %v2884 = vshrl.u32 %v2883, 7
      %v2885 = vsub.s32 3, %v2884
      %v2886 = vrot.slane %v968, %v2885
      %v2887 = vlaneseq
      %v2888 = vshrl.u32 %v2887, 7
      %v2889 = vsub.s32 3, %v2888
      %v2890 = vrot.slane %v1037, %v2889
      %v2891 = vlaneseq
      %v2892 = vshrl.u32 %v2891, 7
      %v2893 = vsub.s32 3, %v2892
      %v2894 = vrot.slane %v1038, %v2893
      %v2895 = vsel %vm633, %v2866, %v2874
      %v2896 = vsel %vm633, %v2870, %v2878
      %v2897 = vsel %vm633, %v2882, %v2890
      %v2898 = vsel %vm633, %v2886, %v2894
      %2903 = vrot.lane.b32.xlu0 %v2895, 66
      %v2904 = vpop.permute.xlu0 %2903
      %2905 = vrot.lane.b32.xlu0 %v2896, 66
      %v2906 = vpop.permute.xlu0 %2905
      %2907 = vrot.lane.b32.xlu0 %v2897, 66
      %v2908 = vpop.permute.xlu0 %2907
      %2909 = vrot.lane.b32.xlu0 %v2898, 66
      %v2910 = vpop.permute.xlu0 %2909
      %vm2911 = vcmask 539648
      %v2912 = vsel %vm2911, %v2904, %v2906
      %v2913 = vsel %vm2911, %v2908, %v2910
      %v2920 = vmul.f32 %v1041, %v2904
      %v2921 = vmul.f32 %v1042, %v2912
      %v2922 = vmul.f32 %v1043, %v2906
      %v2923 = vmul.f32 %v1044, %v2908
      %v2924 = vmul.f32 %v1045, %v2913
      %v2925 = vmul.f32 %v1046, %v2910
      %2932 = vrot.lane.b32.xlu0 %v2920, 76
      %v2933 = vpop.permute.xlu0 %2932
      %2934 = vrot.lane.b32.xlu0 %v2921, 76
      %v2935 = vpop.permute.xlu0 %2934
      %2936 = vrot.lane.b32.xlu0 %v2922, 76
      %v2937 = vpop.permute.xlu0 %2936
      %2938 = vrot.lane.b32.xlu0 %v2923, 76
      %v2939 = vpop.permute.xlu0 %2938
      %2940 = vrot.lane.b32.xlu0 %v2924, 76
      %v2941 = vpop.permute.xlu0 %2940
      %2942 = vrot.lane.b32.xlu0 %v2925, 76
      %v2943 = vpop.permute.xlu0 %2942
      %vm2944 = vcmask 621568
      %v2945 = vsel %vm2944, %v2933, %v2935
      %v2946 = vsel %vm2944, %v2935, %v2937
      %v2947 = vsel %vm2944, %v2939, %v2941
      %v2948 = vsel %vm2944, %v2941, %v2943
      %v2955 = vadd.f32 %v2857, %v2945
      %v2956 = vadd.f32 %v2858, %v2946
      %v2957 = vadd.f32 %v2859, %v2937
      %v2958 = vadd.f32 %v2860, %v2947
      %v2959 = vadd.f32 %v2861, %v2948
      %v2960 = vadd.f32 %v2862, %v2943
      %v2961 = vlaneseq
      %v2962 = vshrl.u32 %v2961, 7
      %v2963 = vsub.s32 4, %v2962
      %v2964 = vrot.slane %v827, %v2963
      %v2965 = vlaneseq
      %v2966 = vshrl.u32 %v2965, 7
      %v2967 = vsub.s32 4, %v2966
      %v2968 = vrot.slane %v828, %v2967
      %v2969 = vlaneseq
      %v2970 = vshrl.u32 %v2969, 7
      %v2971 = vsub.s32 4, %v2970
      %v2972 = vrot.slane %v897, %v2971
      %v2973 = vlaneseq
      %v2974 = vshrl.u32 %v2973, 7
      %v2975 = vsub.s32 4, %v2974
      %v2976 = vrot.slane %v898, %v2975
      %v2977 = vlaneseq
      %v2978 = vshrl.u32 %v2977, 7
      %v2979 = vsub.s32 4, %v2978
      %v2980 = vrot.slane %v967, %v2979
      %v2981 = vlaneseq
      %v2982 = vshrl.u32 %v2981, 7
      %v2983 = vsub.s32 4, %v2982
      %v2984 = vrot.slane %v968, %v2983
      %v2985 = vlaneseq
      %v2986 = vshrl.u32 %v2985, 7
      %v2987 = vsub.s32 4, %v2986
      %v2988 = vrot.slane %v1037, %v2987
      %v2989 = vlaneseq
      %v2990 = vshrl.u32 %v2989, 7
      %v2991 = vsub.s32 4, %v2990
      %v2992 = vrot.slane %v1038, %v2991
      %v2993 = vsel %vm633, %v2964, %v2972
      %v2994 = vsel %vm633, %v2968, %v2976
      %v2995 = vsel %vm633, %v2980, %v2988
      %v2996 = vsel %vm633, %v2984, %v2992
      %3001 = vrot.lane.b32.xlu0 %v2993, 78
      %v3002 = vpop.permute.xlu0 %3001
      %3003 = vrot.lane.b32.xlu0 %v2994, 78
      %v3004 = vpop.permute.xlu0 %3003
      %3005 = vrot.lane.b32.xlu0 %v2995, 78
      %v3006 = vpop.permute.xlu0 %3005
      %3007 = vrot.lane.b32.xlu0 %v2996, 78
      %v3008 = vpop.permute.xlu0 %3007
      %v3009 = vsel %vm2749, %v3002, %v3004
      %v3010 = vsel %vm2749, %v3006, %v3008
      %v3017 = vmul.f32 %v1041, %v3002
      %v3018 = vmul.f32 %v1042, %v3009
      %v3019 = vmul.f32 %v1043, %v3004
      %v3020 = vmul.f32 %v1044, %v3006
      %v3021 = vmul.f32 %v1045, %v3010
      %v3022 = vmul.f32 %v1046, %v3008
      %3029 = vrot.lane.b32.xlu0 %v3017, 64
      %v3030 = vpop.permute.xlu0 %3029
      %3031 = vrot.lane.b32.xlu0 %v3018, 64
      %v3032 = vpop.permute.xlu0 %3031
      %3033 = vrot.lane.b32.xlu0 %v3019, 64
      %v3034 = vpop.permute.xlu0 %3033
      %3035 = vrot.lane.b32.xlu0 %v3020, 64
      %v3036 = vpop.permute.xlu0 %3035
      %3037 = vrot.lane.b32.xlu0 %v3021, 64
      %v3038 = vpop.permute.xlu0 %3037
      %3039 = vrot.lane.b32.xlu0 %v3022, 64
      %v3040 = vpop.permute.xlu0 %3039
      %v3041 = vsel %vm333, %v3030, %v3032
      %v3042 = vsel %vm333, %v3032, %v3034
      %v3043 = vsel %vm333, %v3036, %v3038
      %v3044 = vsel %vm333, %v3038, %v3040
      %v3051 = vadd.f32 %v2955, %v3041
      %v3052 = vadd.f32 %v2956, %v3042
      %v3053 = vadd.f32 %v2957, %v3034
      %v3054 = vadd.f32 %v2958, %v3043
      %v3055 = vadd.f32 %v2959, %v3044
      %v3056 = vadd.f32 %v2960, %v3040
      %v3057 = vlaneseq
      %v3058 = vshrl.u32 %v3057, 7
      %v3059 = vsub.s32 5, %v3058
      %v3060 = vrot.slane %v827, %v3059
      %v3061 = vlaneseq
      %v3062 = vshrl.u32 %v3061, 7
      %v3063 = vsub.s32 5, %v3062
      %v3064 = vrot.slane %v828, %v3063
      %v3065 = vlaneseq
      %v3066 = vshrl.u32 %v3065, 7
      %v3067 = vsub.s32 5, %v3066
      %v3068 = vrot.slane %v897, %v3067
      %v3069 = vlaneseq
      %v3070 = vshrl.u32 %v3069, 7
      %v3071 = vsub.s32 5, %v3070
      %v3072 = vrot.slane %v898, %v3071
      %v3073 = vlaneseq
      %v3074 = vshrl.u32 %v3073, 7
      %v3075 = vsub.s32 5, %v3074
      %v3076 = vrot.slane %v967, %v3075
      %v3077 = vlaneseq
      %v3078 = vshrl.u32 %v3077, 7
      %v3079 = vsub.s32 5, %v3078
      %v3080 = vrot.slane %v968, %v3079
      %v3081 = vlaneseq
      %v3082 = vshrl.u32 %v3081, 7
      %v3083 = vsub.s32 5, %v3082
      %v3084 = vrot.slane %v1037, %v3083
      %v3085 = vlaneseq
      %v3086 = vshrl.u32 %v3085, 7
      %v3087 = vsub.s32 5, %v3086
      %v3088 = vrot.slane %v1038, %v3087
      %v3089 = vsel %vm633, %v3060, %v3068
      %v3090 = vsel %vm633, %v3064, %v3072
      %v3091 = vsel %vm633, %v3076, %v3084
      %v3092 = vsel %vm633, %v3080, %v3088
      %3097 = vrot.lane.b32.xlu0 %v3089, 79
      %v3098 = vpop.permute.xlu0 %3097
      %3099 = vrot.lane.b32.xlu0 %v3090, 79
      %v3100 = vpop.permute.xlu0 %3099
      %3101 = vrot.lane.b32.xlu0 %v3091, 79
      %v3102 = vpop.permute.xlu0 %3101
      %3103 = vrot.lane.b32.xlu0 %v3092, 79
      %v3104 = vpop.permute.xlu0 %3103
      %v3105 = vsel %vm2652, %v3098, %v3100
      %v3106 = vsel %vm2652, %v3102, %v3104
      %v3113 = vmul.f32 %v1041, %v3098
      %v3114 = vmul.f32 %v1042, %v3105
      %v3115 = vmul.f32 %v1043, %v3100
      %v3116 = vmul.f32 %v1044, %v3102
      %v3117 = vmul.f32 %v1045, %v3106
      %v3118 = vmul.f32 %v1046, %v3104
      %3125 = vrot.lane.b32.xlu0 %v3113, 63
      %v3126 = vpop.permute.xlu0 %3125
      %3127 = vrot.lane.b32.xlu0 %v3114, 63
      %v3128 = vpop.permute.xlu0 %3127
      %3129 = vrot.lane.b32.xlu0 %v3115, 63
      %v3130 = vpop.permute.xlu0 %3129
      %3131 = vrot.lane.b32.xlu0 %v3116, 63
      %v3132 = vpop.permute.xlu0 %3131
      %3133 = vrot.lane.b32.xlu0 %v3117, 63
      %v3134 = vpop.permute.xlu0 %3133
      %3135 = vrot.lane.b32.xlu0 %v3118, 63
      %v3136 = vpop.permute.xlu0 %3135
      %v3137 = vsel %vm321, %v3126, %v3128
      %v3138 = vsel %vm321, %v3128, %v3130
      %v3139 = vsel %vm321, %v3132, %v3134
      %v3140 = vsel %vm321, %v3134, %v3136
      %v3147 = vadd.f32 %v3051, %v3137
      %v3148 = vadd.f32 %v3052, %v3138
      %v3149 = vadd.f32 %v3053, %v3130
      %v3150 = vadd.f32 %v3054, %v3139
      %v3151 = vadd.f32 %v3055, %v3140
      %v3152 = vadd.f32 %v3056, %v3136
      %v3153 = vlaneseq
      %v3154 = vshrl.u32 %v3153, 7
      %v3155 = vsub.s32 6, %v3154
      %v3156 = vrot.slane %v827, %v3155
      %v3157 = vlaneseq
      %v3158 = vshrl.u32 %v3157, 7
      %v3159 = vsub.s32 6, %v3158
      %v3160 = vrot.slane %v828, %v3159
      %v3161 = vlaneseq
      %v3162 = vshrl.u32 %v3161, 7
      %v3163 = vsub.s32 6, %v3162
      %v3164 = vrot.slane %v897, %v3163
      %v3165 = vlaneseq
      %v3166 = vshrl.u32 %v3165, 7
      %v3167 = vsub.s32 6, %v3166
      %v3168 = vrot.slane %v898, %v3167
      %v3169 = vlaneseq
      %v3170 = vshrl.u32 %v3169, 7
      %v3171 = vsub.s32 6, %v3170
      %v3172 = vrot.slane %v967, %v3171
      %v3173 = vlaneseq
      %v3174 = vshrl.u32 %v3173, 7
      %v3175 = vsub.s32 6, %v3174
      %v3176 = vrot.slane %v968, %v3175
      %v3177 = vlaneseq
      %v3178 = vshrl.u32 %v3177, 7
      %v3179 = vsub.s32 6, %v3178
      %v3180 = vrot.slane %v1037, %v3179
      %v3181 = vlaneseq
      %v3182 = vshrl.u32 %v3181, 7
      %v3183 = vsub.s32 6, %v3182
      %v3184 = vrot.slane %v1038, %v3183
      %v3185 = vsel %vm633, %v3156, %v3164
      %v3186 = vsel %vm633, %v3160, %v3168
      %v3187 = vsel %vm633, %v3172, %v3180
      %v3188 = vsel %vm633, %v3176, %v3184
      %3193 = vrot.lane.b32.xlu0 %v3185, 80
      %v3194 = vpop.permute.xlu0 %3193
      %3195 = vrot.lane.b32.xlu0 %v3186, 80
      %v3196 = vpop.permute.xlu0 %3195
      %3197 = vrot.lane.b32.xlu0 %v3187, 80
      %v3198 = vpop.permute.xlu0 %3197
      %3199 = vrot.lane.b32.xlu0 %v3188, 80
      %v3200 = vpop.permute.xlu0 %3199
      %v3201 = vsel %vm2555, %v3194, %v3196
      %v3202 = vsel %vm2555, %v3198, %v3200
      %v3209 = vmul.f32 %v1041, %v3194
      %v3210 = vmul.f32 %v1042, %v3201
      %v3211 = vmul.f32 %v1043, %v3196
      %v3212 = vmul.f32 %v1044, %v3198
      %v3213 = vmul.f32 %v1045, %v3202
      %v3214 = vmul.f32 %v1046, %v3200
      %3221 = vrot.lane.b32.xlu0 %v3209, 62
      %v3222 = vpop.permute.xlu0 %3221
      %3223 = vrot.lane.b32.xlu0 %v3210, 62
      %v3224 = vpop.permute.xlu0 %3223
      %3225 = vrot.lane.b32.xlu0 %v3211, 62
      %v3226 = vpop.permute.xlu0 %3225
      %3227 = vrot.lane.b32.xlu0 %v3212, 62
      %v3228 = vpop.permute.xlu0 %3227
      %3229 = vrot.lane.b32.xlu0 %v3213, 62
      %v3230 = vpop.permute.xlu0 %3229
      %3231 = vrot.lane.b32.xlu0 %v3214, 62
      %v3232 = vpop.permute.xlu0 %3231
      %v3233 = vsel %vm2522, %v3222, %v3224
      %v3234 = vsel %vm2522, %v3224, %v3226
      %v3235 = vsel %vm2522, %v3228, %v3230
      %v3236 = vsel %vm2522, %v3230, %v3232
      %v3243 = vadd.f32 %v3147, %v3233
      %v3244 = vadd.f32 %v3148, %v3234
      %v3245 = vadd.f32 %v3149, %v3226
      %v3246 = vadd.f32 %v3150, %v3235
      %v3247 = vadd.f32 %v3151, %v3236
      %v3248 = vadd.f32 %v3152, %v3232
      %v3249 = vlaneseq
      %v3250 = vshrl.u32 %v3249, 7
      %v3251 = vsub.s32 7, %v3250
      %v3252 = vrot.slane %v827, %v3251
      %v3253 = vlaneseq
      %v3254 = vshrl.u32 %v3253, 7
      %v3255 = vsub.s32 7, %v3254
      %v3256 = vrot.slane %v828, %v3255
      %v3257 = vlaneseq
      %v3258 = vshrl.u32 %v3257, 7
      %v3259 = vsub.s32 7, %v3258
      %v3260 = vrot.slane %v897, %v3259
      %v3261 = vlaneseq
      %v3262 = vshrl.u32 %v3261, 7
      %v3263 = vsub.s32 7, %v3262
      %v3264 = vrot.slane %v898, %v3263
      %v3265 = vlaneseq
      %v3266 = vshrl.u32 %v3265, 7
      %v3267 = vsub.s32 7, %v3266
      %v3268 = vrot.slane %v967, %v3267
      %v3269 = vlaneseq
      %v3270 = vshrl.u32 %v3269, 7
      %v3271 = vsub.s32 7, %v3270
      %v3272 = vrot.slane %v968, %v3271
      %v3273 = vlaneseq
      %v3274 = vshrl.u32 %v3273, 7
      %v3275 = vsub.s32 7, %v3274
      %v3276 = vrot.slane %v1037, %v3275
      %v3277 = vlaneseq
      %v3278 = vshrl.u32 %v3277, 7
      %v3279 = vsub.s32 7, %v3278
      %v3280 = vrot.slane %v1038, %v3279
      %v3281 = vsel %vm633, %v3252, %v3260
      %v3282 = vsel %vm633, %v3256, %v3264
      %v3283 = vsel %vm633, %v3268, %v3276
      %v3284 = vsel %vm633, %v3272, %v3280
      %3289 = vrot.lane.b32.xlu0 %v3281, 81
      %v3290 = vpop.permute.xlu0 %3289
      %3291 = vrot.lane.b32.xlu0 %v3282, 81
      %v3292 = vpop.permute.xlu0 %3291
      %3293 = vrot.lane.b32.xlu0 %v3283, 81
      %v3294 = vpop.permute.xlu0 %3293
      %3295 = vrot.lane.b32.xlu0 %v3284, 81
      %v3296 = vpop.permute.xlu0 %3295
      %vm3297 = vcmask 662528
      %v3298 = vsel %vm3297, %v3290, %v3292
      %v3299 = vsel %vm3297, %v3294, %v3296
      %v3306 = vmul.f32 %v1041, %v3290
      %v3307 = vmul.f32 %v1042, %v3298
      %v3308 = vmul.f32 %v1043, %v3292
      %v3309 = vmul.f32 %v1044, %v3294
      %v3310 = vmul.f32 %v1045, %v3299
      %v3311 = vmul.f32 %v1046, %v3296
      %3318 = vrot.lane.b32.xlu0 %v3306, 61
      %v3319 = vpop.permute.xlu0 %3318
      %3320 = vrot.lane.b32.xlu0 %v3307, 61
      %v3321 = vpop.permute.xlu0 %3320
      %3322 = vrot.lane.b32.xlu0 %v3308, 61
      %v3323 = vpop.permute.xlu0 %3322
      %3324 = vrot.lane.b32.xlu0 %v3309, 61
      %v3325 = vpop.permute.xlu0 %3324
      %3326 = vrot.lane.b32.xlu0 %v3310, 61
      %v3327 = vpop.permute.xlu0 %3326
      %3328 = vrot.lane.b32.xlu0 %v3311, 61
      %v3329 = vpop.permute.xlu0 %3328
      %vm3330 = vcmask 498688
      %v3331 = vsel %vm3330, %v3319, %v3321
      %v3332 = vsel %vm3330, %v3321, %v3323
      %v3333 = vsel %vm3330, %v3325, %v3327
      %v3334 = vsel %vm3330, %v3327, %v3329
      %v3341 = vadd.f32 %v3243, %v3331
      %v3342 = vadd.f32 %v3244, %v3332
      %v3343 = vadd.f32 %v3245, %v3323
      %v3344 = vadd.f32 %v3246, %v3333
      %v3345 = vadd.f32 %v3247, %v3334
      %v3346 = vadd.f32 %v3248, %v3329
      %v3347 = vlaneseq
      %v3348 = vshrl.u32 %v3347, 7
      %v3349 = vsub.s32 0, %v3348
      %v3350 = vrot.slane %v829, %v3349
      %v3351 = vlaneseq
      %v3352 = vshrl.u32 %v3351, 7
      %v3353 = vsub.s32 0, %v3352
      %v3354 = vrot.slane %v830, %v3353
      %v3355 = vlaneseq
      %v3356 = vshrl.u32 %v3355, 7
      %v3357 = vsub.s32 0, %v3356
      %v3358 = vrot.slane %v899, %v3357
      %v3359 = vlaneseq
      %v3360 = vshrl.u32 %v3359, 7
      %v3361 = vsub.s32 0, %v3360
      %v3362 = vrot.slane %v900, %v3361
      %v3363 = vlaneseq
      %v3364 = vshrl.u32 %v3363, 7
      %v3365 = vsub.s32 0, %v3364
      %v3366 = vrot.slane %v969, %v3365
      %v3367 = vlaneseq
      %v3368 = vshrl.u32 %v3367, 7
      %v3369 = vsub.s32 0, %v3368
      %v3370 = vrot.slane %v970, %v3369
      %v3371 = vlaneseq
      %v3372 = vshrl.u32 %v3371, 7
      %v3373 = vsub.s32 0, %v3372
      %v3374 = vrot.slane %v1039, %v3373
      %v3375 = vlaneseq
      %v3376 = vshrl.u32 %v3375, 7
      %v3377 = vsub.s32 0, %v3376
      %v3378 = vrot.slane %v1040, %v3377
      %v3379 = vsel %vm633, %v3350, %v3358
      %v3380 = vsel %vm633, %v3354, %v3362
      %v3381 = vsel %vm633, %v3366, %v3374
      %v3382 = vsel %vm633, %v3370, %v3378
      %3387 = vrot.lane.b32.xlu0 %v3379, 82
      %v3388 = vpop.permute.xlu0 %3387
      %3389 = vrot.lane.b32.xlu0 %v3380, 82
      %v3390 = vpop.permute.xlu0 %3389
      %3391 = vrot.lane.b32.xlu0 %v3381, 82
      %v3392 = vpop.permute.xlu0 %3391
      %3393 = vrot.lane.b32.xlu0 %v3382, 82
      %v3394 = vpop.permute.xlu0 %3393
      %vm3395 = vcmask 670720
      %v3396 = vsel %vm3395, %v3388, %v3390
      %v3397 = vsel %vm3395, %v3392, %v3394
      %v3404 = vmul.f32 %v1041, %v3388
      %v3405 = vmul.f32 %v1042, %v3396
      %v3406 = vmul.f32 %v1043, %v3390
      %v3407 = vmul.f32 %v1044, %v3392
      %v3408 = vmul.f32 %v1045, %v3397
      %v3409 = vmul.f32 %v1046, %v3394
      %3416 = vrot.lane.b32.xlu0 %v3404, 60
      %v3417 = vpop.permute.xlu0 %3416
      %3418 = vrot.lane.b32.xlu0 %v3405, 60
      %v3419 = vpop.permute.xlu0 %3418
      %3420 = vrot.lane.b32.xlu0 %v3406, 60
      %v3421 = vpop.permute.xlu0 %3420
      %3422 = vrot.lane.b32.xlu0 %v3407, 60
      %v3423 = vpop.permute.xlu0 %3422
      %3424 = vrot.lane.b32.xlu0 %v3408, 60
      %v3425 = vpop.permute.xlu0 %3424
      %3426 = vrot.lane.b32.xlu0 %v3409, 60
      %v3427 = vpop.permute.xlu0 %3426
      %vm3428 = vcmask 490496
      %v3429 = vsel %vm3428, %v3417, %v3419
      %v3430 = vsel %vm3428, %v3419, %v3421
      %v3431 = vsel %vm3428, %v3423, %v3425
      %v3432 = vsel %vm3428, %v3425, %v3427
      %v3439 = vadd.f32 %v3341, %v3429
      %v3440 = vadd.f32 %v3342, %v3430
      %v3441 = vadd.f32 %v3343, %v3421
      %v3442 = vadd.f32 %v3344, %v3431
      %v3443 = vadd.f32 %v3345, %v3432
      %v3444 = vadd.f32 %v3346, %v3427
      %v3445 = vsel %vm633, %v813, %v891
      %v3446 = vsel %vm633, %v814, %v892
      %v3447 = vsel %vm633, %v961, %v1031
      %v3448 = vsel %vm633, %v962, %v1032
      %3453 = vrot.lane.b32.xlu0 %v3445, 14
      %v3454 = vpop.permute.xlu0 %3453
      %3455 = vrot.lane.b32.xlu0 %v3446, 14
      %v3456 = vpop.permute.xlu0 %3455
      %3457 = vrot.lane.b32.xlu0 %v3447, 14
      %v3458 = vpop.permute.xlu0 %3457
      %3459 = vrot.lane.b32.xlu0 %v3448, 14
      %v3460 = vpop.permute.xlu0 %3459
      %v3461 = vsel %vm1095, %v3454, %v3456
      %v3462 = vsel %vm1095, %v3458, %v3460
      %v3469 = vmul.f32 %v3439, %v3454
      %v3470 = vmul.f32 %v3440, %v3461
      %v3471 = vmul.f32 %v3441, %v3456
      %v3472 = vmul.f32 %v3442, %v3458
      %v3473 = vmul.f32 %v3443, %v3462
      %v3474 = vmul.f32 %v3444, %v3460
      %3481 = vrot.lane.b32.xlu0 %v3469, 114
      %v3482 = vpop.permute.xlu0 %3481
      %3483 = vrot.lane.b32.xlu0 %v3470, 114
      %v3484 = vpop.permute.xlu0 %3483
      %3485 = vrot.lane.b32.xlu0 %v3471, 114
      %v3486 = vpop.permute.xlu0 %3485
      %3487 = vrot.lane.b32.xlu0 %v3472, 114
      %v3488 = vpop.permute.xlu0 %3487
      %3489 = vrot.lane.b32.xlu0 %v3473, 114
      %v3490 = vpop.permute.xlu0 %3489
      %3491 = vrot.lane.b32.xlu0 %v3474, 114
      %v3492 = vpop.permute.xlu0 %3491
      %vm3493 = vcmask 932864
      %v3494 = vsel %vm3493, %v3482, %v3484
      %v3495 = vsel %vm3493, %v3484, %v3486
      %v3496 = vsel %vm3493, %v3488, %v3490
      %v3497 = vsel %vm3493, %v3490, %v3492
      %3502 = vst [vmem:[%s206] sm:$0xff] %v3494
      %3503 = vst [vmem:[%s206 + $0x8] sm:$0xff] %v3495
      %3504 = vst [vmem:[%s206 + $0x10] sm:$0xff] %v3496
      %3505 = vst [vmem:[%s206 + $0x18] sm:$0xff] %v3497
      %s3506 = smul.u32 2, %s19
      %p3507 = scmp.lt.s32.totalorder %s18, 1
      %s3508 = scalar_select %p3507, %s18, 1
      %p3509 = scmp.lt.s32.totalorder %s3506, 1
      %s3510 = scalar_select %p3509, %s3506, 1
      %s3511 = smul.addr %s3508, 4
      %s3512 = sadd.s32 %s3510, %s3511
      %s3513 = smul.addr %s3512, 8
      %s3514 = scalar_lea.vmem %s3, %s3513
      // Predicated region
      $region33: #{_lambda_.1} parent=31 // pred_check
        %p3515 = pneg %p116
      $region34: #{_lambda_.1} parent=31 // pred_check_branch
        %3517 = sbr.rel (%p3515) target = $region36
      $region35: #{_lambda_.1} parent=31 // pred_region
        %s3518 = smul.u32 2, %s19
      $region36: #{_lambda_.1} parent=31 // pred_fallthru
        _
    $region32: #{_lambda_.1} parent=5 // pred_fallthru
      _
    %p3519 = scmp.le.s32.totalorder 2, %s9
    // Predicated region
    $region37: #{_lambda_.1} parent=5 // pred_check
      %p3520 = pneg %p3519
    $region38: #{_lambda_.1} parent=5 // pred_check_branch
      %3522 = sbr.rel (%p3520) target = $region40
    $region39: #{_lambda_.1} parent=5 // pred_region
      %s3523 = ssub.s32 %s9, 2
      // Predicated region
      $region41: #{_lambda_.1} parent=39 // pred_check
        %p3524 = pneg %p122
      $region42: #{_lambda_.1} parent=39 // pred_check_branch
        %3526 = sbr.rel (%p3524) target = $region44
      $region43: #{_lambda_.1} parent=39 // pred_region
        %s3527 = smul.u32 2, %s21
        %p3528 = scmp.lt.s32.totalorder %s20, 1
        %s3529 = scalar_select %p3528, %s20, 1
        %p3530 = scmp.lt.s32.totalorder %s3527, 1
        %s3531 = scalar_select %p3530, %s3527, 1
        %s3532 = smul.addr %s3529, 4
        %s3533 = sadd.s32 %s3531, %s3532
        %s3534 = smul.addr %s3533, 8
        %s3535 = scalar_lea.vmem %s3, %s3534
      $region44: #{_lambda_.1} parent=39 // pred_fallthru
        _
    $region40: #{_lambda_.1} parent=5 // pred_fallthru
      _
  $region6: #{_lambda_.1} parent=0 // loop_footer
    %s13 = sadd.s32 1, %s9
  $region7: #{_lambda_.1} parent=0 // loop_footer_branch
    %8 = sbr.rel target = $region3
  $region8: #{_lambda_.1} parent=0 // loop_exit
    _

</llo_original>
